<compile_context>
chip_gen: v6e
topology: v6e:2x2x1
jax: 0.10.0
libtpu: 0.0.40
codegen_flags: <defaults>
</compile_context>

<pallas_src>
import functools

import jax
import jax.numpy as jnp
import numpy as np
from jax import lax
from jax.experimental import pallas as pl
from jax.experimental.pallas import tpu as pltpu


def _actor_kernel(act_limit, T, Bp, H,
                  obs_ref, histf_ref, seg_ref,
                  wp_ref, bp_ref,
                  wih_ref, whh_ref, bih_ref, bhh_ref,
                  wa_hbm, ba_hbm, wc_hbm, bc_hbm,
                  w1_hbm, b1_hbm, w2_hbm, b2_hbm,
                  act_ref, mem_ref,
                  gx_ref, wa_v, ba_v, wc_v, bc_v, w1_v, b1_v, w2_v, b2_v,
                  sems):
    # -------- deferred DMA of the post-LSTM weights (waited after the loop)
    tail = [
        pltpu.make_async_copy(src, dst, sems.at[k])
        for k, (src, dst) in enumerate((
            (wa_hbm, wa_v), (ba_hbm, ba_v), (wc_hbm, wc_v), (bc_hbm, bc_v),
            (w1_hbm, w1_v), (b1_hbm, b1_v), (w2_hbm, w2_v), (b2_hbm, b2_v)))]
    for cp in tail:
        cp.start()

    # torch.gather index: clamp seg_len==0 -> 1, subtract 1, clamp to T-1.
    idx = jnp.minimum(jnp.maximum(seg_ref[...], 1) - 1, T - 1)      # (Bp,1)
    idx_b = jnp.broadcast_to(idx, (Bp, H))
    sel_masks = [idx_b == t for t in range(T)]   # hoisted out of the loop

    # ---------------- hoisted, non-recurrent work (batched over all T) -----
    # mem_pre_lstm Linear + ReLU over every timestep at once: (T*Bp,D)->(T*Bp,H)
    pre = jnp.maximum(
        jnp.dot(histf_ref[...], wp_ref[...],
                preferred_element_type=jnp.float32) + bp_ref[...], 0.0)
    # input contribution to the LSTM gates for all timesteps: (T*Bp, 4H)
    gx = (jnp.dot(pre, wih_ref[...], preferred_element_type=jnp.float32)
          + bih_ref[...] + bhh_ref[...])
    # park gx in VMEM so it doesn't live in the vreg file across the loop.
    gx_ref[...] = gx

    # ---------------- serial LSTM recurrence (fully unrolled, T static) ----
    h = jnp.zeros((Bp, H), jnp.float32)
    c = jnp.zeros((Bp, H), jnp.float32)
    h_sel = jnp.zeros((Bp, H), jnp.float32)
    for t in range(T):
        # only this matmul is on the critical path; bf16 x bf16 -> f32 is a
        # single MXU pass and W_hh streams from VMEM at the dot site.
        gates = gx_ref[t * Bp:(t + 1) * Bp, :] + jnp.dot(
            h.astype(jnp.bfloat16), whh_ref[...],
            preferred_element_type=jnp.float32)                     # (Bp,4H)
        # gate columns were pre-permuted to (i, f, o, g):
        sig = 0.5 * (jnp.tanh(0.5 * gates[:, 0:3 * H]) + 1.0)   # == sigmoid
        i_g = sig[:, 0:H]
        f_g = sig[:, H:2 * H]
        o_g = sig[:, 2 * H:3 * H]
        g_g = jnp.tanh(gates[:, 3 * H:4 * H])
        c = f_g * c + i_g * g_g
        h = o_g * jnp.tanh(c)
        # torch.gather over the time axis: keep h of timestep seg_len-1
        h_sel = jnp.where(sel_masks[t], h, h_sel)

    # ---------------- post-LSTM head (off the critical path) ---------------
    for cp in tail:
        cp.wait()

    # mem_after_lstm Linear + ReLU applied ONCE to the selected hidden state.
    hist_out = jnp.maximum(
        jnp.dot(h_sel, wa_v[...], preferred_element_type=jnp.float32)
        + ba_v[...], 0.0)

    # cur_feature branch: Linear + ReLU on the current obs
    cur = jnp.maximum(
        jnp.dot(obs_ref[...], wc_v[...], preferred_element_type=jnp.float32)
        + bc_v[...], 0.0)

    # post_combined: single 2H-deep contraction on [hist_out | cur]
    comb = jnp.concatenate([hist_out, cur], axis=1)          # (Bp, 2H)
    p1 = jnp.maximum(
        jnp.dot(comb, w1_v[...], preferred_element_type=jnp.float32)
        + b1_v[...], 0.0)
    out = jnp.tanh(
        jnp.dot(p1, w2_v[...], preferred_element_type=jnp.float32)
        + b2_v[...])

    act_ref[...] = act_limit * out
    mem_ref[...] = hist_out


def mlp_actor_forward(obs, hist_obs, hist_seg_len, params, act_limit):
    """obs: (B, obs_dim) f32; hist_obs: (B, T, obs_dim) f32;
    hist_seg_len: (B,) int; returns (act_limit*pi, extracted_memory)."""
    B, obs_dim = obs.shape
    T = hist_obs.shape[1]
    H = params["wp"].shape[1]
    act_dim = params["w2"].shape[1]

    # pad batch to the f32 sublane count so per-step slices / carries align.
    Bp = max(8, -(-B // 8) * 8)
    pad = Bp - B
    obs_p = jnp.pad(obs, ((0, pad), (0, 0)))
    hist_p = jnp.pad(hist_obs, ((0, pad), (0, 0), (0, 0)))
    seg_p = jnp.pad(hist_seg_len.astype(jnp.int32), (0, pad),
                    constant_values=1)

    # time-major, flattened to (T*Bp, obs_dim) so the hoisted projections in
    # the kernel are a single batched matmul.
    hist_flat = jnp.transpose(hist_p, (1, 0, 2)).reshape(T * Bp, obs_dim)
    seg = seg_p.reshape(Bp, 1)

    # gate-column permutation [i,f,g,o] -> [i,f,o,g] so the kernel runs one
    # contiguous 3H sigmoid block + one H tanh block per step.
    def perm_gates(w):
        i, f, g, o = jnp.split(w, 4, axis=-1)
        return jnp.concatenate([i, f, o, g], axis=-1)

    wih = perm_gates(params["wih"])
    whh = perm_gates(params["whh"]).astype(jnp.bfloat16)   # bf16 MXU operand
    bih = perm_gates(params["bih"])
    bhh = perm_gates(params["bhh"])

    vmem = pl.BlockSpec(memory_space=pltpu.MemorySpace.VMEM)
    hbm = pl.BlockSpec(memory_space=pl.ANY)

    inputs = (obs_p, hist_flat, seg,
              params["wp"], params["bp"], wih, whh, bih, bhh,
              params["wa"], params["ba"], params["wc"], params["bc"],
              params["w1"], params["b1"], params["w2"], params["b2"])
    in_specs = [vmem] * 9 + [hbm] * 8

    scratch_shapes = [
        pltpu.VMEM((T * Bp, 4 * H), jnp.float32),   # gx
        pltpu.VMEM((H, H), jnp.float32),            # wa
        pltpu.VMEM((1, H), jnp.float32),            # ba
        pltpu.VMEM((obs_dim, H), jnp.float32),      # wc
        pltpu.VMEM((1, H), jnp.float32),            # bc
        pltpu.VMEM((2 * H, H), jnp.float32),        # w1
        pltpu.VMEM((1, H), jnp.float32),            # b1
        pltpu.VMEM((H, act_dim), jnp.float32),      # w2
        pltpu.VMEM((1, act_dim), jnp.float32),      # b2
        pltpu.SemaphoreType.DMA((8,)),
    ]

    kernel = functools.partial(_actor_kernel, float(act_limit), T, Bp, H)

    # TODO(synk): for throughput on v7x, batch to B>=256 in the caller and add
    # a leading batch grid axis with dimension_semantics=("parallel",) so both
    # TensorCores run; at B=2 the kernel is pure latency so it stays grid-less.
    act, mem = pl.pallas_call(
        kernel,
        out_shape=(jax.ShapeDtypeStruct((Bp, act_dim), jnp.float32),
                   jax.ShapeDtypeStruct((Bp, H), jnp.float32)),
        in_specs=in_specs,
        out_specs=(vmem, vmem),
        scratch_shapes=scratch_shapes,
    )(*inputs)
    return act[:B], mem[:B]


def init_params(key, obs_dim, act_dim, hidden=128):
    """Deterministic init with PyTorch-style uniform(-1/sqrt(fan_in), ...)."""
    H = hidden
    keys = jax.random.split(key, 16)
    ki = iter(keys)

    def lin(k, fan_in, fan_out):
        bound = 1.0 / np.sqrt(fan_in)
        kw, kb = jax.random.split(k)
        w = jax.random.uniform(kw, (fan_in, fan_out), jnp.float32, -bound, bound)
        b = jax.random.uniform(kb, (1, fan_out), jnp.float32, -bound, bound)
        return w, b

    wp, bp = lin(next(ki), obs_dim, H)            # mem_pre_lstm Linear
    # LSTM weights (stored transposed: (in, 4H)); PyTorch gate order i,f,g,o
    bound = 1.0 / np.sqrt(H)
    wih = jax.random.uniform(next(ki), (H, 4 * H), jnp.float32, -bound, bound)
    whh = jax.random.uniform(next(ki), (H, 4 * H), jnp.float32, -bound, bound)
    bih = jax.random.uniform(next(ki), (1, 4 * H), jnp.float32, -bound, bound)
    bhh = jax.random.uniform(next(ki), (1, 4 * H), jnp.float32, -bound, bound)
    wa, ba = lin(next(ki), H, H)                  # mem_after_lstm Linear
    wc, bc = lin(next(ki), obs_dim, H)            # cur_feature Linear
    w1, b1 = lin(next(ki), 2 * H, H)              # post_combined Linear 1
    w2, b2 = lin(next(ki), H, act_dim)            # post_combined Linear 2 (tanh)
    return dict(wp=wp, bp=bp, wih=wih, whh=whh, bih=bih, bhh=bhh,
                wa=wa, ba=ba, wc=wc, bc=bc, w1=w1, b1=b1, w2=w2, b2=b2)


def reference_forward(obs, hist_obs, hist_seg_len, params, act_limit):
    """Pure-JAX f32 reference mirroring the PyTorch module, for validation."""
    B, T, _ = hist_obs.shape
    H = params["wp"].shape[1]
    tmp = jnp.maximum(hist_seg_len, 1)
    pre = jax.nn.relu(hist_obs @ params["wp"] + params["bp"])

    def cell(carry, x_t):
        h, c = carry
        gates = (x_t @ params["wih"] + h @ params["whh"]
                 + params["bih"] + params["bhh"])
        i = jax.nn.sigmoid(gates[:, 0:H])
        f = jax.nn.sigmoid(gates[:, H:2 * H])
        g = jnp.tanh(gates[:, 2 * H:3 * H])
        o = jax.nn.sigmoid(gates[:, 3 * H:4 * H])
        c = f * c + i * g
        h = o * jnp.tanh(c)
        return (h, c), h

    h0 = jnp.zeros((B, H), jnp.float32)
    _, hs = lax.scan(cell, (h0, h0), jnp.transpose(pre, (1, 0, 2)))
    hs = jnp.transpose(hs, (1, 0, 2))                        # (B, T, H)
    after = jax.nn.relu(hs @ params["wa"] + params["ba"])
    hist_out = jnp.take_along_axis(
        after, (tmp - 1).reshape(B, 1, 1).astype(jnp.int32), axis=1)[:, 0, :]
    cur = jax.nn.relu(obs @ params["wc"] + params["bc"])
    comb = jnp.concatenate([hist_out, cur], axis=-1)
    p1 = jax.nn.relu(comb @ params["w1"] + params["b1"])
    out = jnp.tanh(p1 @ params["w2"] + params["b2"])
    return act_limit * out, hist_out


if __name__ == "__main__":
    B, T, obs_dim, act_dim, H = 2, 8, 11, 3, 128
    act_limit = 1.0

    key = jax.random.PRNGKey(0)
    k_obs, k_hist, k_par = jax.random.split(key, 3)
    obs = jax.random.normal(k_obs, (B, obs_dim), jnp.float32)
    hist_obs = jax.random.normal(k_hist, (B, T, obs_dim), jnp.float32)
    hist_seg_len = jnp.array([5, 0], dtype=jnp.int32)   # exercises the ==0 path
    params = init_params(k_par, obs_dim, act_dim, hidden=H)

    act, mem = mlp_actor_forward(obs, hist_obs, hist_seg_len, params, act_limit)
    jax.block_until_ready((act, mem))

    ref_act, ref_mem = reference_forward(obs, hist_obs, hist_seg_len, params,
                                         act_limit)
    # tolerance relaxed from 1e-5 because the recurrent matmul now uses bf16
    # operands (f32 accumulation); errors stay O(1e-3) but we leave margin.
    np.testing.assert_allclose(np.asarray(act), np.asarray(ref_act),
                               rtol=3e-2, atol=3e-2)
    np.testing.assert_allclose(np.asarray(mem), np.asarray(ref_mem),
                               rtol=3e-2, atol=3e-2)

    print("KERNEL_OK")
</pallas_src>

<mosaic_0001>
module attributes {stable_mosaic.version = 11 : i64} {
  func.func @_actor_kernel(%arg0: memref<8x11xf32, #tpu.memory_space<vmem>>, %arg1: memref<64x11xf32, #tpu.memory_space<vmem>>, %arg2: memref<8x1xi32, #tpu.memory_space<vmem>>, %arg3: memref<11x128xf32, #tpu.memory_space<vmem>>, %arg4: memref<1x128xf32, #tpu.memory_space<vmem>>, %arg5: memref<128x512xf32, #tpu.memory_space<vmem>>, %arg6: memref<128x512xbf16, #tpu.memory_space<vmem>>, %arg7: memref<1x512xf32, #tpu.memory_space<vmem>>, %arg8: memref<1x512xf32, #tpu.memory_space<vmem>>, %arg9: memref<128x128xf32, #tpu.memory_space<any>>, %arg10: memref<1x128xf32, #tpu.memory_space<any>>, %arg11: memref<11x128xf32, #tpu.memory_space<any>>, %arg12: memref<1x128xf32, #tpu.memory_space<any>>, %arg13: memref<256x128xf32, #tpu.memory_space<any>>, %arg14: memref<1x128xf32, #tpu.memory_space<any>>, %arg15: memref<128x3xf32, #tpu.memory_space<any>>, %arg16: memref<1x3xf32, #tpu.memory_space<any>>, %arg17: memref<8x3xf32, #tpu.memory_space<vmem>>, %arg18: memref<8x128xf32, #tpu.memory_space<vmem>>, %arg19: memref<64x512xf32, #tpu.memory_space<vmem>>, %arg20: memref<128x128xf32, #tpu.memory_space<vmem>>, %arg21: memref<1x128xf32, #tpu.memory_space<vmem>>, %arg22: memref<11x128xf32, #tpu.memory_space<vmem>>, %arg23: memref<1x128xf32, #tpu.memory_space<vmem>>, %arg24: memref<256x128xf32, #tpu.memory_space<vmem>>, %arg25: memref<1x128xf32, #tpu.memory_space<vmem>>, %arg26: memref<128x3xf32, #tpu.memory_space<vmem>>, %arg27: memref<1x3xf32, #tpu.memory_space<vmem>>, %arg28: memref<8x!tpu.dma_semaphore, #tpu.memory_space<semaphore_mem>>) attributes {dimension_semantics = [], scalar_prefetch = 0 : i64, scratch_operands = 10 : i64, tpu.core_type = #tpu.core_type<tc>} {
    %c0_i32 = arith.constant 0 : i32
    %0 = tpu.memref_slice %arg28[%c0_i32] : memref<8x!tpu.dma_semaphore, #tpu.memory_space<semaphore_mem>> -> memref<1x!tpu.dma_semaphore, #tpu.memory_space<semaphore_mem>>
    %1 = tpu.memref_squeeze %0 : memref<1x!tpu.dma_semaphore, #tpu.memory_space<semaphore_mem>> -> memref<!tpu.dma_semaphore, #tpu.memory_space<semaphore_mem>>
    tpu.enqueue_dma source(%arg9 : memref<128x128xf32, #tpu.memory_space<any>>) target(%arg20 : memref<128x128xf32, #tpu.memory_space<vmem>>) target_semaphore(%1 : memref<!tpu.dma_semaphore, #tpu.memory_space<semaphore_mem>>)
    %c1_i32 = arith.constant 1 : i32
    %2 = tpu.memref_slice %arg28[%c1_i32] : memref<8x!tpu.dma_semaphore, #tpu.memory_space<semaphore_mem>> -> memref<1x!tpu.dma_semaphore, #tpu.memory_space<semaphore_mem>>
    %3 = tpu.memref_squeeze %2 : memref<1x!tpu.dma_semaphore, #tpu.memory_space<semaphore_mem>> -> memref<!tpu.dma_semaphore, #tpu.memory_space<semaphore_mem>>
    tpu.enqueue_dma source(%arg10 : memref<1x128xf32, #tpu.memory_space<any>>) target(%arg21 : memref<1x128xf32, #tpu.memory_space<vmem>>) target_semaphore(%3 : memref<!tpu.dma_semaphore, #tpu.memory_space<semaphore_mem>>)
    %c2_i32 = arith.constant 2 : i32
    %4 = tpu.memref_slice %arg28[%c2_i32] : memref<8x!tpu.dma_semaphore, #tpu.memory_space<semaphore_mem>> -> memref<1x!tpu.dma_semaphore, #tpu.memory_space<semaphore_mem>>
    %5 = tpu.memref_squeeze %4 : memref<1x!tpu.dma_semaphore, #tpu.memory_space<semaphore_mem>> -> memref<!tpu.dma_semaphore, #tpu.memory_space<semaphore_mem>>
    tpu.enqueue_dma source(%arg11 : memref<11x128xf32, #tpu.memory_space<any>>) target(%arg22 : memref<11x128xf32, #tpu.memory_space<vmem>>) target_semaphore(%5 : memref<!tpu.dma_semaphore, #tpu.memory_space<semaphore_mem>>)
    %c3_i32 = arith.constant 3 : i32
    %6 = tpu.memref_slice %arg28[%c3_i32] : memref<8x!tpu.dma_semaphore, #tpu.memory_space<semaphore_mem>> -> memref<1x!tpu.dma_semaphore, #tpu.memory_space<semaphore_mem>>
    %7 = tpu.memref_squeeze %6 : memref<1x!tpu.dma_semaphore, #tpu.memory_space<semaphore_mem>> -> memref<!tpu.dma_semaphore, #tpu.memory_space<semaphore_mem>>
    tpu.enqueue_dma source(%arg12 : memref<1x128xf32, #tpu.memory_space<any>>) target(%arg23 : memref<1x128xf32, #tpu.memory_space<vmem>>) target_semaphore(%7 : memref<!tpu.dma_semaphore, #tpu.memory_space<semaphore_mem>>)
    %c4_i32 = arith.constant 4 : i32
    %8 = tpu.memref_slice %arg28[%c4_i32] : memref<8x!tpu.dma_semaphore, #tpu.memory_space<semaphore_mem>> -> memref<1x!tpu.dma_semaphore, #tpu.memory_space<semaphore_mem>>
    %9 = tpu.memref_squeeze %8 : memref<1x!tpu.dma_semaphore, #tpu.memory_space<semaphore_mem>> -> memref<!tpu.dma_semaphore, #tpu.memory_space<semaphore_mem>>
    tpu.enqueue_dma source(%arg13 : memref<256x128xf32, #tpu.memory_space<any>>) target(%arg24 : memref<256x128xf32, #tpu.memory_space<vmem>>) target_semaphore(%9 : memref<!tpu.dma_semaphore, #tpu.memory_space<semaphore_mem>>)
    %c5_i32 = arith.constant 5 : i32
    %10 = tpu.memref_slice %arg28[%c5_i32] : memref<8x!tpu.dma_semaphore, #tpu.memory_space<semaphore_mem>> -> memref<1x!tpu.dma_semaphore, #tpu.memory_space<semaphore_mem>>
    %11 = tpu.memref_squeeze %10 : memref<1x!tpu.dma_semaphore, #tpu.memory_space<semaphore_mem>> -> memref<!tpu.dma_semaphore, #tpu.memory_space<semaphore_mem>>
    tpu.enqueue_dma source(%arg14 : memref<1x128xf32, #tpu.memory_space<any>>) target(%arg25 : memref<1x128xf32, #tpu.memory_space<vmem>>) target_semaphore(%11 : memref<!tpu.dma_semaphore, #tpu.memory_space<semaphore_mem>>)
    %c6_i32 = arith.constant 6 : i32
    %12 = tpu.memref_slice %arg28[%c6_i32] : memref<8x!tpu.dma_semaphore, #tpu.memory_space<semaphore_mem>> -> memref<1x!tpu.dma_semaphore, #tpu.memory_space<semaphore_mem>>
    %13 = tpu.memref_squeeze %12 : memref<1x!tpu.dma_semaphore, #tpu.memory_space<semaphore_mem>> -> memref<!tpu.dma_semaphore, #tpu.memory_space<semaphore_mem>>
    tpu.enqueue_dma source(%arg15 : memref<128x3xf32, #tpu.memory_space<any>>) target(%arg26 : memref<128x3xf32, #tpu.memory_space<vmem>>) target_semaphore(%13 : memref<!tpu.dma_semaphore, #tpu.memory_space<semaphore_mem>>)
    %c7_i32 = arith.constant 7 : i32
    %14 = tpu.memref_slice %arg28[%c7_i32] : memref<8x!tpu.dma_semaphore, #tpu.memory_space<semaphore_mem>> -> memref<1x!tpu.dma_semaphore, #tpu.memory_space<semaphore_mem>>
    %15 = tpu.memref_squeeze %14 : memref<1x!tpu.dma_semaphore, #tpu.memory_space<semaphore_mem>> -> memref<!tpu.dma_semaphore, #tpu.memory_space<semaphore_mem>>
    tpu.enqueue_dma source(%arg16 : memref<1x3xf32, #tpu.memory_space<any>>) target(%arg27 : memref<1x3xf32, #tpu.memory_space<vmem>>) target_semaphore(%15 : memref<!tpu.dma_semaphore, #tpu.memory_space<semaphore_mem>>)
    %c0 = arith.constant 0 : index
    %c0_0 = arith.constant 0 : index
    %16 = vector.load %arg2[%c0, %c0_0] : memref<8x1xi32, #tpu.memory_space<vmem>>, vector<8x1xi32>
    %c1_i32_1 = arith.constant 1 : i32
    %17 = vector.broadcast %c1_i32_1 : i32 to vector<8x1xi32>
    %18 = arith.maxsi %16, %17 : vector<8x1xi32>
    %c1_i32_2 = arith.constant 1 : i32
    %19 = vector.broadcast %c1_i32_2 : i32 to vector<8x1xi32>
    %20 = arith.subi %18, %19 : vector<8x1xi32>
    %c7_i32_3 = arith.constant 7 : i32
    %21 = vector.broadcast %c7_i32_3 : i32 to vector<8x1xi32>
    %22 = arith.minsi %20, %21 : vector<8x1xi32>
    %23 = vector.shape_cast %22 : vector<8x1xi32> to vector<8x1xi32>
    %24 = vector.broadcast %23 : vector<8x1xi32> to vector<8x128xi32>
    %c0_i32_4 = arith.constant 0 : i32
    %25 = vector.broadcast %c0_i32_4 : i32 to vector<8x128xi32>
    %26 = arith.cmpi eq, %24, %25 : vector<8x128xi32>
    %c1_i32_5 = arith.constant 1 : i32
    %27 = vector.broadcast %c1_i32_5 : i32 to vector<8x128xi32>
    %28 = arith.cmpi eq, %24, %27 : vector<8x128xi32>
    %c2_i32_6 = arith.constant 2 : i32
    %29 = vector.broadcast %c2_i32_6 : i32 to vector<8x128xi32>
    %30 = arith.cmpi eq, %24, %29 : vector<8x128xi32>
    %c3_i32_7 = arith.constant 3 : i32
    %31 = vector.broadcast %c3_i32_7 : i32 to vector<8x128xi32>
    %32 = arith.cmpi eq, %24, %31 : vector<8x128xi32>
    %c4_i32_8 = arith.constant 4 : i32
    %33 = vector.broadcast %c4_i32_8 : i32 to vector<8x128xi32>
    %34 = arith.cmpi eq, %24, %33 : vector<8x128xi32>
    %c5_i32_9 = arith.constant 5 : i32
    %35 = vector.broadcast %c5_i32_9 : i32 to vector<8x128xi32>
    %36 = arith.cmpi eq, %24, %35 : vector<8x128xi32>
    %c6_i32_10 = arith.constant 6 : i32
    %37 = vector.broadcast %c6_i32_10 : i32 to vector<8x128xi32>
    %38 = arith.cmpi eq, %24, %37 : vector<8x128xi32>
    %c7_i32_11 = arith.constant 7 : i32
    %39 = vector.broadcast %c7_i32_11 : i32 to vector<8x128xi32>
    %40 = arith.cmpi eq, %24, %39 : vector<8x128xi32>
    %c0_12 = arith.constant 0 : index
    %c0_13 = arith.constant 0 : index
    %41 = vector.load %arg1[%c0_12, %c0_13] : memref<64x11xf32, #tpu.memory_space<vmem>>, vector<64x11xf32>
    %c0_14 = arith.constant 0 : index
    %c0_15 = arith.constant 0 : index
    %42 = vector.load %arg3[%c0_14, %c0_15] : memref<11x128xf32, #tpu.memory_space<vmem>>, vector<11x128xf32>
    %cst = arith.constant dense<0.000000e+00> : vector<64x128xf32>
    %43 = tpu.matmul %41, %42, %cst {dimension_numbers = #tpu.dot_dimension_numbers<[1], [0], [0], [1], [0, 0, 1, 1], [], []>} : vector<64x11xf32>, vector<11x128xf32>, vector<64x128xf32> -> vector<64x128xf32>
    %c0_16 = arith.constant 0 : index
    %c0_17 = arith.constant 0 : index
    %44 = vector.load %arg4[%c0_16, %c0_17] : memref<1x128xf32, #tpu.memory_space<vmem>>, vector<1x128xf32>
    %45 = vector.broadcast %44 : vector<1x128xf32> to vector<64x128xf32>
    %46 = arith.addf %43, %45 : vector<64x128xf32>
    %cst_18 = arith.constant 0.000000e+00 : f32
    %47 = vector.broadcast %cst_18 : f32 to vector<64x128xf32>
    %48 = arith.maximumf %46, %47 : vector<64x128xf32>
    %c0_19 = arith.constant 0 : index
    %c0_20 = arith.constant 0 : index
    %49 = vector.load %arg5[%c0_19, %c0_20] : memref<128x512xf32, #tpu.memory_space<vmem>>, vector<128x512xf32>
    %cst_21 = arith.constant dense<0.000000e+00> : vector<64x512xf32>
    %50 = tpu.matmul %48, %49, %cst_21 {dimension_numbers = #tpu.dot_dimension_numbers<[1], [0], [0], [1], [0, 0, 1, 1], [], []>} : vector<64x128xf32>, vector<128x512xf32>, vector<64x512xf32> -> vector<64x512xf32>
    %c0_22 = arith.constant 0 : index
    %c0_23 = arith.constant 0 : index
    %51 = vector.load %arg7[%c0_22, %c0_23] : memref<1x512xf32, #tpu.memory_space<vmem>>, vector<1x512xf32>
    %52 = vector.broadcast %51 : vector<1x512xf32> to vector<64x512xf32>
    %53 = arith.addf %50, %52 : vector<64x512xf32>
    %c0_24 = arith.constant 0 : index
    %c0_25 = arith.constant 0 : index
    %54 = vector.load %arg8[%c0_24, %c0_25] : memref<1x512xf32, #tpu.memory_space<vmem>>, vector<1x512xf32>
    %55 = vector.broadcast %54 : vector<1x512xf32> to vector<64x512xf32>
    %56 = arith.addf %53, %55 : vector<64x512xf32>
    %c0_26 = arith.constant 0 : index
    %c0_27 = arith.constant 0 : index
    %57 = vector.load %arg19[%c0_26, %c0_27] : memref<64x512xf32, #tpu.memory_space<vmem>>, vector<64x512xf32>
    tpu.vector_store %arg19[%c0_26, %c0_27], %56 {strides = array<i32>} : memref<64x512xf32, #tpu.memory_space<vmem>>, vector<64x512xf32>,
    %cst_28 = arith.constant 0.000000e+00 : f32
    %58 = vector.broadcast %cst_28 : f32 to vector<8x128xf32>
    %cst_29 = arith.constant 0.000000e+00 : f32
    %59 = vector.broadcast %cst_29 : f32 to vector<8x128xf32>
    %cst_30 = arith.constant 0.000000e+00 : f32
    %60 = vector.broadcast %cst_30 : f32 to vector<8x128xf32>
    %c0_31 = arith.constant 0 : index
    %c0_32 = arith.constant 0 : index
    %61 = vector.load %arg19[%c0_31, %c0_32] : memref<64x512xf32, #tpu.memory_space<vmem>>, vector<8x512xf32>
    %62 = arith.truncf %58 : vector<8x128xf32> to vector<8x128xbf16>
    %c0_33 = arith.constant 0 : index
    %c0_34 = arith.constant 0 : index
    %63 = vector.load %arg6[%c0_33, %c0_34] : memref<128x512xbf16, #tpu.memory_space<vmem>>, vector<128x512xbf16>
    %cst_35 = arith.constant dense<0.000000e+00> : vector<8x512xf32>
    %64 = tpu.matmul %62, %63, %cst_35 {dimension_numbers = #tpu.dot_dimension_numbers<[1], [0], [0], [1], [0, 0, 1, 1], [], []>} : vector<8x128xbf16>, vector<128x512xbf16>, vector<8x512xf32> -> vector<8x512xf32>
    %65 = arith.addf %61, %64 : vector<8x512xf32>
    %66 = vector.extract_strided_slice %65 {offsets = [0, 0], sizes = [8, 384], strides = [1, 1]} : vector<8x512xf32> to vector<8x384xf32>
    %cst_36 = arith.constant 5.000000e-01 : f32
    %67 = vector.broadcast %cst_36 : f32 to vector<8x384xf32>
    %68 = arith.mulf %67, %66 : vector<8x384xf32>
    %69 = math.tanh %68 : vector<8x384xf32>
    %cst_37 = arith.constant 1.000000e+00 : f32
    %70 = vector.broadcast %cst_37 : f32 to vector<8x384xf32>
    %71 = arith.addf %69, %70 : vector<8x384xf32>
    %cst_38 = arith.constant 5.000000e-01 : f32
    %72 = vector.broadcast %cst_38 : f32 to vector<8x384xf32>
    %73 = arith.mulf %72, %71 : vector<8x384xf32>
    %74 = vector.extract_strided_slice %73 {offsets = [0, 0], sizes = [8, 128], strides = [1, 1]} : vector<8x384xf32> to vector<8x128xf32>
    %75 = vector.extract_strided_slice %73 {offsets = [0, 128], sizes = [8, 128], strides = [1, 1]} : vector<8x384xf32> to vector<8x128xf32>
    %76 = vector.extract_strided_slice %73 {offsets = [0, 256], sizes = [8, 128], strides = [1, 1]} : vector<8x384xf32> to vector<8x128xf32>
    %77 = vector.extract_strided_slice %65 {offsets = [0, 384], sizes = [8, 128], strides = [1, 1]} : vector<8x512xf32> to vector<8x128xf32>
    %78 = math.tanh %77 : vector<8x128xf32>
    %79 = arith.mulf %75, %59 : vector<8x128xf32>
    %80 = arith.mulf %74, %78 : vector<8x128xf32>
    %81 = arith.addf %79, %80 : vector<8x128xf32>
    %82 = math.tanh %81 : vector<8x128xf32>
    %83 = arith.mulf %76, %82 : vector<8x128xf32>
    %84 = arith.select %26, %83, %60 : vector<8x128xi1>, vector<8x128xf32>
    %c8 = arith.constant 8 : index
    %c0_39 = arith.constant 0 : index
    %85 = vector.load %arg19[%c8, %c0_39] : memref<64x512xf32, #tpu.memory_space<vmem>>, vector<8x512xf32>
    %86 = arith.truncf %83 : vector<8x128xf32> to vector<8x128xbf16>
    %c0_40 = arith.constant 0 : index
    %c0_41 = arith.constant 0 : index
    %87 = vector.load %arg6[%c0_40, %c0_41] : memref<128x512xbf16, #tpu.memory_space<vmem>>, vector<128x512xbf16>
    %cst_42 = arith.constant dense<0.000000e+00> : vector<8x512xf32>
    %88 = tpu.matmul %86, %87, %cst_42 {dimension_numbers = #tpu.dot_dimension_numbers<[1], [0], [0], [1], [0, 0, 1, 1], [], []>} : vector<8x128xbf16>, vector<128x512xbf16>, vector<8x512xf32> -> vector<8x512xf32>
    %89 = arith.addf %85, %88 : vector<8x512xf32>
    %90 = vector.extract_strided_slice %89 {offsets = [0, 0], sizes = [8, 384], strides = [1, 1]} : vector<8x512xf32> to vector<8x384xf32>
    %cst_43 = arith.constant 5.000000e-01 : f32
    %91 = vector.broadcast %cst_43 : f32 to vector<8x384xf32>
    %92 = arith.mulf %91, %90 : vector<8x384xf32>
    %93 = math.tanh %92 : vector<8x384xf32>
    %cst_44 = arith.constant 1.000000e+00 : f32
    %94 = vector.broadcast %cst_44 : f32 to vector<8x384xf32>
    %95 = arith.addf %93, %94 : vector<8x384xf32>
    %cst_45 = arith.constant 5.000000e-01 : f32
    %96 = vector.broadcast %cst_45 : f32 to vector<8x384xf32>
    %97 = arith.mulf %96, %95 : vector<8x384xf32>
    %98 = vector.extract_strided_slice %97 {offsets = [0, 0], sizes = [8, 128], strides = [1, 1]} : vector<8x384xf32> to vector<8x128xf32>
    %99 = vector.extract_strided_slice %97 {offsets = [0, 128], sizes = [8, 128], strides = [1, 1]} : vector<8x384xf32> to vector<8x128xf32>
    %100 = vector.extract_strided_slice %97 {offsets = [0, 256], sizes = [8, 128], strides = [1, 1]} : vector<8x384xf32> to vector<8x128xf32>
    %101 = vector.extract_strided_slice %89 {offsets = [0, 384], sizes = [8, 128], strides = [1, 1]} : vector<8x512xf32> to vector<8x128xf32>
    %102 = math.tanh %101 : vector<8x128xf32>
    %103 = arith.mulf %99, %81 : vector<8x128xf32>
    %104 = arith.mulf %98, %102 : vector<8x128xf32>
    %105 = arith.addf %103, %104 : vector<8x128xf32>
    %106 = math.tanh %105 : vector<8x128xf32>
    %107 = arith.mulf %100, %106 : vector<8x128xf32>
    %108 = arith.select %28, %107, %84 : vector<8x128xi1>, vector<8x128xf32>
    %c16 = arith.constant 16 : index
    %c0_46 = arith.constant 0 : index
    %109 = vector.load %arg19[%c16, %c0_46] : memref<64x512xf32, #tpu.memory_space<vmem>>, vector<8x512xf32>
    %110 = arith.truncf %107 : vector<8x128xf32> to vector<8x128xbf16>
    %c0_47 = arith.constant 0 : index
    %c0_48 = arith.constant 0 : index
    %111 = vector.load %arg6[%c0_47, %c0_48] : memref<128x512xbf16, #tpu.memory_space<vmem>>, vector<128x512xbf16>
    %cst_49 = arith.constant dense<0.000000e+00> : vector<8x512xf32>
    %112 = tpu.matmul %110, %111, %cst_49 {dimension_numbers = #tpu.dot_dimension_numbers<[1], [0], [0], [1], [0, 0, 1, 1], [], []>} : vector<8x128xbf16>, vector<128x512xbf16>, vector<8x512xf32> -> vector<8x512xf32>
    %113 = arith.addf %109, %112 : vector<8x512xf32>
    %114 = vector.extract_strided_slice %113 {offsets = [0, 0], sizes = [8, 384], strides = [1, 1]} : vector<8x512xf32> to vector<8x384xf32>
    %cst_50 = arith.constant 5.000000e-01 : f32
    %115 = vector.broadcast %cst_50 : f32 to vector<8x384xf32>
    %116 = arith.mulf %115, %114 : vector<8x384xf32>
    %117 = math.tanh %116 : vector<8x384xf32>
    %cst_51 = arith.constant 1.000000e+00 : f32
    %118 = vector.broadcast %cst_51 : f32 to vector<8x384xf32>
    %119 = arith.addf %117, %118 : vector<8x384xf32>
    %cst_52 = arith.constant 5.000000e-01 : f32
    %120 = vector.broadcast %cst_52 : f32 to vector<8x384xf32>
    %121 = arith.mulf %120, %119 : vector<8x384xf32>
    %122 = vector.extract_strided_slice %121 {offsets = [0, 0], sizes = [8, 128], strides = [1, 1]} : vector<8x384xf32> to vector<8x128xf32>
    %123 = vector.extract_strided_slice %121 {offsets = [0, 128], sizes = [8, 128], strides = [1, 1]} : vector<8x384xf32> to vector<8x128xf32>
    %124 = vector.extract_strided_slice %121 {offsets = [0, 256], sizes = [8, 128], strides = [1, 1]} : vector<8x384xf32> to vector<8x128xf32>
    %125 = vector.extract_strided_slice %113 {offsets = [0, 384], sizes = [8, 128], strides = [1, 1]} : vector<8x512xf32> to vector<8x128xf32>
    %126 = math.tanh %125 : vector<8x128xf32>
    %127 = arith.mulf %123, %105 : vector<8x128xf32>
    %128 = arith.mulf %122, %126 : vector<8x128xf32>
    %129 = arith.addf %127, %128 : vector<8x128xf32>
    %130 = math.tanh %129 : vector<8x128xf32>
    %131 = arith.mulf %124, %130 : vector<8x128xf32>
    %132 = arith.select %30, %131, %108 : vector<8x128xi1>, vector<8x128xf32>
    %c24 = arith.constant 24 : index
    %c0_53 = arith.constant 0 : index
    %133 = vector.load %arg19[%c24, %c0_53] : memref<64x512xf32, #tpu.memory_space<vmem>>, vector<8x512xf32>
    %134 = arith.truncf %131 : vector<8x128xf32> to vector<8x128xbf16>
    %c0_54 = arith.constant 0 : index
    %c0_55 = arith.constant 0 : index
    %135 = vector.load %arg6[%c0_54, %c0_55] : memref<128x512xbf16, #tpu.memory_space<vmem>>, vector<128x512xbf16>
    %cst_56 = arith.constant dense<0.000000e+00> : vector<8x512xf32>
    %136 = tpu.matmul %134, %135, %cst_56 {dimension_numbers = #tpu.dot_dimension_numbers<[1], [0], [0], [1], [0, 0, 1, 1], [], []>} : vector<8x128xbf16>, vector<128x512xbf16>, vector<8x512xf32> -> vector<8x512xf32>
    %137 = arith.addf %133, %136 : vector<8x512xf32>
    %138 = vector.extract_strided_slice %137 {offsets = [0, 0], sizes = [8, 384], strides = [1, 1]} : vector<8x512xf32> to vector<8x384xf32>
    %cst_57 = arith.constant 5.000000e-01 : f32
    %139 = vector.broadcast %cst_57 : f32 to vector<8x384xf32>
    %140 = arith.mulf %139, %138 : vector<8x384xf32>
    %141 = math.tanh %140 : vector<8x384xf32>
    %cst_58 = arith.constant 1.000000e+00 : f32
    %142 = vector.broadcast %cst_58 : f32 to vector<8x384xf32>
    %143 = arith.addf %141, %142 : vector<8x384xf32>
    %cst_59 = arith.constant 5.000000e-01 : f32
    %144 = vector.broadcast %cst_59 : f32 to vector<8x384xf32>
    %145 = arith.mulf %144, %143 : vector<8x384xf32>
    %146 = vector.extract_strided_slice %145 {offsets = [0, 0], sizes = [8, 128], strides = [1, 1]} : vector<8x384xf32> to vector<8x128xf32>
    %147 = vector.extract_strided_slice %145 {offsets = [0, 128], sizes = [8, 128], strides = [1, 1]} : vector<8x384xf32> to vector<8x128xf32>
    %148 = vector.extract_strided_slice %145 {offsets = [0, 256], sizes = [8, 128], strides = [1, 1]} : vector<8x384xf32> to vector<8x128xf32>
    %149 = vector.extract_strided_slice %137 {offsets = [0, 384], sizes = [8, 128], strides = [1, 1]} : vector<8x512xf32> to vector<8x128xf32>
    %150 = math.tanh %149 : vector<8x128xf32>
    %151 = arith.mulf %147, %129 : vector<8x128xf32>
    %152 = arith.mulf %146, %150 : vector<8x128xf32>
    %153 = arith.addf %151, %152 : vector<8x128xf32>
    %154 = math.tanh %153 : vector<8x128xf32>
    %155 = arith.mulf %148, %154 : vector<8x128xf32>
    %156 = arith.select %32, %155, %132 : vector<8x128xi1>, vector<8x128xf32>
    %c32 = arith.constant 32 : index
    %c0_60 = arith.constant 0 : index
    %157 = vector.load %arg19[%c32, %c0_60] : memref<64x512xf32, #tpu.memory_space<vmem>>, vector<8x512xf32>
    %158 = arith.truncf %155 : vector<8x128xf32> to vector<8x128xbf16>
    %c0_61 = arith.constant 0 : index
    %c0_62 = arith.constant 0 : index
    %159 = vector.load %arg6[%c0_61, %c0_62] : memref<128x512xbf16, #tpu.memory_space<vmem>>, vector<128x512xbf16>
    %cst_63 = arith.constant dense<0.000000e+00> : vector<8x512xf32>
    %160 = tpu.matmul %158, %159, %cst_63 {dimension_numbers = #tpu.dot_dimension_numbers<[1], [0], [0], [1], [0, 0, 1, 1], [], []>} : vector<8x128xbf16>, vector<128x512xbf16>, vector<8x512xf32> -> vector<8x512xf32>
    %161 = arith.addf %157, %160 : vector<8x512xf32>
    %162 = vector.extract_strided_slice %161 {offsets = [0, 0], sizes = [8, 384], strides = [1, 1]} : vector<8x512xf32> to vector<8x384xf32>
    %cst_64 = arith.constant 5.000000e-01 : f32
    %163 = vector.broadcast %cst_64 : f32 to vector<8x384xf32>
    %164 = arith.mulf %163, %162 : vector<8x384xf32>
    %165 = math.tanh %164 : vector<8x384xf32>
    %cst_65 = arith.constant 1.000000e+00 : f32
    %166 = vector.broadcast %cst_65 : f32 to vector<8x384xf32>
    %167 = arith.addf %165, %166 : vector<8x384xf32>
    %cst_66 = arith.constant 5.000000e-01 : f32
    %168 = vector.broadcast %cst_66 : f32 to vector<8x384xf32>
    %169 = arith.mulf %168, %167 : vector<8x384xf32>
    %170 = vector.extract_strided_slice %169 {offsets = [0, 0], sizes = [8, 128], strides = [1, 1]} : vector<8x384xf32> to vector<8x128xf32>
    %171 = vector.extract_strided_slice %169 {offsets = [0, 128], sizes = [8, 128], strides = [1, 1]} : vector<8x384xf32> to vector<8x128xf32>
    %172 = vector.extract_strided_slice %169 {offsets = [0, 256], sizes = [8, 128], strides = [1, 1]} : vector<8x384xf32> to vector<8x128xf32>
    %173 = vector.extract_strided_slice %161 {offsets = [0, 384], sizes = [8, 128], strides = [1, 1]} : vector<8x512xf32> to vector<8x128xf32>
    %174 = math.tanh %173 : vector<8x128xf32>
    %175 = arith.mulf %171, %153 : vector<8x128xf32>
    %176 = arith.mulf %170, %174 : vector<8x128xf32>
    %177 = arith.addf %175, %176 : vector<8x128xf32>
    %178 = math.tanh %177 : vector<8x128xf32>
    %179 = arith.mulf %172, %178 : vector<8x128xf32>
    %180 = arith.select %34, %179, %156 : vector<8x128xi1>, vector<8x128xf32>
    %c40 = arith.constant 40 : index
    %c0_67 = arith.constant 0 : index
    %181 = vector.load %arg19[%c40, %c0_67] : memref<64x512xf32, #tpu.memory_space<vmem>>, vector<8x512xf32>
    %182 = arith.truncf %179 : vector<8x128xf32> to vector<8x128xbf16>
    %c0_68 = arith.constant 0 : index
    %c0_69 = arith.constant 0 : index
    %183 = vector.load %arg6[%c0_68, %c0_69] : memref<128x512xbf16, #tpu.memory_space<vmem>>, vector<128x512xbf16>
    %cst_70 = arith.constant dense<0.000000e+00> : vector<8x512xf32>
    %184 = tpu.matmul %182, %183, %cst_70 {dimension_numbers = #tpu.dot_dimension_numbers<[1], [0], [0], [1], [0, 0, 1, 1], [], []>} : vector<8x128xbf16>, vector<128x512xbf16>, vector<8x512xf32> -> vector<8x512xf32>
    %185 = arith.addf %181, %184 : vector<8x512xf32>
    %186 = vector.extract_strided_slice %185 {offsets = [0, 0], sizes = [8, 384], strides = [1, 1]} : vector<8x512xf32> to vector<8x384xf32>
    %cst_71 = arith.constant 5.000000e-01 : f32
    %187 = vector.broadcast %cst_71 : f32 to vector<8x384xf32>
    %188 = arith.mulf %187, %186 : vector<8x384xf32>
    %189 = math.tanh %188 : vector<8x384xf32>
    %cst_72 = arith.constant 1.000000e+00 : f32
    %190 = vector.broadcast %cst_72 : f32 to vector<8x384xf32>
    %191 = arith.addf %189, %190 : vector<8x384xf32>
    %cst_73 = arith.constant 5.000000e-01 : f32
    %192 = vector.broadcast %cst_73 : f32 to vector<8x384xf32>
    %193 = arith.mulf %192, %191 : vector<8x384xf32>
    %194 = vector.extract_strided_slice %193 {offsets = [0, 0], sizes = [8, 128], strides = [1, 1]} : vector<8x384xf32> to vector<8x128xf32>
    %195 = vector.extract_strided_slice %193 {offsets = [0, 128], sizes = [8, 128], strides = [1, 1]} : vector<8x384xf32> to vector<8x128xf32>
    %196 = vector.extract_strided_slice %193 {offsets = [0, 256], sizes = [8, 128], strides = [1, 1]} : vector<8x384xf32> to vector<8x128xf32>
    %197 = vector.extract_strided_slice %185 {offsets = [0, 384], sizes = [8, 128], strides = [1, 1]} : vector<8x512xf32> to vector<8x128xf32>
    %198 = math.tanh %197 : vector<8x128xf32>
    %199 = arith.mulf %195, %177 : vector<8x128xf32>
    %200 = arith.mulf %194, %198 : vector<8x128xf32>
    %201 = arith.addf %199, %200 : vector<8x128xf32>
    %202 = math.tanh %201 : vector<8x128xf32>
    %203 = arith.mulf %196, %202 : vector<8x128xf32>
    %204 = arith.select %36, %203, %180 : vector<8x128xi1>, vector<8x128xf32>
    %c48 = arith.constant 48 : index
    %c0_74 = arith.constant 0 : index
    %205 = vector.load %arg19[%c48, %c0_74] : memref<64x512xf32, #tpu.memory_space<vmem>>, vector<8x512xf32>
    %206 = arith.truncf %203 : vector<8x128xf32> to vector<8x128xbf16>
    %c0_75 = arith.constant 0 : index
    %c0_76 = arith.constant 0 : index
    %207 = vector.load %arg6[%c0_75, %c0_76] : memref<128x512xbf16, #tpu.memory_space<vmem>>, vector<128x512xbf16>
    %cst_77 = arith.constant dense<0.000000e+00> : vector<8x512xf32>
    %208 = tpu.matmul %206, %207, %cst_77 {dimension_numbers = #tpu.dot_dimension_numbers<[1], [0], [0], [1], [0, 0, 1, 1], [], []>} : vector<8x128xbf16>, vector<128x512xbf16>, vector<8x512xf32> -> vector<8x512xf32>
    %209 = arith.addf %205, %208 : vector<8x512xf32>
    %210 = vector.extract_strided_slice %209 {offsets = [0, 0], sizes = [8, 384], strides = [1, 1]} : vector<8x512xf32> to vector<8x384xf32>
    %cst_78 = arith.constant 5.000000e-01 : f32
    %211 = vector.broadcast %cst_78 : f32 to vector<8x384xf32>
    %212 = arith.mulf %211, %210 : vector<8x384xf32>
    %213 = math.tanh %212 : vector<8x384xf32>
    %cst_79 = arith.constant 1.000000e+00 : f32
    %214 = vector.broadcast %cst_79 : f32 to vector<8x384xf32>
    %215 = arith.addf %213, %214 : vector<8x384xf32>
    %cst_80 = arith.constant 5.000000e-01 : f32
    %216 = vector.broadcast %cst_80 : f32 to vector<8x384xf32>
    %217 = arith.mulf %216, %215 : vector<8x384xf32>
    %218 = vector.extract_strided_slice %217 {offsets = [0, 0], sizes = [8, 128], strides = [1, 1]} : vector<8x384xf32> to vector<8x128xf32>
    %219 = vector.extract_strided_slice %217 {offsets = [0, 128], sizes = [8, 128], strides = [1, 1]} : vector<8x384xf32> to vector<8x128xf32>
    %220 = vector.extract_strided_slice %217 {offsets = [0, 256], sizes = [8, 128], strides = [1, 1]} : vector<8x384xf32> to vector<8x128xf32>
    %221 = vector.extract_strided_slice %209 {offsets = [0, 384], sizes = [8, 128], strides = [1, 1]} : vector<8x512xf32> to vector<8x128xf32>
    %222 = math.tanh %221 : vector<8x128xf32>
    %223 = arith.mulf %219, %201 : vector<8x128xf32>
    %224 = arith.mulf %218, %222 : vector<8x128xf32>
    %225 = arith.addf %223, %224 : vector<8x128xf32>
    %226 = math.tanh %225 : vector<8x128xf32>
    %227 = arith.mulf %220, %226 : vector<8x128xf32>
    %228 = arith.select %38, %227, %204 : vector<8x128xi1>, vector<8x128xf32>
    %c56 = arith.constant 56 : index
    %c0_81 = arith.constant 0 : index
    %229 = vector.load %arg19[%c56, %c0_81] : memref<64x512xf32, #tpu.memory_space<vmem>>, vector<8x512xf32>
    %230 = arith.truncf %227 : vector<8x128xf32> to vector<8x128xbf16>
    %c0_82 = arith.constant 0 : index
    %c0_83 = arith.constant 0 : index
    %231 = vector.load %arg6[%c0_82, %c0_83] : memref<128x512xbf16, #tpu.memory_space<vmem>>, vector<128x512xbf16>
    %cst_84 = arith.constant dense<0.000000e+00> : vector<8x512xf32>
    %232 = tpu.matmul %230, %231, %cst_84 {dimension_numbers = #tpu.dot_dimension_numbers<[1], [0], [0], [1], [0, 0, 1, 1], [], []>} : vector<8x128xbf16>, vector<128x512xbf16>, vector<8x512xf32> -> vector<8x512xf32>
    %233 = arith.addf %229, %232 : vector<8x512xf32>
    %234 = vector.extract_strided_slice %233 {offsets = [0, 0], sizes = [8, 384], strides = [1, 1]} : vector<8x512xf32> to vector<8x384xf32>
    %cst_85 = arith.constant 5.000000e-01 : f32
    %235 = vector.broadcast %cst_85 : f32 to vector<8x384xf32>
    %236 = arith.mulf %235, %234 : vector<8x384xf32>
    %237 = math.tanh %236 : vector<8x384xf32>
    %cst_86 = arith.constant 1.000000e+00 : f32
    %238 = vector.broadcast %cst_86 : f32 to vector<8x384xf32>
    %239 = arith.addf %237, %238 : vector<8x384xf32>
    %cst_87 = arith.constant 5.000000e-01 : f32
    %240 = vector.broadcast %cst_87 : f32 to vector<8x384xf32>
    %241 = arith.mulf %240, %239 : vector<8x384xf32>
    %242 = vector.extract_strided_slice %241 {offsets = [0, 0], sizes = [8, 128], strides = [1, 1]} : vector<8x384xf32> to vector<8x128xf32>
    %243 = vector.extract_strided_slice %241 {offsets = [0, 128], sizes = [8, 128], strides = [1, 1]} : vector<8x384xf32> to vector<8x128xf32>
    %244 = vector.extract_strided_slice %241 {offsets = [0, 256], sizes = [8, 128], strides = [1, 1]} : vector<8x384xf32> to vector<8x128xf32>
    %245 = vector.extract_strided_slice %233 {offsets = [0, 384], sizes = [8, 128], strides = [1, 1]} : vector<8x512xf32> to vector<8x128xf32>
    %246 = math.tanh %245 : vector<8x128xf32>
    %247 = arith.mulf %243, %225 : vector<8x128xf32>
    %248 = arith.mulf %242, %246 : vector<8x128xf32>
    %249 = arith.addf %247, %248 : vector<8x128xf32>
    %250 = math.tanh %249 : vector<8x128xf32>
    %251 = arith.mulf %244, %250 : vector<8x128xf32>
    %252 = arith.select %40, %251, %228 : vector<8x128xi1>, vector<8x128xf32>
    %c0_i32_88 = arith.constant 0 : i32
    %253 = tpu.memref_slice %arg28[%c0_i32_88] : memref<8x!tpu.dma_semaphore, #tpu.memory_space<semaphore_mem>> -> memref<1x!tpu.dma_semaphore, #tpu.memory_space<semaphore_mem>>
    %254 = tpu.memref_squeeze %253 : memref<1x!tpu.dma_semaphore, #tpu.memory_space<semaphore_mem>> -> memref<!tpu.dma_semaphore, #tpu.memory_space<semaphore_mem>>
    tpu.wait_dma2 semaphore(%254 : memref<!tpu.dma_semaphore, #tpu.memory_space<semaphore_mem>>) src(%arg9 : memref<128x128xf32, #tpu.memory_space<any>>) dst(%arg20 : memref<128x128xf32, #tpu.memory_space<vmem>>)
    %c1_i32_89 = arith.constant 1 : i32
    %255 = tpu.memref_slice %arg28[%c1_i32_89] : memref<8x!tpu.dma_semaphore, #tpu.memory_space<semaphore_mem>> -> memref<1x!tpu.dma_semaphore, #tpu.memory_space<semaphore_mem>>
    %256 = tpu.memref_squeeze %255 : memref<1x!tpu.dma_semaphore, #tpu.memory_space<semaphore_mem>> -> memref<!tpu.dma_semaphore, #tpu.memory_space<semaphore_mem>>
    tpu.wait_dma2 semaphore(%256 : memref<!tpu.dma_semaphore, #tpu.memory_space<semaphore_mem>>) src(%arg10 : memref<1x128xf32, #tpu.memory_space<any>>) dst(%arg21 : memref<1x128xf32, #tpu.memory_space<vmem>>)
    %c2_i32_90 = arith.constant 2 : i32
    %257 = tpu.memref_slice %arg28[%c2_i32_90] : memref<8x!tpu.dma_semaphore, #tpu.memory_space<semaphore_mem>> -> memref<1x!tpu.dma_semaphore, #tpu.memory_space<semaphore_mem>>
    %258 = tpu.memref_squeeze %257 : memref<1x!tpu.dma_semaphore, #tpu.memory_space<semaphore_mem>> -> memref<!tpu.dma_semaphore, #tpu.memory_space<semaphore_mem>>
    tpu.wait_dma2 semaphore(%258 : memref<!tpu.dma_semaphore, #tpu.memory_space<semaphore_mem>>) src(%arg11 : memref<11x128xf32, #tpu.memory_space<any>>) dst(%arg22 : memref<11x128xf32, #tpu.memory_space<vmem>>)
    %c3_i32_91 = arith.constant 3 : i32
    %259 = tpu.memref_slice %arg28[%c3_i32_91] : memref<8x!tpu.dma_semaphore, #tpu.memory_space<semaphore_mem>> -> memref<1x!tpu.dma_semaphore, #tpu.memory_space<semaphore_mem>>
    %260 = tpu.memref_squeeze %259 : memref<1x!tpu.dma_semaphore, #tpu.memory_space<semaphore_mem>> -> memref<!tpu.dma_semaphore, #tpu.memory_space<semaphore_mem>>
    tpu.wait_dma2 semaphore(%260 : memref<!tpu.dma_semaphore, #tpu.memory_space<semaphore_mem>>) src(%arg12 : memref<1x128xf32, #tpu.memory_space<any>>) dst(%arg23 : memref<1x128xf32, #tpu.memory_space<vmem>>)
    %c4_i32_92 = arith.constant 4 : i32
    %261 = tpu.memref_slice %arg28[%c4_i32_92] : memref<8x!tpu.dma_semaphore, #tpu.memory_space<semaphore_mem>> -> memref<1x!tpu.dma_semaphore, #tpu.memory_space<semaphore_mem>>
    %262 = tpu.memref_squeeze %261 : memref<1x!tpu.dma_semaphore, #tpu.memory_space<semaphore_mem>> -> memref<!tpu.dma_semaphore, #tpu.memory_space<semaphore_mem>>
    tpu.wait_dma2 semaphore(%262 : memref<!tpu.dma_semaphore, #tpu.memory_space<semaphore_mem>>) src(%arg13 : memref<256x128xf32, #tpu.memory_space<any>>) dst(%arg24 : memref<256x128xf32, #tpu.memory_space<vmem>>)
    %c5_i32_93 = arith.constant 5 : i32
    %263 = tpu.memref_slice %arg28[%c5_i32_93] : memref<8x!tpu.dma_semaphore, #tpu.memory_space<semaphore_mem>> -> memref<1x!tpu.dma_semaphore, #tpu.memory_space<semaphore_mem>>
    %264 = tpu.memref_squeeze %263 : memref<1x!tpu.dma_semaphore, #tpu.memory_space<semaphore_mem>> -> memref<!tpu.dma_semaphore, #tpu.memory_space<semaphore_mem>>
    tpu.wait_dma2 semaphore(%264 : memref<!tpu.dma_semaphore, #tpu.memory_space<semaphore_mem>>) src(%arg14 : memref<1x128xf32, #tpu.memory_space<any>>) dst(%arg25 : memref<1x128xf32, #tpu.memory_space<vmem>>)
    %c6_i32_94 = arith.constant 6 : i32
    %265 = tpu.memref_slice %arg28[%c6_i32_94] : memref<8x!tpu.dma_semaphore, #tpu.memory_space<semaphore_mem>> -> memref<1x!tpu.dma_semaphore, #tpu.memory_space<semaphore_mem>>
    %266 = tpu.memref_squeeze %265 : memref<1x!tpu.dma_semaphore, #tpu.memory_space<semaphore_mem>> -> memref<!tpu.dma_semaphore, #tpu.memory_space<semaphore_mem>>
    tpu.wait_dma2 semaphore(%266 : memref<!tpu.dma_semaphore, #tpu.memory_space<semaphore_mem>>) src(%arg15 : memref<128x3xf32, #tpu.memory_space<any>>) dst(%arg26 : memref<128x3xf32, #tpu.memory_space<vmem>>)
    %c7_i32_95 = arith.constant 7 : i32
    %267 = tpu.memref_slice %arg28[%c7_i32_95] : memref<8x!tpu.dma_semaphore, #tpu.memory_space<semaphore_mem>> -> memref<1x!tpu.dma_semaphore, #tpu.memory_space<semaphore_mem>>
    %268 = tpu.memref_squeeze %267 : memref<1x!tpu.dma_semaphore, #tpu.memory_space<semaphore_mem>> -> memref<!tpu.dma_semaphore, #tpu.memory_space<semaphore_mem>>
    tpu.wait_dma2 semaphore(%268 : memref<!tpu.dma_semaphore, #tpu.memory_space<semaphore_mem>>) src(%arg16 : memref<1x3xf32, #tpu.memory_space<any>>) dst(%arg27 : memref<1x3xf32, #tpu.memory_space<vmem>>)
    %c0_96 = arith.constant 0 : index
    %c0_97 = arith.constant 0 : index
    %269 = vector.load %arg20[%c0_96, %c0_97] : memref<128x128xf32, #tpu.memory_space<vmem>>, vector<128x128xf32>
    %cst_98 = arith.constant dense<0.000000e+00> : vector<8x128xf32>
    %270 = tpu.matmul %252, %269, %cst_98 {dimension_numbers = #tpu.dot_dimension_numbers<[1], [0], [0], [1], [0, 0, 1, 1], [], []>} : vector<8x128xf32>, vector<128x128xf32>, vector<8x128xf32> -> vector<8x128xf32>
    %c0_99 = arith.constant 0 : index
    %c0_100 = arith.constant 0 : index
    %271 = vector.load %arg21[%c0_99, %c0_100] : memref<1x128xf32, #tpu.memory_space<vmem>>, vector<1x128xf32>
    %272 = vector.broadcast %271 : vector<1x128xf32> to vector<8x128xf32>
    %273 = arith.addf %270, %272 : vector<8x128xf32>
    %cst_101 = arith.constant 0.000000e+00 : f32
    %274 = vector.broadcast %cst_101 : f32 to vector<8x128xf32>
    %275 = arith.maximumf %273, %274 : vector<8x128xf32>
    %c0_102 = arith.constant 0 : index
    %c0_103 = arith.constant 0 : index
    %276 = vector.load %arg0[%c0_102, %c0_103] : memref<8x11xf32, #tpu.memory_space<vmem>>, vector<8x11xf32>
    %c0_104 = arith.constant 0 : index
    %c0_105 = arith.constant 0 : index
    %277 = vector.load %arg22[%c0_104, %c0_105] : memref<11x128xf32, #tpu.memory_space<vmem>>, vector<11x128xf32>
    %cst_106 = arith.constant dense<0.000000e+00> : vector<8x128xf32>
    %278 = tpu.matmul %276, %277, %cst_106 {dimension_numbers = #tpu.dot_dimension_numbers<[1], [0], [0], [1], [0, 0, 1, 1], [], []>} : vector<8x11xf32>, vector<11x128xf32>, vector<8x128xf32> -> vector<8x128xf32>
    %c0_107 = arith.constant 0 : index
    %c0_108 = arith.constant 0 : index
    %279 = vector.load %arg23[%c0_107, %c0_108] : memref<1x128xf32, #tpu.memory_space<vmem>>, vector<1x128xf32>
    %280 = vector.broadcast %279 : vector<1x128xf32> to vector<8x128xf32>
    %281 = arith.addf %278, %280 : vector<8x128xf32>
    %cst_109 = arith.constant 0.000000e+00 : f32
    %282 = vector.broadcast %cst_109 : f32 to vector<8x128xf32>
    %283 = arith.maximumf %281, %282 : vector<8x128xf32>
    %284 = tpu.concatenate %275, %283 in 1 : vector<8x128xf32>, vector<8x128xf32> -> vector<8x256xf32>
    %c0_110 = arith.constant 0 : index
    %c0_111 = arith.constant 0 : index
    %285 = vector.load %arg24[%c0_110, %c0_111] : memref<256x128xf32, #tpu.memory_space<vmem>>, vector<256x128xf32>
    %cst_112 = arith.constant dense<0.000000e+00> : vector<8x128xf32>
    %286 = tpu.matmul %284, %285, %cst_112 {dimension_numbers = #tpu.dot_dimension_numbers<[1], [0], [0], [1], [0, 0, 1, 1], [], []>} : vector<8x256xf32>, vector<256x128xf32>, vector<8x128xf32> -> vector<8x128xf32>
    %c0_113 = arith.constant 0 : index
    %c0_114 = arith.constant 0 : index
    %287 = vector.load %arg25[%c0_113, %c0_114] : memref<1x128xf32, #tpu.memory_space<vmem>>, vector<1x128xf32>
    %288 = vector.broadcast %287 : vector<1x128xf32> to vector<8x128xf32>
    %289 = arith.addf %286, %288 : vector<8x128xf32>
    %cst_115 = arith.constant 0.000000e+00 : f32
    %290 = vector.broadcast %cst_115 : f32 to vector<8x128xf32>
    %291 = arith.maximumf %289, %290 : vector<8x128xf32>
    %c0_116 = arith.constant 0 : index
    %c0_117 = arith.constant 0 : index
    %292 = vector.load %arg26[%c0_116, %c0_117] : memref<128x3xf32, #tpu.memory_space<vmem>>, vector<128x3xf32>
    %cst_118 = arith.constant dense<0.000000e+00> : vector<8x3xf32>
    %293 = tpu.matmul %291, %292, %cst_118 {dimension_numbers = #tpu.dot_dimension_numbers<[1], [0], [0], [1], [0, 0, 1, 1], [], []>} : vector<8x128xf32>, vector<128x3xf32>, vector<8x3xf32> -> vector<8x3xf32>
    %c0_119 = arith.constant 0 : index
    %c0_120 = arith.constant 0 : index
    %294 = vector.load %arg27[%c0_119, %c0_120] : memref<1x3xf32, #tpu.memory_space<vmem>>, vector<1x3xf32>
    %295 = vector.broadcast %294 : vector<1x3xf32> to vector<8x3xf32>
    %296 = arith.addf %293, %295 : vector<8x3xf32>
    %297 = math.tanh %296 : vector<8x3xf32>
    %cst_121 = arith.constant 1.000000e+00 : f32
    %298 = vector.broadcast %cst_121 : f32 to vector<8x3xf32>
    %299 = arith.mulf %298, %297 : vector<8x3xf32>
    %c0_122 = arith.constant 0 : index
    %c0_123 = arith.constant 0 : index
    %300 = vector.load %arg17[%c0_122, %c0_123] : memref<8x3xf32, #tpu.memory_space<vmem>>, vector<8x3xf32>
    tpu.vector_store %arg17[%c0_122, %c0_123], %299 {strides = array<i32>} : memref<8x3xf32, #tpu.memory_space<vmem>>, vector<8x3xf32>,
    %c0_124 = arith.constant 0 : index
    %c0_125 = arith.constant 0 : index
    %301 = vector.load %arg18[%c0_124, %c0_125] : memref<8x128xf32, #tpu.memory_space<vmem>>, vector<8x128xf32>
    tpu.vector_store %arg18[%c0_124, %c0_125], %275 {strides = array<i32>} : memref<8x128xf32, #tpu.memory_space<vmem>>, vector<8x128xf32>,
    return
  }
}

</mosaic_0001>

<llo_original>
// kernel: tpu_custom_call.1
$region0: #{tpu_custom_call.1}
  #allocation0 [shape = 'u32[]', space=smem, size = 0x4, offset = 0x4, fixed_abs, tag = 'smem constant byte address 0x4 - core index']
  #allocation1 [shape = 'u32[144,128]{1,0:T(1,128)}', space=vmem, size = 0x12000, scoped, tag = 'internal scratch']
  #allocation2 [shape = 'f32[64,512]{1,0:T(8,128)}', space=vmem, size = 0x20000, scoped, tag = 'scratch operand']
  #allocation3 [shape = 'f32[128,128]{1,0:T(8,128)}', space=vmem, size = 0x10000, scoped, tag = 'scratch operand']
  #allocation4 [shape = 'f32[1,128]{1,0:T(1,128)}', space=vmem, size = 0x200, scoped, tag = 'scratch operand']
  #allocation5 [shape = 'f32[11,128]{1,0:T(8,128)}', space=vmem, size = 0x2000, scoped, tag = 'scratch operand']
  #allocation6 [shape = 'f32[1,128]{1,0:T(1,128)}', space=vmem, size = 0x200, scoped, tag = 'scratch operand']
  #allocation7 [shape = 'f32[256,128]{1,0:T(8,128)}', space=vmem, size = 0x20000, scoped, tag = 'scratch operand']
  #allocation8 [shape = 'f32[1,128]{1,0:T(1,128)}', space=vmem, size = 0x200, scoped, tag = 'scratch operand']
  #allocation9 [shape = 'f32[128,3]{1,0:T(8,128)}', space=vmem, size = 0x10000, scoped, tag = 'scratch operand']
  #allocation10 [shape = 'f32[1,3]{1,0:T(1,128)}', space=vmem, size = 0x200, scoped, tag = 'scratch operand']
  #allocation11 [shape = 's32[8]{0}', space=sflag, size = 0x20, scoped, tag = 'scratch operand']
  #allocation18 [shape = 's32[]', space=sflag, size = 0x4, offset = 0, fixed_abs, tag = 'sflag constant byte address 0x0 - dummy sync flag']
  #allocation19 [shape = 's32[]', space=sflag, size = 0x4, offset = 0, fixed_abs, tag = 'sflag constant byte address 0x0 - dummy sync flag']
  #allocation20 [shape = 's32[]', space=sflag, size = 0x4, offset = 0, fixed_abs, tag = 'sflag constant byte address 0x0 - dummy sync flag']
  #allocation21 [shape = 's32[]', space=sflag, size = 0x4, offset = 0, fixed_abs, tag = 'sflag constant byte address 0x0 - dummy sync flag']
  #allocation22 [shape = 's32[]', space=sflag, size = 0x4, offset = 0, fixed_abs, tag = 'sflag constant byte address 0x0 - dummy sync flag']
  #allocation23 [shape = 's32[]', space=sflag, size = 0x4, offset = 0, fixed_abs, tag = 'sflag constant byte address 0x0 - dummy sync flag']
  #allocation24 [shape = 'u32[]', space=smem, size = 0x4, offset = 0x44, fixed_abs, tag = 'smem constant byte address 0x44 - assertion arg 0']
  #allocation25 [shape = 'u32[]', space=smem, size = 0x4, offset = 0x48, fixed_abs, tag = 'smem constant byte address 0x48 - assertion arg 1']
  #allocation26 [shape = 's32[]', space=sflag, size = 0x4, offset = 0, fixed_abs, tag = 'sflag constant byte address 0x0 - dummy sync flag']
  #allocation27 [shape = 's32[]', space=sflag, size = 0x4, offset = 0, fixed_abs, tag = 'sflag constant byte address 0x0 - dummy sync flag']
  #allocation28 [shape = 's32[]', space=sflag, size = 0x4, offset = 0, fixed_abs, tag = 'sflag constant byte address 0x0 - dummy sync flag']
  %s0 = inlined_call_operand.vmem [shape: f32[8,11], index: 0, kind: input, shape index: {}]
  %s1 = inlined_call_operand.vmem [shape: f32[64,11], index: 1, kind: input, shape index: {}]
  %s2 = inlined_call_operand.vmem [shape: s32[8,1], index: 2, kind: input, shape index: {}]
  %s3 = inlined_call_operand.vmem [shape: f32[11,128], index: 3, kind: input, shape index: {}]
  %s4 = inlined_call_operand.vmem [shape: f32[1,128], index: 4, kind: input, shape index: {}]
  %s5 = inlined_call_operand.hbm [shape: f32[128,512], index: 5, kind: input, shape index: {}]
  %s6 = inlined_call_operand.hbm [shape: bf16[128,512], index: 6, kind: input, shape index: {}]
  %s7 = inlined_call_operand.vmem [shape: f32[1,512], index: 7, kind: input, shape index: {}]
  %s8 = inlined_call_operand.vmem [shape: f32[1,512], index: 8, kind: input, shape index: {}]
  %s9 = inlined_call_operand.vmem [shape: f32[128,128], index: 9, kind: input, shape index: {}]
  %s10 = inlined_call_operand.vmem [shape: f32[1,128], index: 10, kind: input, shape index: {}]
  %s11 = inlined_call_operand.vmem [shape: f32[11,128], index: 11, kind: input, shape index: {}]
  %s12 = inlined_call_operand.vmem [shape: f32[1,128], index: 12, kind: input, shape index: {}]
  %s13 = inlined_call_operand.hbm [shape: f32[256,128], index: 13, kind: input, shape index: {}]
  %s14 = inlined_call_operand.vmem [shape: f32[1,128], index: 14, kind: input, shape index: {}]
  %s15 = inlined_call_operand.vmem [shape: f32[128,3], index: 15, kind: input, shape index: {}]
  %s16 = inlined_call_operand.vmem [shape: f32[1,3], index: 16, kind: input, shape index: {}]
  %s17 = inlined_call_operand.vmem [shape: f32[8,3], index: 17, kind: output, shape index: {0}]
  %s18 = inlined_call_operand.hbm [shape: f32[8,128], index: 18, kind: output, shape index: {1}]
  %19 = xla_tuple %s17, %s18
  %s20 = sld [smem:[#allocation0]]
  $region291: #{tpu_custom_call.1} parent=0
    _
  %s22 = ssub.s32 1, %s20
  %s23 = scalar_select 0, %s22, %s20
  $region1: #{tpu_custom_call.1} parent=0
    #allocation12 [shape = 'u8[262144]{0}', space=vmem, size = 0x40000, scoped, tag = 'input window, operand 5, single buffered']
    #allocation13 [shape = 's32[1]{0}', space=sflag, size = 0x4, scoped, tag = 'scoped memory for tpu_custom_call.1']
    #allocation14 [shape = 's32[1]{0}', space=sflag, size = 0x4, scoped, tag = 'scoped memory for tpu_custom_call.1']
    #allocation15 [shape = 'u8[131072]{0}', space=vmem, size = 0x20000, scoped, tag = 'input window, operand 6, single buffered']
    #allocation16 [shape = 's32[1]{0}', space=sflag, size = 0x4, scoped, tag = 'scoped memory for tpu_custom_call.1']
    #allocation17 [shape = 'u8[4096]{0}', space=vmem, size = 0x1000, scoped, tag = 'output window, operand 1, single buffered']
    %24 = vsyncpa [#allocation13], 0
    %25 = vsyncpa [#allocation16], 0
    %26 = vsyncpa [#allocation14], 0
    // Predicated region
    $region2: #{tpu_custom_call.1} parent=1 // pred_check
      _
    $region3: #{tpu_custom_call.1} parent=1 // pred_check_branch
      %28 = sbr.rel (0) target = $region5
    $region4: #{tpu_custom_call.1} parent=1 // pred_region
      _
    $region5: #{tpu_custom_call.1} parent=1 // pred_fallthru
      _
    // Predicated region
    $region6: #{tpu_custom_call.1} parent=1 // pred_check
      _
    $region7: #{tpu_custom_call.1} parent=1 // pred_check_branch
      %30 = sbr.rel (0) target = $region9
    $region8: #{tpu_custom_call.1} parent=1 // pred_region
      _
    $region9: #{tpu_custom_call.1} parent=1 // pred_fallthru
      _
    // Predicated region
    $region10: #{tpu_custom_call.1} parent=1 // pred_check
      _
    $region11: #{tpu_custom_call.1} parent=1 // pred_check_branch
      %32 = sbr.rel (0) target = $region13
    $region12: #{tpu_custom_call.1} parent=1 // pred_region
      _
    $region13: #{tpu_custom_call.1} parent=1 // pred_fallthru
      _
    // Predicated region
    $region14: #{tpu_custom_call.1} parent=1 // pred_check
      _
    $region15: #{tpu_custom_call.1} parent=1 // pred_check_branch
      %34 = sbr.rel (0) target = $region17
    $region16: #{tpu_custom_call.1} parent=1 // pred_region
      _
    $region17: #{tpu_custom_call.1} parent=1 // pred_fallthru
      _
    // Predicated region
    $region18: #{tpu_custom_call.1} parent=1 // pred_check
      _
    $region19: #{tpu_custom_call.1} parent=1 // pred_check_branch
      %36 = sbr.rel (0) target = $region21
    $region20: #{tpu_custom_call.1} parent=1 // pred_region
      _
    $region21: #{tpu_custom_call.1} parent=1 // pred_fallthru
      _
    // Predicated region
    $region22: #{tpu_custom_call.1} parent=1 // pred_check
      _
    $region23: #{tpu_custom_call.1} parent=1 // pred_check_branch
      %38 = sbr.rel (0) target = $region25
    $region24: #{tpu_custom_call.1} parent=1 // pred_region
      %s40 = ssub.s32 8192, 8192
      %41 = vsyncadd [#allocation13], %s40
      %s42 = sshll.u32 [#allocation12], 4
      %s43 = int_to_ptr.vmem [resolvable:$true] %s42
      %48 = dma.hbm_to_vmem [thread:$0]  %s5, 8192, %s43, [#allocation13], 512, 512, 32
    $region25: #{tpu_custom_call.1} parent=1 // pred_fallthru
      _
    // Predicated region
    $region26: #{tpu_custom_call.1} parent=1 // pred_check
      _
    $region27: #{tpu_custom_call.1} parent=1 // pred_check_branch
      %50 = sbr.rel (0) target = $region29
    $region28: #{tpu_custom_call.1} parent=1 // pred_region
      %s52 = ssub.s32 4096, 4096
      %53 = vsyncadd [#allocation16], %s52
      %s54 = sshll.u32 [#allocation15], 4
      %s55 = int_to_ptr.vmem [resolvable:$true] %s54
      %60 = dma.hbm_to_vmem [thread:$0]  %s6, 4096, %s55, [#allocation16], 256, 256, 16
    $region29: #{tpu_custom_call.1} parent=1 // pred_fallthru
      _
    // Predicated region
    $region30: #{tpu_custom_call.1} parent=1 // pred_check
      _
    $region31: #{tpu_custom_call.1} parent=1 // pred_check_branch
      %62 = sbr.rel (0) target = $region33
    $region32: #{tpu_custom_call.1} parent=1 // pred_region
      _
    $region33: #{tpu_custom_call.1} parent=1 // pred_fallthru
      _
    // Predicated region
    $region34: #{tpu_custom_call.1} parent=1 // pred_check
      _
    $region35: #{tpu_custom_call.1} parent=1 // pred_check_branch
      %64 = sbr.rel (0) target = $region37
    $region36: #{tpu_custom_call.1} parent=1 // pred_region
      _
    $region37: #{tpu_custom_call.1} parent=1 // pred_fallthru
      _
    // Predicated region
    $region38: #{tpu_custom_call.1} parent=1 // pred_check
      _
    $region39: #{tpu_custom_call.1} parent=1 // pred_check_branch
      %66 = sbr.rel (0) target = $region41
    $region40: #{tpu_custom_call.1} parent=1 // pred_region
      %67 = dma.done [#allocation13], 8192
    $region41: #{tpu_custom_call.1} parent=1 // pred_fallthru
      _
    // Predicated region
    $region42: #{tpu_custom_call.1} parent=1 // pred_check
      _
    $region43: #{tpu_custom_call.1} parent=1 // pred_check_branch
      %69 = sbr.rel (0) target = $region45
    $region44: #{tpu_custom_call.1} parent=1 // pred_region
      %70 = dma.done [#allocation16], 4096
    $region45: #{tpu_custom_call.1} parent=1 // pred_fallthru
      _
    %p73 = scmp.lt.u32.totalorder 128, 8
    %p74 = pneg %p73
    // Predicated region
    $region46: #{tpu_custom_call.1} parent=1 // pred_check
      _
    $region47: #{tpu_custom_call.1} parent=1 // pred_check_branch
      %76 = sbr.rel (%p73) target = $region49
    $region48: #{tpu_custom_call.1} parent=1 // pred_region
      %s92 = sand.u32 128, 7
      %p93 = scmp.eq.s32.totalorder %s92, 0
      // Predicated region
      $region61: #{tpu_custom_call.1} parent=48 // pred_check
        %p94 = pneg %p93
      $region62: #{tpu_custom_call.1} parent=48 // pred_check_branch
        %96 = sbr.rel (%p94) target = $region64
      $region63: #{tpu_custom_call.1} parent=48 // pred_region
        loop: start=0, step=1, limit=1
        $region65: #{tpu_custom_call.1} parent=63 // loop_pre_header
          _
        $region66: #{tpu_custom_call.1} parent=63 // loop_header
          %s98 = sphi 0, %s102
          %p99 = scmp.ge.s32.totalorder %s98, 1
          %s103 = sphi %s9, %s9
          %s104 = sphi [#allocation3], [#allocation3]
        $region67: #{tpu_custom_call.1} parent=63 // loop_header_branch
          %101 = sbr.rel (%p99) target = $region71
        $region68: #{tpu_custom_call.1} parent=63 // loop_body
          %v105 = vld [vmem:[%s103] sm:$0xff]
          %106 = vst [vmem:[%s104] sm:$0xff] %v105
          %v107 = vld [vmem:[%s103 + $0x8] sm:$0xff]
          %108 = vst [vmem:[%s104 + $0x8] sm:$0xff] %v107
          %v109 = vld [vmem:[%s103 + $0x10] sm:$0xff]
          %110 = vst [vmem:[%s104 + $0x10] sm:$0xff] %v109
          %v111 = vld [vmem:[%s103 + $0x18] sm:$0xff]
          %112 = vst [vmem:[%s104 + $0x18] sm:$0xff] %v111
          %v113 = vld [vmem:[%s103 + $0x20] sm:$0xff]
          %114 = vst [vmem:[%s104 + $0x20] sm:$0xff] %v113
          %v115 = vld [vmem:[%s103 + $0x28] sm:$0xff]
          %116 = vst [vmem:[%s104 + $0x28] sm:$0xff] %v115
          %v117 = vld [vmem:[%s103 + $0x30] sm:$0xff]
          %118 = vst [vmem:[%s104 + $0x30] sm:$0xff] %v117
          %v119 = vld [vmem:[%s103 + $0x38] sm:$0xff]
          %120 = vst [vmem:[%s104 + $0x38] sm:$0xff] %v119
          %v121 = vld [vmem:[%s103 + $0x40] sm:$0xff]
          %122 = vst [vmem:[%s104 + $0x40] sm:$0xff] %v121
          %v123 = vld [vmem:[%s103 + $0x48] sm:$0xff]
          %124 = vst [vmem:[%s104 + $0x48] sm:$0xff] %v123
          %v125 = vld [vmem:[%s103 + $0x50] sm:$0xff]
          %126 = vst [vmem:[%s104 + $0x50] sm:$0xff] %v125
          %v127 = vld [vmem:[%s103 + $0x58] sm:$0xff]
          %128 = vst [vmem:[%s104 + $0x58] sm:$0xff] %v127
          %v129 = vld [vmem:[%s103 + $0x60] sm:$0xff]
          %130 = vst [vmem:[%s104 + $0x60] sm:$0xff] %v129
          %v131 = vld [vmem:[%s103 + $0x68] sm:$0xff]
          %132 = vst [vmem:[%s104 + $0x68] sm:$0xff] %v131
          %v133 = vld [vmem:[%s103 + $0x70] sm:$0xff]
          %134 = vst [vmem:[%s104 + $0x70] sm:$0xff] %v133
          %v135 = vld [vmem:[%s103 + $0x78] sm:$0xff]
          %136 = vst [vmem:[%s104 + $0x78] sm:$0xff] %v135
        $region69: #{tpu_custom_call.1} parent=63 // loop_footer
          %s102 = sadd.s32 1, %s98
        $region70: #{tpu_custom_call.1} parent=63 // loop_footer_branch
          %97 = sbr.rel target = $region66
        $region71: #{tpu_custom_call.1} parent=63 // loop_exit
          _
      $region64: #{tpu_custom_call.1} parent=48 // pred_fallthru
        _
      %p137 = pneg %p93
      // Predicated region
      $region72: #{tpu_custom_call.1} parent=48 // pred_check
        _
      $region73: #{tpu_custom_call.1} parent=48 // pred_check_branch
        %139 = sbr.rel (%p93) target = $region75
      $region74: #{tpu_custom_call.1} parent=48 // pred_region
        %s140 = sand.u32 128, 7
      $region75: #{tpu_custom_call.1} parent=48 // pred_fallthru
        _
    $region49: #{tpu_custom_call.1} parent=1 // pred_fallthru
      _
    // Predicated region
    $region50: #{tpu_custom_call.1} parent=1 // pred_check
      %p77 = pneg %p73
    $region51: #{tpu_custom_call.1} parent=1 // pred_check_branch
      %79 = sbr.rel (%p77) target = $region53
    $region52: #{tpu_custom_call.1} parent=1 // pred_region
      %s80 = sshll.u32 1, 128
      %s81 = ssub.s32 %s80, 1
      loop: start=0, step=1, limit=1
      $region54: #{tpu_custom_call.1} parent=52 // loop_pre_header
        _
      $region55: #{tpu_custom_call.1} parent=52 // loop_header
        %s83 = sphi 0, %s87
        %p84 = scmp.ge.s32.totalorder %s83, 1
        %s88 = sphi %s9, %s9
        %s89 = sphi [#allocation3], [#allocation3]
      $region56: #{tpu_custom_call.1} parent=52 // loop_header_branch
        %86 = sbr.rel (%p84) target = $region60
      $region57: #{tpu_custom_call.1} parent=52 // loop_body
        %v90 = vld [vmem:[%s88] sm:%s81]
        %91 = vst [vmem:[%s89] sm:%s81] %v90
      $region58: #{tpu_custom_call.1} parent=52 // loop_footer
        %s87 = sadd.s32 1, %s83
      $region59: #{tpu_custom_call.1} parent=52 // loop_footer_branch
        %82 = sbr.rel target = $region55
      $region60: #{tpu_custom_call.1} parent=52 // loop_exit
        _
    $region53: #{tpu_custom_call.1} parent=1 // pred_fallthru
      _
    // Predicated region
    $region76: #{tpu_custom_call.1} parent=1 // pred_check
      _
    $region77: #{tpu_custom_call.1} parent=1 // pred_check_branch
      %143 = sbr.rel (0) target = $region79
    $region78: #{tpu_custom_call.1} parent=1 // pred_region
      %144 = vsyncadd [#allocation11], 2048
    $region79: #{tpu_custom_call.1} parent=1 // pred_fallthru
      _
    %s145 = scalar_lea.sflag [#allocation11], 1
    %p147 = scmp.lt.u32.totalorder 1, 8
    %p148 = pneg %p147
    // Predicated region
    $region80: #{tpu_custom_call.1} parent=1 // pred_check
      _
    $region81: #{tpu_custom_call.1} parent=1 // pred_check_branch
      %150 = sbr.rel (%p147) target = $region83
    $region82: #{tpu_custom_call.1} parent=1 // pred_region
      %s166 = sand.u32 1, 7
      %p167 = scmp.eq.s32.totalorder %s166, 0
      %p168 = pneg %p167
      // Predicated region
      $region95: #{tpu_custom_call.1} parent=82 // pred_check
        _
      $region96: #{tpu_custom_call.1} parent=82 // pred_check_branch
        %170 = sbr.rel (%p167) target = $region98
      $region97: #{tpu_custom_call.1} parent=82 // pred_region
        %s171 = sand.u32 1, 7
        %s172 = ssub.s32 1, %s171
        %s173 = scalar_lea.vmem %s10, %s172
        %s174 = ssub.s32 1, %s171
        %s175 = scalar_lea.vmem [#allocation4], %s174
        %s176 = sshll.u32 1, %s171
        %s177 = ssub.s32 %s176, 1
        loop: start=0, step=1, limit=1
        $region99: #{tpu_custom_call.1} parent=97 // loop_pre_header
          _
        $region100: #{tpu_custom_call.1} parent=97 // loop_header
          %s179 = sphi 0, %s183
          %p180 = scmp.ge.s32.totalorder %s179, 1
          %s184 = sphi %s173, %s173
          %s185 = sphi %s175, %s175
        $region101: #{tpu_custom_call.1} parent=97 // loop_header_branch
          %182 = sbr.rel (%p180) target = $region105
        $region102: #{tpu_custom_call.1} parent=97 // loop_body
          %v186 = vld [vmem:[%s184] sm:%s177]
          %187 = vst [vmem:[%s185] sm:%s177] %v186
        $region103: #{tpu_custom_call.1} parent=97 // loop_footer
          %s183 = sadd.s32 1, %s179
        $region104: #{tpu_custom_call.1} parent=97 // loop_footer_branch
          %178 = sbr.rel target = $region100
        $region105: #{tpu_custom_call.1} parent=97 // loop_exit
          _
      $region98: #{tpu_custom_call.1} parent=82 // pred_fallthru
        _
    $region83: #{tpu_custom_call.1} parent=1 // pred_fallthru
      _
    // Predicated region
    $region84: #{tpu_custom_call.1} parent=1 // pred_check
      %p151 = pneg %p147
    $region85: #{tpu_custom_call.1} parent=1 // pred_check_branch
      %153 = sbr.rel (%p151) target = $region87
    $region86: #{tpu_custom_call.1} parent=1 // pred_region
      %s154 = sshll.u32 1, 1
      %s155 = ssub.s32 %s154, 1
      loop: start=0, step=1, limit=1
      $region88: #{tpu_custom_call.1} parent=86 // loop_pre_header
        _
      $region89: #{tpu_custom_call.1} parent=86 // loop_header
        %s157 = sphi 0, %s161
        %p158 = scmp.ge.s32.totalorder %s157, 1
        %s162 = sphi %s10, %s10
        %s163 = sphi [#allocation4], [#allocation4]
      $region90: #{tpu_custom_call.1} parent=86 // loop_header_branch
        %160 = sbr.rel (%p158) target = $region94
      $region91: #{tpu_custom_call.1} parent=86 // loop_body
        %v164 = vld [vmem:[%s162] sm:%s155]
        %165 = vst [vmem:[%s163] sm:%s155] %v164
      $region92: #{tpu_custom_call.1} parent=86 // loop_footer
        %s161 = sadd.s32 1, %s157
      $region93: #{tpu_custom_call.1} parent=86 // loop_footer_branch
        %156 = sbr.rel target = $region89
      $region94: #{tpu_custom_call.1} parent=86 // loop_exit
        _
    $region87: #{tpu_custom_call.1} parent=1 // pred_fallthru
      _
    // Predicated region
    $region106: #{tpu_custom_call.1} parent=1 // pred_check
      _
    $region107: #{tpu_custom_call.1} parent=1 // pred_check_branch
      %190 = sbr.rel (0) target = $region109
    $region108: #{tpu_custom_call.1} parent=1 // pred_region
      %191 = vsyncadd %s145, 16
    $region109: #{tpu_custom_call.1} parent=1 // pred_fallthru
      _
    %s192 = scalar_lea.sflag [#allocation11], 2
    %p194 = scmp.lt.u32.totalorder 11, 8
    %p195 = pneg %p194
    // Predicated region
    $region110: #{tpu_custom_call.1} parent=1 // pred_check
      _
    $region111: #{tpu_custom_call.1} parent=1 // pred_check_branch
      %197 = sbr.rel (%p194) target = $region113
    $region112: #{tpu_custom_call.1} parent=1 // pred_region
      %s213 = sand.u32 11, 7
      %p214 = scmp.eq.s32.totalorder %s213, 0
      %p215 = pneg %p214
      // Predicated region
      $region125: #{tpu_custom_call.1} parent=112 // pred_check
        _
      $region126: #{tpu_custom_call.1} parent=112 // pred_check_branch
        %217 = sbr.rel (%p214) target = $region128
      $region127: #{tpu_custom_call.1} parent=112 // pred_region
        %s218 = sand.u32 11, 7
        %s219 = ssub.s32 11, %s218
        %s220 = scalar_lea.vmem %s11, %s219
        %s221 = ssub.s32 11, %s218
        %s222 = scalar_lea.vmem [#allocation5], %s221
        loop: start=0, step=1, limit=1
        $region129: #{tpu_custom_call.1} parent=127 // loop_pre_header
          _
        $region130: #{tpu_custom_call.1} parent=127 // loop_header
          %s224 = sphi 0, %s228
          %p225 = scmp.ge.s32.totalorder %s224, 1
          %s229 = sphi %s11, %s11
          %s230 = sphi [#allocation5], [#allocation5]
        $region131: #{tpu_custom_call.1} parent=127 // loop_header_branch
          %227 = sbr.rel (%p225) target = $region135
        $region132: #{tpu_custom_call.1} parent=127 // loop_body
          %v231 = vld [vmem:[%s229] sm:$0xff]
          %232 = vst [vmem:[%s230] sm:$0xff] %v231
        $region133: #{tpu_custom_call.1} parent=127 // loop_footer
          %s228 = sadd.s32 1, %s224
        $region134: #{tpu_custom_call.1} parent=127 // loop_footer_branch
          %223 = sbr.rel target = $region130
        $region135: #{tpu_custom_call.1} parent=127 // loop_exit
          _
        %s233 = sshll.u32 1, %s218
        %s234 = ssub.s32 %s233, 1
        loop: start=0, step=1, limit=1
        $region136: #{tpu_custom_call.1} parent=127 // loop_pre_header
          _
        $region137: #{tpu_custom_call.1} parent=127 // loop_header
          %s236 = sphi 0, %s240
          %p237 = scmp.ge.s32.totalorder %s236, 1
          %s241 = sphi %s220, %s220
          %s242 = sphi %s222, %s222
        $region138: #{tpu_custom_call.1} parent=127 // loop_header_branch
          %239 = sbr.rel (%p237) target = $region142
        $region139: #{tpu_custom_call.1} parent=127 // loop_body
          %v243 = vld [vmem:[%s241] sm:%s234]
          %244 = vst [vmem:[%s242] sm:%s234] %v243
        $region140: #{tpu_custom_call.1} parent=127 // loop_footer
          %s240 = sadd.s32 1, %s236
        $region141: #{tpu_custom_call.1} parent=127 // loop_footer_branch
          %235 = sbr.rel target = $region137
        $region142: #{tpu_custom_call.1} parent=127 // loop_exit
          _
      $region128: #{tpu_custom_call.1} parent=112 // pred_fallthru
        _
    $region113: #{tpu_custom_call.1} parent=1 // pred_fallthru
      _
    // Predicated region
    $region114: #{tpu_custom_call.1} parent=1 // pred_check
      %p198 = pneg %p194
    $region115: #{tpu_custom_call.1} parent=1 // pred_check_branch
      %200 = sbr.rel (%p198) target = $region117
    $region116: #{tpu_custom_call.1} parent=1 // pred_region
      %s201 = sshll.u32 1, 11
      %s202 = ssub.s32 %s201, 1
      loop: start=0, step=1, limit=1
      $region118: #{tpu_custom_call.1} parent=116 // loop_pre_header
        _
      $region119: #{tpu_custom_call.1} parent=116 // loop_header
        %s204 = sphi 0, %s208
        %p205 = scmp.ge.s32.totalorder %s204, 1
        %s209 = sphi %s11, %s11
        %s210 = sphi [#allocation5], [#allocation5]
      $region120: #{tpu_custom_call.1} parent=116 // loop_header_branch
        %207 = sbr.rel (%p205) target = $region124
      $region121: #{tpu_custom_call.1} parent=116 // loop_body
        %v211 = vld [vmem:[%s209] sm:%s202]
        %212 = vst [vmem:[%s210] sm:%s202] %v211
      $region122: #{tpu_custom_call.1} parent=116 // loop_footer
        %s208 = sadd.s32 1, %s204
      $region123: #{tpu_custom_call.1} parent=116 // loop_footer_branch
        %203 = sbr.rel target = $region119
      $region124: #{tpu_custom_call.1} parent=116 // loop_exit
        _
    $region117: #{tpu_custom_call.1} parent=1 // pred_fallthru
      _
    // Predicated region
    $region143: #{tpu_custom_call.1} parent=1 // pred_check
      _
    $region144: #{tpu_custom_call.1} parent=1 // pred_check_branch
      %247 = sbr.rel (0) target = $region146
    $region145: #{tpu_custom_call.1} parent=1 // pred_region
      %248 = vsyncadd %s192, 176
    $region146: #{tpu_custom_call.1} parent=1 // pred_fallthru
      _
    %s249 = scalar_lea.sflag [#allocation11], 3
    %p251 = scmp.lt.u32.totalorder 1, 8
    %p252 = pneg %p251
    // Predicated region
    $region147: #{tpu_custom_call.1} parent=1 // pred_check
      _
    $region148: #{tpu_custom_call.1} parent=1 // pred_check_branch
      %254 = sbr.rel (%p251) target = $region150
    $region149: #{tpu_custom_call.1} parent=1 // pred_region
      %s270 = sand.u32 1, 7
      %p271 = scmp.eq.s32.totalorder %s270, 0
      %p272 = pneg %p271
      // Predicated region
      $region162: #{tpu_custom_call.1} parent=149 // pred_check
        _
      $region163: #{tpu_custom_call.1} parent=149 // pred_check_branch
        %274 = sbr.rel (%p271) target = $region165
      $region164: #{tpu_custom_call.1} parent=149 // pred_region
        %s275 = sand.u32 1, 7
        %s276 = ssub.s32 1, %s275
        %s277 = scalar_lea.vmem %s12, %s276
        %s278 = ssub.s32 1, %s275
        %s279 = scalar_lea.vmem [#allocation6], %s278
        %s280 = sshll.u32 1, %s275
        %s281 = ssub.s32 %s280, 1
        loop: start=0, step=1, limit=1
        $region166: #{tpu_custom_call.1} parent=164 // loop_pre_header
          _
        $region167: #{tpu_custom_call.1} parent=164 // loop_header
          %s283 = sphi 0, %s287
          %p284 = scmp.ge.s32.totalorder %s283, 1
          %s288 = sphi %s277, %s277
          %s289 = sphi %s279, %s279
        $region168: #{tpu_custom_call.1} parent=164 // loop_header_branch
          %286 = sbr.rel (%p284) target = $region172
        $region169: #{tpu_custom_call.1} parent=164 // loop_body
          %v290 = vld [vmem:[%s288] sm:%s281]
          %291 = vst [vmem:[%s289] sm:%s281] %v290
        $region170: #{tpu_custom_call.1} parent=164 // loop_footer
          %s287 = sadd.s32 1, %s283
        $region171: #{tpu_custom_call.1} parent=164 // loop_footer_branch
          %282 = sbr.rel target = $region167
        $region172: #{tpu_custom_call.1} parent=164 // loop_exit
          _
      $region165: #{tpu_custom_call.1} parent=149 // pred_fallthru
        _
    $region150: #{tpu_custom_call.1} parent=1 // pred_fallthru
      _
    // Predicated region
    $region151: #{tpu_custom_call.1} parent=1 // pred_check
      %p255 = pneg %p251
    $region152: #{tpu_custom_call.1} parent=1 // pred_check_branch
      %257 = sbr.rel (%p255) target = $region154
    $region153: #{tpu_custom_call.1} parent=1 // pred_region
      %s258 = sshll.u32 1, 1
      %s259 = ssub.s32 %s258, 1
      loop: start=0, step=1, limit=1
      $region155: #{tpu_custom_call.1} parent=153 // loop_pre_header
        _
      $region156: #{tpu_custom_call.1} parent=153 // loop_header
        %s261 = sphi 0, %s265
        %p262 = scmp.ge.s32.totalorder %s261, 1
        %s266 = sphi %s12, %s12
        %s267 = sphi [#allocation6], [#allocation6]
      $region157: #{tpu_custom_call.1} parent=153 // loop_header_branch
        %264 = sbr.rel (%p262) target = $region161
      $region158: #{tpu_custom_call.1} parent=153 // loop_body
        %v268 = vld [vmem:[%s266] sm:%s259]
        %269 = vst [vmem:[%s267] sm:%s259] %v268
      $region159: #{tpu_custom_call.1} parent=153 // loop_footer
        %s265 = sadd.s32 1, %s261
      $region160: #{tpu_custom_call.1} parent=153 // loop_footer_branch
        %260 = sbr.rel target = $region156
      $region161: #{tpu_custom_call.1} parent=153 // loop_exit
        _
    $region154: #{tpu_custom_call.1} parent=1 // pred_fallthru
      _
    // Predicated region
    $region173: #{tpu_custom_call.1} parent=1 // pred_check
      _
    $region174: #{tpu_custom_call.1} parent=1 // pred_check_branch
      %294 = sbr.rel (0) target = $region176
    $region175: #{tpu_custom_call.1} parent=1 // pred_region
      %295 = vsyncadd %s249, 16
    $region176: #{tpu_custom_call.1} parent=1 // pred_fallthru
      _
    %s296 = scalar_lea.sflag [#allocation11], 4
    // Predicated region
    $region177: #{tpu_custom_call.1} parent=1 // pred_check
      _
    $region178: #{tpu_custom_call.1} parent=1 // pred_check_branch
      %298 = sbr.rel target = $region180
    $region179: #{tpu_custom_call.1} parent=1 // pred_region
      %299 = sst [smem:[#allocation24]] [#allocation23]
      %300 = sst [smem:[#allocation25]] [#allocation22]
    $region180: #{tpu_custom_call.1} parent=1 // pred_fallthru
      _
    %302 = shalt.err (0)
    %s304 = sshll.u32 [#allocation7], 4
    %s305 = int_to_ptr.vmem [resolvable:$true] %s304
    %307 = dma.hbm_to_vmem [thread:$0]  %s13, 4096, %s305, %s296
    %s308 = scalar_lea.sflag [#allocation11], 5
    %p310 = scmp.lt.u32.totalorder 1, 8
    %p311 = pneg %p310
    // Predicated region
    $region181: #{tpu_custom_call.1} parent=1 // pred_check
      _
    $region182: #{tpu_custom_call.1} parent=1 // pred_check_branch
      %313 = sbr.rel (%p310) target = $region184
    $region183: #{tpu_custom_call.1} parent=1 // pred_region
      %s329 = sand.u32 1, 7
      %p330 = scmp.eq.s32.totalorder %s329, 0
      %p331 = pneg %p330
      // Predicated region
      $region196: #{tpu_custom_call.1} parent=183 // pred_check
        _
      $region197: #{tpu_custom_call.1} parent=183 // pred_check_branch
        %333 = sbr.rel (%p330) target = $region199
      $region198: #{tpu_custom_call.1} parent=183 // pred_region
        %s334 = sand.u32 1, 7
        %s335 = ssub.s32 1, %s334
        %s336 = scalar_lea.vmem %s14, %s335
        %s337 = ssub.s32 1, %s334
        %s338 = scalar_lea.vmem [#allocation8], %s337
        %s339 = sshll.u32 1, %s334
        %s340 = ssub.s32 %s339, 1
        loop: start=0, step=1, limit=1
        $region200: #{tpu_custom_call.1} parent=198 // loop_pre_header
          _
        $region201: #{tpu_custom_call.1} parent=198 // loop_header
          %s342 = sphi 0, %s346
          %p343 = scmp.ge.s32.totalorder %s342, 1
          %s347 = sphi %s336, %s336
          %s348 = sphi %s338, %s338
        $region202: #{tpu_custom_call.1} parent=198 // loop_header_branch
          %345 = sbr.rel (%p343) target = $region206
        $region203: #{tpu_custom_call.1} parent=198 // loop_body
          %v349 = vld [vmem:[%s347] sm:%s340]
          %350 = vst [vmem:[%s348] sm:%s340] %v349
        $region204: #{tpu_custom_call.1} parent=198 // loop_footer
          %s346 = sadd.s32 1, %s342
        $region205: #{tpu_custom_call.1} parent=198 // loop_footer_branch
          %341 = sbr.rel target = $region201
        $region206: #{tpu_custom_call.1} parent=198 // loop_exit
          _
      $region199: #{tpu_custom_call.1} parent=183 // pred_fallthru
        _
    $region184: #{tpu_custom_call.1} parent=1 // pred_fallthru
      _
    // Predicated region
    $region185: #{tpu_custom_call.1} parent=1 // pred_check
      %p314 = pneg %p310
    $region186: #{tpu_custom_call.1} parent=1 // pred_check_branch
      %316 = sbr.rel (%p314) target = $region188
    $region187: #{tpu_custom_call.1} parent=1 // pred_region
      %s317 = sshll.u32 1, 1
      %s318 = ssub.s32 %s317, 1
      loop: start=0, step=1, limit=1
      $region189: #{tpu_custom_call.1} parent=187 // loop_pre_header
        _
      $region190: #{tpu_custom_call.1} parent=187 // loop_header
        %s320 = sphi 0, %s324
        %p321 = scmp.ge.s32.totalorder %s320, 1
        %s325 = sphi %s14, %s14
        %s326 = sphi [#allocation8], [#allocation8]
      $region191: #{tpu_custom_call.1} parent=187 // loop_header_branch
        %323 = sbr.rel (%p321) target = $region195
      $region192: #{tpu_custom_call.1} parent=187 // loop_body
        %v327 = vld [vmem:[%s325] sm:%s318]
        %328 = vst [vmem:[%s326] sm:%s318] %v327
      $region193: #{tpu_custom_call.1} parent=187 // loop_footer
        %s324 = sadd.s32 1, %s320
      $region194: #{tpu_custom_call.1} parent=187 // loop_footer_branch
        %319 = sbr.rel target = $region190
      $region195: #{tpu_custom_call.1} parent=187 // loop_exit
        _
    $region188: #{tpu_custom_call.1} parent=1 // pred_fallthru
      _
    // Predicated region
    $region207: #{tpu_custom_call.1} parent=1 // pred_check
      _
    $region208: #{tpu_custom_call.1} parent=1 // pred_check_branch
      %353 = sbr.rel (0) target = $region210
    $region209: #{tpu_custom_call.1} parent=1 // pred_region
      %354 = vsyncadd %s308, 16
    $region210: #{tpu_custom_call.1} parent=1 // pred_fallthru
      _
    %s355 = scalar_lea.sflag [#allocation11], 6
    %p357 = scmp.lt.u32.totalorder 128, 8
    %p358 = pneg %p357
    // Predicated region
    $region211: #{tpu_custom_call.1} parent=1 // pred_check
      _
    $region212: #{tpu_custom_call.1} parent=1 // pred_check_branch
      %360 = sbr.rel (%p357) target = $region214
    $region213: #{tpu_custom_call.1} parent=1 // pred_region
      %s376 = sand.u32 128, 7
      %p377 = scmp.eq.s32.totalorder %s376, 0
      // Predicated region
      $region226: #{tpu_custom_call.1} parent=213 // pred_check
        %p378 = pneg %p377
      $region227: #{tpu_custom_call.1} parent=213 // pred_check_branch
        %380 = sbr.rel (%p378) target = $region229
      $region228: #{tpu_custom_call.1} parent=213 // pred_region
        loop: start=0, step=1, limit=1
        $region230: #{tpu_custom_call.1} parent=228 // loop_pre_header
          _
        $region231: #{tpu_custom_call.1} parent=228 // loop_header
          %s382 = sphi 0, %s386
          %p383 = scmp.ge.s32.totalorder %s382, 1
          %s387 = sphi %s15, %s15
          %s388 = sphi [#allocation9], [#allocation9]
        $region232: #{tpu_custom_call.1} parent=228 // loop_header_branch
          %385 = sbr.rel (%p383) target = $region236
        $region233: #{tpu_custom_call.1} parent=228 // loop_body
          %v389 = vld [vmem:[%s387] sm:$0xff]
          %390 = vst [vmem:[%s388] sm:$0xff] %v389
          %v391 = vld [vmem:[%s387 + $0x8] sm:$0xff]
          %392 = vst [vmem:[%s388 + $0x8] sm:$0xff] %v391
          %v393 = vld [vmem:[%s387 + $0x10] sm:$0xff]
          %394 = vst [vmem:[%s388 + $0x10] sm:$0xff] %v393
          %v395 = vld [vmem:[%s387 + $0x18] sm:$0xff]
          %396 = vst [vmem:[%s388 + $0x18] sm:$0xff] %v395
          %v397 = vld [vmem:[%s387 + $0x20] sm:$0xff]
          %398 = vst [vmem:[%s388 + $0x20] sm:$0xff] %v397
          %v399 = vld [vmem:[%s387 + $0x28] sm:$0xff]
          %400 = vst [vmem:[%s388 + $0x28] sm:$0xff] %v399
          %v401 = vld [vmem:[%s387 + $0x30] sm:$0xff]
          %402 = vst [vmem:[%s388 + $0x30] sm:$0xff] %v401
          %v403 = vld [vmem:[%s387 + $0x38] sm:$0xff]
          %404 = vst [vmem:[%s388 + $0x38] sm:$0xff] %v403
          %v405 = vld [vmem:[%s387 + $0x40] sm:$0xff]
          %406 = vst [vmem:[%s388 + $0x40] sm:$0xff] %v405
          %v407 = vld [vmem:[%s387 + $0x48] sm:$0xff]
          %408 = vst [vmem:[%s388 + $0x48] sm:$0xff] %v407
          %v409 = vld [vmem:[%s387 + $0x50] sm:$0xff]
          %410 = vst [vmem:[%s388 + $0x50] sm:$0xff] %v409
          %v411 = vld [vmem:[%s387 + $0x58] sm:$0xff]
          %412 = vst [vmem:[%s388 + $0x58] sm:$0xff] %v411
          %v413 = vld [vmem:[%s387 + $0x60] sm:$0xff]
          %414 = vst [vmem:[%s388 + $0x60] sm:$0xff] %v413
          %v415 = vld [vmem:[%s387 + $0x68] sm:$0xff]
          %416 = vst [vmem:[%s388 + $0x68] sm:$0xff] %v415
          %v417 = vld [vmem:[%s387 + $0x70] sm:$0xff]
          %418 = vst [vmem:[%s388 + $0x70] sm:$0xff] %v417
          %v419 = vld [vmem:[%s387 + $0x78] sm:$0xff]
          %420 = vst [vmem:[%s388 + $0x78] sm:$0xff] %v419
        $region234: #{tpu_custom_call.1} parent=228 // loop_footer
          %s386 = sadd.s32 1, %s382
        $region235: #{tpu_custom_call.1} parent=228 // loop_footer_branch
          %381 = sbr.rel target = $region231
        $region236: #{tpu_custom_call.1} parent=228 // loop_exit
          _
      $region229: #{tpu_custom_call.1} parent=213 // pred_fallthru
        _
      %p421 = pneg %p377
      // Predicated region
      $region237: #{tpu_custom_call.1} parent=213 // pred_check
        _
      $region238: #{tpu_custom_call.1} parent=213 // pred_check_branch
        %423 = sbr.rel (%p377) target = $region240
      $region239: #{tpu_custom_call.1} parent=213 // pred_region
        %s424 = sand.u32 128, 7
      $region240: #{tpu_custom_call.1} parent=213 // pred_fallthru
        _
    $region214: #{tpu_custom_call.1} parent=1 // pred_fallthru
      _
    // Predicated region
    $region215: #{tpu_custom_call.1} parent=1 // pred_check
      %p361 = pneg %p357
    $region216: #{tpu_custom_call.1} parent=1 // pred_check_branch
      %363 = sbr.rel (%p361) target = $region218
    $region217: #{tpu_custom_call.1} parent=1 // pred_region
      %s364 = sshll.u32 1, 128
      %s365 = ssub.s32 %s364, 1
      loop: start=0, step=1, limit=1
      $region219: #{tpu_custom_call.1} parent=217 // loop_pre_header
        _
      $region220: #{tpu_custom_call.1} parent=217 // loop_header
        %s367 = sphi 0, %s371
        %p368 = scmp.ge.s32.totalorder %s367, 1
        %s372 = sphi %s15, %s15
        %s373 = sphi [#allocation9], [#allocation9]
      $region221: #{tpu_custom_call.1} parent=217 // loop_header_branch
        %370 = sbr.rel (%p368) target = $region225
      $region222: #{tpu_custom_call.1} parent=217 // loop_body
        %v374 = vld [vmem:[%s372] sm:%s365]
        %375 = vst [vmem:[%s373] sm:%s365] %v374
      $region223: #{tpu_custom_call.1} parent=217 // loop_footer
        %s371 = sadd.s32 1, %s367
      $region224: #{tpu_custom_call.1} parent=217 // loop_footer_branch
        %366 = sbr.rel target = $region220
      $region225: #{tpu_custom_call.1} parent=217 // loop_exit
        _
    $region218: #{tpu_custom_call.1} parent=1 // pred_fallthru
      _
    // Predicated region
    $region241: #{tpu_custom_call.1} parent=1 // pred_check
      _
    $region242: #{tpu_custom_call.1} parent=1 // pred_check_branch
      %427 = sbr.rel (0) target = $region244
    $region243: #{tpu_custom_call.1} parent=1 // pred_region
      %428 = vsyncadd %s355, 2048
    $region244: #{tpu_custom_call.1} parent=1 // pred_fallthru
      _
    %s429 = scalar_lea.sflag [#allocation11], 7
    %p431 = scmp.lt.u32.totalorder 1, 8
    %p432 = pneg %p431
    // Predicated region
    $region245: #{tpu_custom_call.1} parent=1 // pred_check
      _
    $region246: #{tpu_custom_call.1} parent=1 // pred_check_branch
      %434 = sbr.rel (%p431) target = $region248
    $region247: #{tpu_custom_call.1} parent=1 // pred_region
      %s450 = sand.u32 1, 7
      %p451 = scmp.eq.s32.totalorder %s450, 0
      %p452 = pneg %p451
      // Predicated region
      $region260: #{tpu_custom_call.1} parent=247 // pred_check
        _
      $region261: #{tpu_custom_call.1} parent=247 // pred_check_branch
        %454 = sbr.rel (%p451) target = $region263
      $region262: #{tpu_custom_call.1} parent=247 // pred_region
        %s455 = sand.u32 1, 7
        %s456 = ssub.s32 1, %s455
        %s457 = scalar_lea.vmem %s16, %s456
        %s458 = ssub.s32 1, %s455
        %s459 = scalar_lea.vmem [#allocation10], %s458
        %s460 = sshll.u32 1, %s455
        %s461 = ssub.s32 %s460, 1
        loop: start=0, step=1, limit=1
        $region264: #{tpu_custom_call.1} parent=262 // loop_pre_header
          _
        $region265: #{tpu_custom_call.1} parent=262 // loop_header
          %s463 = sphi 0, %s467
          %p464 = scmp.ge.s32.totalorder %s463, 1
          %s468 = sphi %s457, %s457
          %s469 = sphi %s459, %s459
        $region266: #{tpu_custom_call.1} parent=262 // loop_header_branch
          %466 = sbr.rel (%p464) target = $region270
        $region267: #{tpu_custom_call.1} parent=262 // loop_body
          %v470 = vld [vmem:[%s468] sm:%s461]
          %471 = vst [vmem:[%s469] sm:%s461] %v470
        $region268: #{tpu_custom_call.1} parent=262 // loop_footer
          %s467 = sadd.s32 1, %s463
        $region269: #{tpu_custom_call.1} parent=262 // loop_footer_branch
          %462 = sbr.rel target = $region265
        $region270: #{tpu_custom_call.1} parent=262 // loop_exit
          _
      $region263: #{tpu_custom_call.1} parent=247 // pred_fallthru
        _
    $region248: #{tpu_custom_call.1} parent=1 // pred_fallthru
      _
    // Predicated region
    $region249: #{tpu_custom_call.1} parent=1 // pred_check
      %p435 = pneg %p431
    $region250: #{tpu_custom_call.1} parent=1 // pred_check_branch
      %437 = sbr.rel (%p435) target = $region252
    $region251: #{tpu_custom_call.1} parent=1 // pred_region
      %s438 = sshll.u32 1, 1
      %s439 = ssub.s32 %s438, 1
      loop: start=0, step=1, limit=1
      $region253: #{tpu_custom_call.1} parent=251 // loop_pre_header
        _
      $region254: #{tpu_custom_call.1} parent=251 // loop_header
        %s441 = sphi 0, %s445
        %p442 = scmp.ge.s32.totalorder %s441, 1
        %s446 = sphi %s16, %s16
        %s447 = sphi [#allocation10], [#allocation10]
      $region255: #{tpu_custom_call.1} parent=251 // loop_header_branch
        %444 = sbr.rel (%p442) target = $region259
      $region256: #{tpu_custom_call.1} parent=251 // loop_body
        %v448 = vld [vmem:[%s446] sm:%s439]
        %449 = vst [vmem:[%s447] sm:%s439] %v448
      $region257: #{tpu_custom_call.1} parent=251 // loop_footer
        %s445 = sadd.s32 1, %s441
      $region258: #{tpu_custom_call.1} parent=251 // loop_footer_branch
        %440 = sbr.rel target = $region254
      $region259: #{tpu_custom_call.1} parent=251 // loop_exit
        _
    $region252: #{tpu_custom_call.1} parent=1 // pred_fallthru
      _
    // Predicated region
    $region271: #{tpu_custom_call.1} parent=1 // pred_check
      _
    $region272: #{tpu_custom_call.1} parent=1 // pred_check_branch
      %474 = sbr.rel (0) target = $region274
    $region273: #{tpu_custom_call.1} parent=1 // pred_region
      %475 = vsyncadd %s429, 16
    $region274: #{tpu_custom_call.1} parent=1 // pred_fallthru
      _
    %v476 = vld [vmem:[%s2] sm:$0xff]
    %vm477 = vcmp.gt.s32.totalorder %v476, 1
    %v478 = vsel %vm477, %v476, 1
    %v479 = vsub.s32 %v478, 1
    %vm480 = vcmp.lt.s32.totalorder %v479, 7
    %v481 = vsel %vm480, %v479, 7
    %482 = vset.pattern.permute.xlu0 0
    %483 = vperm.xlu0 %482, %v481
    %v484 = vpop.permute.xlu0 %483
    %vm485 = vcmp.eq.s32.totalorder %v484, 0
    %vm486 = vcmp.eq.s32.totalorder %v484, 1
    %vm487 = vcmp.eq.s32.totalorder %v484, 2
    %vm488 = vcmp.eq.s32.totalorder %v484, 3
    %vm489 = vcmp.eq.s32.totalorder %v484, 4
    %vm490 = vcmp.eq.s32.totalorder %v484, 5
    %vm491 = vcmp.eq.s32.totalorder %v484, 6
    %vm492 = vcmp.eq.s32.totalorder %v484, 7
    %v493 = vld [vmem:[%s1] sm:$0xff]
    %v494 = vld [vmem:[%s1 + $0x8] sm:$0xff]
    %v495 = vld [vmem:[%s1 + $0x10] sm:$0xff]
    %v496 = vld [vmem:[%s1 + $0x18] sm:$0xff]
    %v497 = vld [vmem:[%s1 + $0x20] sm:$0xff]
    %v498 = vld [vmem:[%s1 + $0x28] sm:$0xff]
    %v499 = vld [vmem:[%s1 + $0x30] sm:$0xff]
    %v500 = vld [vmem:[%s1 + $0x38] sm:$0xff]
    %v501 = vld [vmem:[%s3] sm:$0xff]
    %v502 = vld [vmem:[%s3 + $0x8] sm:$0x7]
    %v503 = vld [vmem:[%s4] sm:$0x1]
    %v505 = vlaneseq
    %v506 = vshrl.u32 %v505, 7
    %v507 = vsub.s32 0, %v506
    %v508 = vrot.slane %v503, %v507
    %vm510 = vcmask 89088
    %v512 = vsel %vm510, %v493, 0
    %v515 = vsel %vm510, %v494, 0
    %v518 = vsel %vm510, %v495, 0
    %v521 = vsel %vm510, %v496, 0
    %v524 = vsel %vm510, %v497, 0
    %v527 = vsel %vm510, %v498, 0
    %v530 = vsel %vm510, %v499, 0
    %v533 = vsel %vm510, %v500, 0
    %vm535 = vcmask 1042432
    %v537 = vsel %vm535, %v502, 0
    %539 = vmatprep.subr.mxu0 0.0
    %540 = vmatpush1.msra.mxu0 0.0
    %541 = vmatprep.subr.mxu0 0.0
    %542 = vmatpush1.msra.mxu0 0.0
    %543 = vmatprep.subr.mxu0 0.0
    %544 = vmatpush1.msra.mxu0 0.0
    %545 = vmatprep.subr.mxu0 0.0
    %546 = vmatpush1.msra.mxu0 0.0
    %547 = vmatprep.subr.mxu0 0.0
    %548 = vmatpush1.msra.mxu0 0.0
    %549 = vmatprep.subr.mxu0 0.0
    %550 = vmatpush1.msra.mxu0 0.0
    %551 = vmatprep.subr.mxu0 0.0
    %552 = vmatpush1.msra.mxu0 0.0
    %553 = vmatprep.subr.mxu0 0.0
    %554 = vmatpush1.msra.mxu0 0.0
    %555 = vmatprep.subr.mxu0 0.0
    %556 = vmatpush1.msra.mxu0 0.0
    %557 = vmatprep.subr.mxu0 0.0
    %558 = vmatpush1.msra.mxu0 0.0
    %559 = vmatprep.subr.mxu0 0.0
    %560 = vmatpush1.msra.mxu0 0.0
    %561 = vmatprep.subr.mxu0 0.0
    %562 = vmatpush1.msra.mxu0 0.0
    %563 = vmatprep.subr.mxu0 0.0
    %564 = vmatpush1.msra.mxu0 0.0
    %565 = vmatprep.subr.mxu0 0.0
    %566 = vmatpush1.msra.mxu0 0.0
    %567 = vmatprep.subr.mxu0 0.0
    %568 = vmatpush1.msra.mxu0 %v537
    %569 = vmatprep.subr.mxu0 0.0
    %570 = vmatpush1.msra.mxu0 %v501
    %571 = vmatprep.subr.mxu0 0.0
    %572 = vmatpush2.msra.mxu0 0.0
    %573 = vmatprep.subr.mxu0 0.0
    %574 = vmatpush2.msra.mxu0 0.0
    %575 = vmatprep.subr.mxu0 0.0
    %576 = vmatpush2.msra.mxu0 0.0
    %577 = vmatprep.subr.mxu0 0.0
    %578 = vmatpush2.msra.mxu0 0.0
    %579 = vmatprep.subr.mxu0 0.0
    %580 = vmatpush2.msra.mxu0 0.0
    %581 = vmatprep.subr.mxu0 0.0
    %582 = vmatpush2.msra.mxu0 0.0
    %583 = vmatprep.subr.mxu0 0.0
    %584 = vmatpush2.msra.mxu0 0.0
    %585 = vmatprep.subr.mxu0 0.0
    %586 = vmatpush2.msra.mxu0 0.0
    %587 = vmatprep.subr.mxu0 0.0
    %588 = vmatpush2.msra.mxu0 0.0
    %589 = vmatprep.subr.mxu0 0.0
    %590 = vmatpush2.msra.mxu0 0.0
    %591 = vmatprep.subr.mxu0 0.0
    %592 = vmatpush2.msra.mxu0 0.0
    %593 = vmatprep.subr.mxu0 0.0
    %594 = vmatpush2.msra.mxu0 0.0
    %595 = vmatprep.subr.mxu0 0.0
    %596 = vmatpush2.msra.mxu0 0.0
    %597 = vmatprep.subr.mxu0 0.0
    %598 = vmatpush2.msra.mxu0 0.0
    %599 = vmatprep.subr.mxu0 0.0
    %600 = vmatpush2.msra.mxu0 0.0
    %601 = vmatprep.subr.mxu0 0.0
    %602 = vmatpush2.msra.mxu0 0.0
    %603 = vmatprep.mubr.f32.mxu0 0.0
    %604 = vmatmul.mubr.f32.gmra.mxu0 %v512
    %v605 = vpop.f32.mrf.mxu0
    %v606 = vadd.f32 %v508, %v605
    %v607 = vpop.f32.mrf.mxu0
    %608 = vmatprep.mubr.f32.mxu0 0.0
    %609 = vmatmul.mubr.f32.gmra.mxu0 %v515
    %v610 = vpop.f32.mrf.mxu0
    %v611 = vadd.f32 %v508, %v610
    %v612 = vpop.f32.mrf.mxu0
    %613 = vmatprep.mubr.f32.mxu0 0.0
    %614 = vmatmul.mubr.f32.gmra.mxu0 %v518
    %v615 = vpop.f32.mrf.mxu0
    %v616 = vadd.f32 %v508, %v615
    %v617 = vpop.f32.mrf.mxu0
    %618 = vmatprep.mubr.f32.mxu0 0.0
    %619 = vmatmul.mubr.f32.gmra.mxu0 %v521
    %v620 = vpop.f32.mrf.mxu0
    %v621 = vadd.f32 %v508, %v620
    %v622 = vpop.f32.mrf.mxu0
    %623 = vmatprep.mubr.f32.mxu0 0.0
    %624 = vmatmul.mubr.f32.gmra.mxu0 %v524
    %v625 = vpop.f32.mrf.mxu0
    %v626 = vadd.f32 %v508, %v625
    %v627 = vpop.f32.mrf.mxu0
    %628 = vmatprep.mubr.f32.mxu0 0.0
    %629 = vmatmul.mubr.f32.gmra.mxu0 %v527
    %v630 = vpop.f32.mrf.mxu0
    %v631 = vadd.f32 %v508, %v630
    %v632 = vpop.f32.mrf.mxu0
    %633 = vmatprep.mubr.f32.mxu0 0.0
    %634 = vmatmul.mubr.f32.gmra.mxu0 %v530
    %v635 = vpop.f32.mrf.mxu0
    %v636 = vadd.f32 %v508, %v635
    %v637 = vpop.f32.mrf.mxu0
    %638 = vmatprep.mubr.f32.mxu0 0.0
    %639 = vmatmul.mubr.f32.gmra.mxu0 %v533
    %v640 = vpop.f32.mrf.mxu0
    %v641 = vadd.f32 %v508, %v640
    %v642 = vpop.f32.mrf.mxu0
    %643 = vdwg.mxu0
    %v644 = vmax.f32 %v606, 0.0
    %v645 = vmax.f32 %v611, 0.0
    %v646 = vmax.f32 %v616, 0.0
    %v647 = vmax.f32 %v621, 0.0
    %v648 = vmax.f32 %v626, 0.0
    %v649 = vmax.f32 %v631, 0.0
    %v650 = vmax.f32 %v636, 0.0
    %v651 = vmax.f32 %v641, 0.0
    %v652 = vld [vmem:[#allocation12] sm:$0xff]
    %v653 = vld [vmem:[#allocation12 + $0x8] sm:$0xff]
    %v654 = vld [vmem:[#allocation12 + $0x10] sm:$0xff]
    %v655 = vld [vmem:[#allocation12 + $0x18] sm:$0xff]
    %v656 = vld [vmem:[#allocation12 + $0x20] sm:$0xff]
    %v657 = vld [vmem:[#allocation12 + $0x28] sm:$0xff]
    %v658 = vld [vmem:[#allocation12 + $0x30] sm:$0xff]
    %v659 = vld [vmem:[#allocation12 + $0x38] sm:$0xff]
    %v660 = vld [vmem:[#allocation12 + $0x40] sm:$0xff]
    %v661 = vld [vmem:[#allocation12 + $0x48] sm:$0xff]
    %v662 = vld [vmem:[#allocation12 + $0x50] sm:$0xff]
    %v663 = vld [vmem:[#allocation12 + $0x58] sm:$0xff]
    %v664 = vld [vmem:[#allocation12 + $0x60] sm:$0xff]
    %v665 = vld [vmem:[#allocation12 + $0x68] sm:$0xff]
    %v666 = vld [vmem:[#allocation12 + $0x70] sm:$0xff]
    %v667 = vld [vmem:[#allocation12 + $0x78] sm:$0xff]
    %v668 = vld [vmem:[#allocation12 + $0x80] sm:$0xff]
    %v669 = vld [vmem:[#allocation12 + $0x88] sm:$0xff]
    %v670 = vld [vmem:[#allocation12 + $0x90] sm:$0xff]
    %v671 = vld [vmem:[#allocation12 + $0x98] sm:$0xff]
    %v672 = vld [vmem:[#allocation12 + $0xa0] sm:$0xff]
    %v673 = vld [vmem:[#allocation12 + $0xa8] sm:$0xff]
    %v674 = vld [vmem:[#allocation12 + $0xb0] sm:$0xff]
    %v675 = vld [vmem:[#allocation12 + $0xb8] sm:$0xff]
    %v676 = vld [vmem:[#allocation12 + $0xc0] sm:$0xff]
    %v677 = vld [vmem:[#allocation12 + $0xc8] sm:$0xff]
    %v678 = vld [vmem:[#allocation12 + $0xd0] sm:$0xff]
    %v679 = vld [vmem:[#allocation12 + $0xd8] sm:$0xff]
    %v680 = vld [vmem:[#allocation12 + $0xe0] sm:$0xff]
    %v681 = vld [vmem:[#allocation12 + $0xe8] sm:$0xff]
    %v682 = vld [vmem:[#allocation12 + $0xf0] sm:$0xff]
    %v683 = vld [vmem:[#allocation12 + $0xf8] sm:$0xff]
    %v684 = vld [vmem:[#allocation12 + $0x100] sm:$0xff]
    %v685 = vld [vmem:[#allocation12 + $0x108] sm:$0xff]
    %v686 = vld [vmem:[#allocation12 + $0x110] sm:$0xff]
    %v687 = vld [vmem:[#allocation12 + $0x118] sm:$0xff]
    %v688 = vld [vmem:[#allocation12 + $0x120] sm:$0xff]
    %v689 = vld [vmem:[#allocation12 + $0x128] sm:$0xff]
    %v690 = vld [vmem:[#allocation12 + $0x130] sm:$0xff]
    %v691 = vld [vmem:[#allocation12 + $0x138] sm:$0xff]
    %v692 = vld [vmem:[#allocation12 + $0x140] sm:$0xff]
    %v693 = vld [vmem:[#allocation12 + $0x148] sm:$0xff]
    %v694 = vld [vmem:[#allocation12 + $0x150] sm:$0xff]
    %v695 = vld [vmem:[#allocation12 + $0x158] sm:$0xff]
    %v696 = vld [vmem:[#allocation12 + $0x160] sm:$0xff]
    %v697 = vld [vmem:[#allocation12 + $0x168] sm:$0xff]
    %v698 = vld [vmem:[#allocation12 + $0x170] sm:$0xff]
    %v699 = vld [vmem:[#allocation12 + $0x178] sm:$0xff]
    %v700 = vld [vmem:[#allocation12 + $0x180] sm:$0xff]
    %v701 = vld [vmem:[#allocation12 + $0x188] sm:$0xff]
    %v702 = vld [vmem:[#allocation12 + $0x190] sm:$0xff]
    %v703 = vld [vmem:[#allocation12 + $0x198] sm:$0xff]
    %v704 = vld [vmem:[#allocation12 + $0x1a0] sm:$0xff]
    %v705 = vld [vmem:[#allocation12 + $0x1a8] sm:$0xff]
    %v706 = vld [vmem:[#allocation12 + $0x1b0] sm:$0xff]
    %v707 = vld [vmem:[#allocation12 + $0x1b8] sm:$0xff]
    %v708 = vld [vmem:[#allocation12 + $0x1c0] sm:$0xff]
    %v709 = vld [vmem:[#allocation12 + $0x1c8] sm:$0xff]
    %v710 = vld [vmem:[#allocation12 + $0x1d0] sm:$0xff]
    %v711 = vld [vmem:[#allocation12 + $0x1d8] sm:$0xff]
    %v712 = vld [vmem:[#allocation12 + $0x1e0] sm:$0xff]
    %v713 = vld [vmem:[#allocation12 + $0x1e8] sm:$0xff]
    %v714 = vld [vmem:[#allocation12 + $0x1f0] sm:$0xff]
    %v715 = vld [vmem:[#allocation12 + $0x1f8] sm:$0xff]
    %v716 = vld [vmem:[%s7] sm:$0xf]
    %v718 = vlaneseq
    %v719 = vshrl.u32 %v718, 7
    %v720 = vsub.s32 0, %v719
    %v721 = vrot.slane %v716, %v720
    %v722 = vlaneseq
    %v723 = vshrl.u32 %v722, 7
    %v724 = vsub.s32 1, %v723
    %v725 = vrot.slane %v716, %v724
    %v726 = vlaneseq
    %v727 = vshrl.u32 %v726, 7
    %v728 = vsub.s32 2, %v727
    %v729 = vrot.slane %v716, %v728
    %v730 = vlaneseq
    %v731 = vshrl.u32 %v730, 7
    %v732 = vsub.s32 3, %v731
    %v733 = vrot.slane %v716, %v732
    %738 = vmatprep.subr.mxu0 %v713
    %739 = vmatpush1.msra.mxu0 %v712
    %740 = vmatprep.subr.mxu0 %v709
    %741 = vmatpush1.msra.mxu0 %v708
    %742 = vmatprep.subr.mxu0 %v705
    %743 = vmatpush1.msra.mxu0 %v704
    %744 = vmatprep.subr.mxu0 %v701
    %745 = vmatpush1.msra.mxu0 %v700
    %746 = vmatprep.subr.mxu0 %v697
    %747 = vmatpush1.msra.mxu0 %v696
    %748 = vmatprep.subr.mxu0 %v693
    %749 = vmatpush1.msra.mxu0 %v692
    %750 = vmatprep.subr.mxu0 %v689
    %751 = vmatpush1.msra.mxu0 %v688
    %752 = vmatprep.subr.mxu0 %v685
    %753 = vmatpush1.msra.mxu0 %v684
    %754 = vmatprep.subr.mxu0 %v681
    %755 = vmatpush1.msra.mxu0 %v680
    %756 = vmatprep.subr.mxu0 %v677
    %757 = vmatpush1.msra.mxu0 %v676
    %758 = vmatprep.subr.mxu0 %v673
    %759 = vmatpush1.msra.mxu0 %v672
    %760 = vmatprep.subr.mxu0 %v669
    %761 = vmatpush1.msra.mxu0 %v668
    %762 = vmatprep.subr.mxu0 %v665
    %763 = vmatpush1.msra.mxu0 %v664
    %764 = vmatprep.subr.mxu0 %v661
    %765 = vmatpush1.msra.mxu0 %v660
    %766 = vmatprep.subr.mxu0 %v657
    %767 = vmatpush1.msra.mxu0 %v656
    %768 = vmatprep.subr.mxu0 %v653
    %769 = vmatpush1.msra.mxu0 %v652
    %770 = vmatprep.subr.mxu0 0.0
    %771 = vmatpush2.msra.mxu0 0.0
    %772 = vmatprep.subr.mxu0 0.0
    %773 = vmatpush2.msra.mxu0 0.0
    %774 = vmatprep.subr.mxu0 0.0
    %775 = vmatpush2.msra.mxu0 0.0
    %776 = vmatprep.subr.mxu0 0.0
    %777 = vmatpush2.msra.mxu0 0.0
    %778 = vmatprep.subr.mxu0 0.0
    %779 = vmatpush2.msra.mxu0 0.0
    %780 = vmatprep.subr.mxu0 0.0
    %781 = vmatpush2.msra.mxu0 0.0
    %782 = vmatprep.subr.mxu0 0.0
    %783 = vmatpush2.msra.mxu0 0.0
    %784 = vmatprep.subr.mxu0 0.0
    %785 = vmatpush2.msra.mxu0 0.0
    %786 = vmatprep.subr.mxu0 0.0
    %787 = vmatpush2.msra.mxu0 0.0
    %788 = vmatprep.subr.mxu0 0.0
    %789 = vmatpush2.msra.mxu0 0.0
    %790 = vmatprep.subr.mxu0 0.0
    %791 = vmatpush2.msra.mxu0 0.0
    %792 = vmatprep.subr.mxu0 0.0
    %793 = vmatpush2.msra.mxu0 0.0
    %794 = vmatprep.subr.mxu0 0.0
    %795 = vmatpush2.msra.mxu0 0.0
    %796 = vmatprep.subr.mxu0 0.0
    %797 = vmatpush2.msra.mxu0 0.0
    %798 = vmatprep.subr.mxu0 0.0
    %799 = vmatpush2.msra.mxu0 0.0
    %800 = vmatprep.subr.mxu0 0.0
    %801 = vmatpush2.msra.mxu0 0.0
    %802 = vmatprep.mubr.f32.mxu0 0.0
    %803 = vmatmul.mubr.f32.gmra.mxu0 %v644
    %v804 = vpop.f32.mrf.mxu0
    %v805 = vadd.f32 %v721, %v804
    %v806 = vpop.f32.mrf.mxu0
    %v807 = vadd.f32 %v725, %v806
    %808 = vmatprep.mubr.f32.mxu0 0.0
    %809 = vmatmul.mubr.f32.gmra.mxu0 %v645
    %v810 = vpop.f32.mrf.mxu0
    %v811 = vadd.f32 %v721, %v810
    %v812 = vpop.f32.mrf.mxu0
    %v813 = vadd.f32 %v725, %v812
    %814 = vmatprep.mubr.f32.mxu0 0.0
    %815 = vmatmul.mubr.f32.gmra.mxu0 %v646
    %v816 = vpop.f32.mrf.mxu0
    %v817 = vadd.f32 %v721, %v816
    %v818 = vpop.f32.mrf.mxu0
    %v819 = vadd.f32 %v725, %v818
    %820 = vmatprep.mubr.f32.mxu0 0.0
    %821 = vmatmul.mubr.f32.gmra.mxu0 %v647
    %v822 = vpop.f32.mrf.mxu0
    %v823 = vadd.f32 %v721, %v822
    %v824 = vpop.f32.mrf.mxu0
    %v825 = vadd.f32 %v725, %v824
    %826 = vmatprep.mubr.f32.mxu0 0.0
    %827 = vmatmul.mubr.f32.gmra.mxu0 %v648
    %v828 = vpop.f32.mrf.mxu0
    %v829 = vadd.f32 %v721, %v828
    %v830 = vpop.f32.mrf.mxu0
    %v831 = vadd.f32 %v725, %v830
    %832 = vmatprep.mubr.f32.mxu0 0.0
    %833 = vmatmul.mubr.f32.gmra.mxu0 %v649
    %v834 = vpop.f32.mrf.mxu0
    %v835 = vadd.f32 %v721, %v834
    %v836 = vpop.f32.mrf.mxu0
    %v837 = vadd.f32 %v725, %v836
    %838 = vmatprep.mubr.f32.mxu0 0.0
    %839 = vmatmul.mubr.f32.gmra.mxu0 %v650
    %v840 = vpop.f32.mrf.mxu0
    %v841 = vadd.f32 %v721, %v840
    %v842 = vpop.f32.mrf.mxu0
    %v843 = vadd.f32 %v725, %v842
    %844 = vmatprep.mubr.f32.mxu0 0.0
    %845 = vmatmul.mubr.f32.gmra.mxu0 %v651
    %v846 = vpop.f32.mrf.mxu0
    %v847 = vadd.f32 %v721, %v846
    %v848 = vpop.f32.mrf.mxu0
    %v849 = vadd.f32 %v725, %v848
    %850 = vdwg.mxu0
    %851 = vmatprep.subr.mxu0 %v715
    %852 = vmatpush1.msra.mxu0 %v714
    %853 = vmatprep.subr.mxu0 %v711
    %854 = vmatpush1.msra.mxu0 %v710
    %855 = vmatprep.subr.mxu0 %v707
    %856 = vmatpush1.msra.mxu0 %v706
    %857 = vmatprep.subr.mxu0 %v703
    %858 = vmatpush1.msra.mxu0 %v702
    %859 = vmatprep.subr.mxu0 %v699
    %860 = vmatpush1.msra.mxu0 %v698
    %861 = vmatprep.subr.mxu0 %v695
    %862 = vmatpush1.msra.mxu0 %v694
    %863 = vmatprep.subr.mxu0 %v691
    %864 = vmatpush1.msra.mxu0 %v690
    %865 = vmatprep.subr.mxu0 %v687
    %866 = vmatpush1.msra.mxu0 %v686
    %867 = vmatprep.subr.mxu0 %v683
    %868 = vmatpush1.msra.mxu0 %v682
    %869 = vmatprep.subr.mxu0 %v679
    %870 = vmatpush1.msra.mxu0 %v678
    %871 = vmatprep.subr.mxu0 %v675
    %872 = vmatpush1.msra.mxu0 %v674
    %873 = vmatprep.subr.mxu0 %v671
    %874 = vmatpush1.msra.mxu0 %v670
    %875 = vmatprep.subr.mxu0 %v667
    %876 = vmatpush1.msra.mxu0 %v666
    %877 = vmatprep.subr.mxu0 %v663
    %878 = vmatpush1.msra.mxu0 %v662
    %879 = vmatprep.subr.mxu0 %v659
    %880 = vmatpush1.msra.mxu0 %v658
    %881 = vmatprep.subr.mxu0 %v655
    %882 = vmatpush1.msra.mxu0 %v654
    %883 = vmatprep.subr.mxu0 0.0
    %884 = vmatpush2.msra.mxu0 0.0
    %885 = vmatprep.subr.mxu0 0.0
    %886 = vmatpush2.msra.mxu0 0.0
    %887 = vmatprep.subr.mxu0 0.0
    %888 = vmatpush2.msra.mxu0 0.0
    %889 = vmatprep.subr.mxu0 0.0
    %890 = vmatpush2.msra.mxu0 0.0
    %891 = vmatprep.subr.mxu0 0.0
    %892 = vmatpush2.msra.mxu0 0.0
    %893 = vmatprep.subr.mxu0 0.0
    %894 = vmatpush2.msra.mxu0 0.0
    %895 = vmatprep.subr.mxu0 0.0
    %896 = vmatpush2.msra.mxu0 0.0
    %897 = vmatprep.subr.mxu0 0.0
    %898 = vmatpush2.msra.mxu0 0.0
    %899 = vmatprep.subr.mxu0 0.0
    %900 = vmatpush2.msra.mxu0 0.0
    %901 = vmatprep.subr.mxu0 0.0
    %902 = vmatpush2.msra.mxu0 0.0
    %903 = vmatprep.subr.mxu0 0.0
    %904 = vmatpush2.msra.mxu0 0.0
    %905 = vmatprep.subr.mxu0 0.0
    %906 = vmatpush2.msra.mxu0 0.0
    %907 = vmatprep.subr.mxu0 0.0
    %908 = vmatpush2.msra.mxu0 0.0
    %909 = vmatprep.subr.mxu0 0.0
    %910 = vmatpush2.msra.mxu0 0.0
    %911 = vmatprep.subr.mxu0 0.0
    %912 = vmatpush2.msra.mxu0 0.0
    %913 = vmatprep.subr.mxu0 0.0
    %914 = vmatpush2.msra.mxu0 0.0
    %915 = vmatprep.mubr.f32.mxu0 0.0
    %916 = vmatmul.mubr.f32.gmra.mxu0 %v644
    %v917 = vpop.f32.mrf.mxu0
    %v918 = vadd.f32 %v729, %v917
    %v919 = vpop.f32.mrf.mxu0
    %v920 = vadd.f32 %v733, %v919
    %921 = vmatprep.mubr.f32.mxu0 0.0
    %922 = vmatmul.mubr.f32.gmra.mxu0 %v645
    %v923 = vpop.f32.mrf.mxu0
    %v924 = vadd.f32 %v729, %v923
    %v925 = vpop.f32.mrf.mxu0
    %v926 = vadd.f32 %v733, %v925
    %927 = vmatprep.mubr.f32.mxu0 0.0
    %928 = vmatmul.mubr.f32.gmra.mxu0 %v646
    %v929 = vpop.f32.mrf.mxu0
    %v930 = vadd.f32 %v729, %v929
    %v931 = vpop.f32.mrf.mxu0
    %v932 = vadd.f32 %v733, %v931
    %933 = vmatprep.mubr.f32.mxu0 0.0
    %934 = vmatmul.mubr.f32.gmra.mxu0 %v647
    %v935 = vpop.f32.mrf.mxu0
    %v936 = vadd.f32 %v729, %v935
    %v937 = vpop.f32.mrf.mxu0
    %v938 = vadd.f32 %v733, %v937
    %939 = vmatprep.mubr.f32.mxu0 0.0
    %940 = vmatmul.mubr.f32.gmra.mxu0 %v648
    %v941 = vpop.f32.mrf.mxu0
    %v942 = vadd.f32 %v729, %v941
    %v943 = vpop.f32.mrf.mxu0
    %v944 = vadd.f32 %v733, %v943
    %945 = vmatprep.mubr.f32.mxu0 0.0
    %946 = vmatmul.mubr.f32.gmra.mxu0 %v649
    %v947 = vpop.f32.mrf.mxu0
    %v948 = vadd.f32 %v729, %v947
    %v949 = vpop.f32.mrf.mxu0
    %v950 = vadd.f32 %v733, %v949
    %951 = vmatprep.mubr.f32.mxu0 0.0
    %952 = vmatmul.mubr.f32.gmra.mxu0 %v650
    %v953 = vpop.f32.mrf.mxu0
    %v954 = vadd.f32 %v729, %v953
    %v955 = vpop.f32.mrf.mxu0
    %v956 = vadd.f32 %v733, %v955
    %957 = vmatprep.mubr.f32.mxu0 0.0
    %958 = vmatmul.mubr.f32.gmra.mxu0 %v651
    %v959 = vpop.f32.mrf.mxu0
    %v960 = vadd.f32 %v729, %v959
    %v961 = vpop.f32.mrf.mxu0
    %v962 = vadd.f32 %v733, %v961
    %963 = vdwg.mxu0
    %v964 = vld [vmem:[%s8] sm:$0xf]
    %v966 = vlaneseq
    %v967 = vshrl.u32 %v966, 7
    %v968 = vsub.s32 0, %v967
    %v969 = vrot.slane %v964, %v968
    %v970 = vlaneseq
    %v971 = vshrl.u32 %v970, 7
    %v972 = vsub.s32 1, %v971
    %v973 = vrot.slane %v964, %v972
    %v974 = vlaneseq
    %v975 = vshrl.u32 %v974, 7
    %v976 = vsub.s32 2, %v975
    %v977 = vrot.slane %v964, %v976
    %v978 = vlaneseq
    %v979 = vshrl.u32 %v978, 7
    %v980 = vsub.s32 3, %v979
    %v981 = vrot.slane %v964, %v980
    %v986 = vadd.f32 %v805, %v969
    %v987 = vadd.f32 %v807, %v973
    %v988 = vadd.f32 %v918, %v977
    %v989 = vadd.f32 %v920, %v981
    %v990 = vadd.f32 %v811, %v969
    %v991 = vadd.f32 %v813, %v973
    %v992 = vadd.f32 %v924, %v977
    %v993 = vadd.f32 %v926, %v981
    %v994 = vadd.f32 %v817, %v969
    %v995 = vadd.f32 %v819, %v973
    %v996 = vadd.f32 %v930, %v977
    %v997 = vadd.f32 %v932, %v981
    %v998 = vadd.f32 %v823, %v969
    %v999 = vadd.f32 %v825, %v973
    %v1000 = vadd.f32 %v936, %v977
    %v1001 = vadd.f32 %v938, %v981
    %v1002 = vadd.f32 %v829, %v969
    %v1003 = vadd.f32 %v831, %v973
    %v1004 = vadd.f32 %v942, %v977
    %v1005 = vadd.f32 %v944, %v981
    %v1006 = vadd.f32 %v835, %v969
    %v1007 = vadd.f32 %v837, %v973
    %v1008 = vadd.f32 %v948, %v977
    %v1009 = vadd.f32 %v950, %v981
    %v1010 = vadd.f32 %v841, %v969
    %v1011 = vadd.f32 %v843, %v973
    %v1012 = vadd.f32 %v954, %v977
    %v1013 = vadd.f32 %v956, %v981
    %v1014 = vadd.f32 %v847, %v969
    %v1015 = vadd.f32 %v849, %v973
    %v1016 = vadd.f32 %v960, %v977
    %v1017 = vadd.f32 %v962, %v981
    %1018 = vst [vmem:[#allocation2] sm:$0xff] %v986
    %1019 = vst [vmem:[#allocation2 + $0x8] sm:$0xff] %v987
    %1020 = vst [vmem:[#allocation2 + $0x10] sm:$0xff] %v988
    %1021 = vst [vmem:[#allocation2 + $0x18] sm:$0xff] %v989
    %1022 = vst [vmem:[#allocation2 + $0x20] sm:$0xff] %v990
    %1023 = vst [vmem:[#allocation2 + $0x28] sm:$0xff] %v991
    %1024 = vst [vmem:[#allocation2 + $0x30] sm:$0xff] %v992
    %1025 = vst [vmem:[#allocation2 + $0x38] sm:$0xff] %v993
    %1026 = vst [vmem:[#allocation2 + $0x40] sm:$0xff] %v994
    %1027 = vst [vmem:[#allocation2 + $0x48] sm:$0xff] %v995
    %1028 = vst [vmem:[#allocation2 + $0x50] sm:$0xff] %v996
    %1029 = vst [vmem:[#allocation2 + $0x58] sm:$0xff] %v997
    %1030 = vst [vmem:[#allocation2 + $0x60] sm:$0xff] %v998
    %1031 = vst [vmem:[#allocation2 + $0x68] sm:$0xff] %v999
    %1032 = vst [vmem:[#allocation2 + $0x70] sm:$0xff] %v1000
    %1033 = vst [vmem:[#allocation2 + $0x78] sm:$0xff] %v1001
    %1034 = vst [vmem:[#allocation2 + $0x80] sm:$0xff] %v1002
    %1035 = vst [vmem:[#allocation2 + $0x88] sm:$0xff] %v1003
    %1036 = vst [vmem:[#allocation2 + $0x90] sm:$0xff] %v1004
    %1037 = vst [vmem:[#allocation2 + $0x98] sm:$0xff] %v1005
    %1038 = vst [vmem:[#allocation2 + $0xa0] sm:$0xff] %v1006
    %1039 = vst [vmem:[#allocation2 + $0xa8] sm:$0xff] %v1007
    %1040 = vst [vmem:[#allocation2 + $0xb0] sm:$0xff] %v1008
    %1041 = vst [vmem:[#allocation2 + $0xb8] sm:$0xff] %v1009
    %1042 = vst [vmem:[#allocation2 + $0xc0] sm:$0xff] %v1010
    %1043 = vst [vmem:[#allocation2 + $0xc8] sm:$0xff] %v1011
    %1044 = vst [vmem:[#allocation2 + $0xd0] sm:$0xff] %v1012
    %1045 = vst [vmem:[#allocation2 + $0xd8] sm:$0xff] %v1013
    %1046 = vst [vmem:[#allocation2 + $0xe0] sm:$0xff] %v1014
    %1047 = vst [vmem:[#allocation2 + $0xe8] sm:$0xff] %v1015
    %1048 = vst [vmem:[#allocation2 + $0xf0] sm:$0xff] %v1016
    %1049 = vst [vmem:[#allocation2 + $0xf8] sm:$0xff] %v1017
    %v1050 = vld [vmem:[#allocation2] sm:$0xff]
    %v1051 = vld [vmem:[#allocation2 + $0x8] sm:$0xff]
    %v1052 = vld [vmem:[#allocation2 + $0x10] sm:$0xff]
    %v1053 = vld [vmem:[#allocation2 + $0x18] sm:$0xff]
    %v1054 = vld [vmem:[#allocation15] sm:$0xff]
    %v1055 = vld [vmem:[#allocation15 + $0x8] sm:$0xff]
    %v1056 = vld [vmem:[#allocation15 + $0x10] sm:$0xff]
    %v1057 = vld [vmem:[#allocation15 + $0x18] sm:$0xff]
    %v1058 = vld [vmem:[#allocation15 + $0x20] sm:$0xff]
    %v1059 = vld [vmem:[#allocation15 + $0x28] sm:$0xff]
    %v1060 = vld [vmem:[#allocation15 + $0x30] sm:$0xff]
    %v1061 = vld [vmem:[#allocation15 + $0x38] sm:$0xff]
    %v1062 = vld [vmem:[#allocation15 + $0x40] sm:$0xff]
    %v1063 = vld [vmem:[#allocation15 + $0x48] sm:$0xff]
    %v1064 = vld [vmem:[#allocation15 + $0x50] sm:$0xff]
    %v1065 = vld [vmem:[#allocation15 + $0x58] sm:$0xff]
    %v1066 = vld [vmem:[#allocation15 + $0x60] sm:$0xff]
    %v1067 = vld [vmem:[#allocation15 + $0x68] sm:$0xff]
    %v1068 = vld [vmem:[#allocation15 + $0x70] sm:$0xff]
    %v1069 = vld [vmem:[#allocation15 + $0x78] sm:$0xff]
    %v1070 = vld [vmem:[#allocation15 + $0x80] sm:$0xff]
    %v1071 = vld [vmem:[#allocation15 + $0x88] sm:$0xff]
    %v1072 = vld [vmem:[#allocation15 + $0x90] sm:$0xff]
    %v1073 = vld [vmem:[#allocation15 + $0x98] sm:$0xff]
    %v1074 = vld [vmem:[#allocation15 + $0xa0] sm:$0xff]
    %v1075 = vld [vmem:[#allocation15 + $0xa8] sm:$0xff]
    %v1076 = vld [vmem:[#allocation15 + $0xb0] sm:$0xff]
    %v1077 = vld [vmem:[#allocation15 + $0xb8] sm:$0xff]
    %v1078 = vld [vmem:[#allocation15 + $0xc0] sm:$0xff]
    %v1079 = vld [vmem:[#allocation15 + $0xc8] sm:$0xff]
    %v1080 = vld [vmem:[#allocation15 + $0xd0] sm:$0xff]
    %v1081 = vld [vmem:[#allocation15 + $0xd8] sm:$0xff]
    %v1082 = vld [vmem:[#allocation15 + $0xe0] sm:$0xff]
    %v1083 = vld [vmem:[#allocation15 + $0xe8] sm:$0xff]
    %v1084 = vld [vmem:[#allocation15 + $0xf0] sm:$0xff]
    %v1085 = vld [vmem:[#allocation15 + $0xf8] sm:$0xff]
    %v1118 = vunpack.c.l.b16 %v1054
    %v1119 = vunpack.c.h.b16 %v1054
    %v1120 = vunpack.c.l.b16 %v1055
    %v1121 = vunpack.c.h.b16 %v1055
    %v1122 = vunpack.c.l.b16 %v1056
    %v1123 = vunpack.c.h.b16 %v1056
    %v1124 = vunpack.c.l.b16 %v1057
    %v1125 = vunpack.c.h.b16 %v1057
    %v1126 = vunpack.c.l.b16 %v1058
    %v1127 = vunpack.c.h.b16 %v1058
    %v1128 = vunpack.c.l.b16 %v1059
    %v1129 = vunpack.c.h.b16 %v1059
    %v1130 = vunpack.c.l.b16 %v1060
    %v1131 = vunpack.c.h.b16 %v1060
    %v1132 = vunpack.c.l.b16 %v1061
    %v1133 = vunpack.c.h.b16 %v1061
    %v1134 = vunpack.c.l.b16 %v1062
    %v1135 = vunpack.c.h.b16 %v1062
    %v1136 = vunpack.c.l.b16 %v1063
    %v1137 = vunpack.c.h.b16 %v1063
    %v1138 = vunpack.c.l.b16 %v1064
    %v1139 = vunpack.c.h.b16 %v1064
    %v1140 = vunpack.c.l.b16 %v1065
    %v1141 = vunpack.c.h.b16 %v1065
    %v1142 = vunpack.c.l.b16 %v1066
    %v1143 = vunpack.c.h.b16 %v1066
    %v1144 = vunpack.c.l.b16 %v1067
    %v1145 = vunpack.c.h.b16 %v1067
    %v1146 = vunpack.c.l.b16 %v1068
    %v1147 = vunpack.c.h.b16 %v1068
    %v1148 = vunpack.c.l.b16 %v1069
    %v1149 = vunpack.c.h.b16 %v1069
    %v1150 = vunpack.c.l.b16 %v1070
    %v1151 = vunpack.c.h.b16 %v1070
    %v1152 = vunpack.c.l.b16 %v1071
    %v1153 = vunpack.c.h.b16 %v1071
    %v1154 = vunpack.c.l.b16 %v1072
    %v1155 = vunpack.c.h.b16 %v1072
    %v1156 = vunpack.c.l.b16 %v1073
    %v1157 = vunpack.c.h.b16 %v1073
    %v1158 = vunpack.c.l.b16 %v1074
    %v1159 = vunpack.c.h.b16 %v1074
    %v1160 = vunpack.c.l.b16 %v1075
    %v1161 = vunpack.c.h.b16 %v1075
    %v1162 = vunpack.c.l.b16 %v1076
    %v1163 = vunpack.c.h.b16 %v1076
    %v1164 = vunpack.c.l.b16 %v1077
    %v1165 = vunpack.c.h.b16 %v1077
    %v1166 = vunpack.c.l.b16 %v1078
    %v1167 = vunpack.c.h.b16 %v1078
    %v1168 = vunpack.c.l.b16 %v1079
    %v1169 = vunpack.c.h.b16 %v1079
    %v1170 = vunpack.c.l.b16 %v1080
    %v1171 = vunpack.c.h.b16 %v1080
    %v1172 = vunpack.c.l.b16 %v1081
    %v1173 = vunpack.c.h.b16 %v1081
    %v1174 = vunpack.c.l.b16 %v1082
    %v1175 = vunpack.c.h.b16 %v1082
    %v1176 = vunpack.c.l.b16 %v1083
    %v1177 = vunpack.c.h.b16 %v1083
    %v1178 = vunpack.c.l.b16 %v1084
    %v1179 = vunpack.c.h.b16 %v1084
    %v1180 = vunpack.c.l.b16 %v1085
    %v1181 = vunpack.c.h.b16 %v1085
    %v1182 = vpack.c.b16 %v1122, %v1118
    %v1183 = vpack.c.b16 %v1123, %v1119
    %v1184 = vpack.c.b16 %v1124, %v1120
    %v1185 = vpack.c.b16 %v1125, %v1121
    %v1186 = vpack.c.b16 %v1130, %v1126
    %v1187 = vpack.c.b16 %v1131, %v1127
    %v1188 = vpack.c.b16 %v1132, %v1128
    %v1189 = vpack.c.b16 %v1133, %v1129
    %v1190 = vpack.c.b16 %v1138, %v1134
    %v1191 = vpack.c.b16 %v1139, %v1135
    %v1192 = vpack.c.b16 %v1140, %v1136
    %v1193 = vpack.c.b16 %v1141, %v1137
    %v1194 = vpack.c.b16 %v1146, %v1142
    %v1195 = vpack.c.b16 %v1147, %v1143
    %v1196 = vpack.c.b16 %v1148, %v1144
    %v1197 = vpack.c.b16 %v1149, %v1145
    %v1198 = vpack.c.b16 %v1154, %v1150
    %v1199 = vpack.c.b16 %v1155, %v1151
    %v1200 = vpack.c.b16 %v1156, %v1152
    %v1201 = vpack.c.b16 %v1157, %v1153
    %v1202 = vpack.c.b16 %v1162, %v1158
    %v1203 = vpack.c.b16 %v1163, %v1159
    %v1204 = vpack.c.b16 %v1164, %v1160
    %v1205 = vpack.c.b16 %v1165, %v1161
    %v1206 = vpack.c.b16 %v1170, %v1166
    %v1207 = vpack.c.b16 %v1171, %v1167
    %v1208 = vpack.c.b16 %v1172, %v1168
    %v1209 = vpack.c.b16 %v1173, %v1169
    %v1210 = vpack.c.b16 %v1178, %v1174
    %v1211 = vpack.c.b16 %v1179, %v1175
    %v1212 = vpack.c.b16 %v1180, %v1176
    %v1213 = vpack.c.b16 %v1181, %v1177
    %1246 = vmatprep.subr.bf16.mxu0 %v1211
    %1247 = vmatpush1.bf16.msra.mxu0 %v1210
    %1248 = vmatprep.subr.bf16.mxu0 %v1207
    %1249 = vmatpush1.bf16.msra.mxu0 %v1206
    %1250 = vmatprep.subr.bf16.mxu0 %v1203
    %1251 = vmatpush1.bf16.msra.mxu0 %v1202
    %1252 = vmatprep.subr.bf16.mxu0 %v1199
    %1253 = vmatpush1.bf16.msra.mxu0 %v1198
    %1254 = vmatprep.subr.bf16.mxu0 %v1195
    %1255 = vmatpush1.bf16.msra.mxu0 %v1194
    %1256 = vmatprep.subr.bf16.mxu0 %v1191
    %1257 = vmatpush1.bf16.msra.mxu0 %v1190
    %1258 = vmatprep.subr.bf16.mxu0 %v1187
    %1259 = vmatpush1.bf16.msra.mxu0 %v1186
    %1260 = vmatprep.subr.bf16.mxu0 %v1183
    %1261 = vmatpush1.bf16.msra.mxu0 %v1182
    %1262 = vmatprep.subr.bf16.mxu0 0
    %1263 = vmatpush2.bf16.msra.mxu0 0
    %1264 = vmatprep.subr.bf16.mxu0 0
    %1265 = vmatpush2.bf16.msra.mxu0 0
    %1266 = vmatprep.subr.bf16.mxu0 0
    %1267 = vmatpush2.bf16.msra.mxu0 0
    %1268 = vmatprep.subr.bf16.mxu0 0
    %1269 = vmatpush2.bf16.msra.mxu0 0
    %1270 = vmatprep.subr.bf16.mxu0 0
    %1271 = vmatpush2.bf16.msra.mxu0 0
    %1272 = vmatprep.subr.bf16.mxu0 0
    %1273 = vmatpush2.bf16.msra.mxu0 0
    %1274 = vmatprep.subr.bf16.mxu0 0
    %1275 = vmatpush2.bf16.msra.mxu0 0
    %1276 = vmatprep.subr.bf16.mxu0 0
    %1277 = vmatpush2.bf16.msra.mxu0 0
    %1278 = vmatprep.mubr.bf16.mxu0 0
    %1279 = vmatmul.mubr.bf16.gmra.mxu0 0
    %v1280 = vpop.f32.mrf.mxu0
    %v1281 = vadd.f32 0.0, %v1280
    %v1282 = vpop.f32.mrf.mxu0
    %v1283 = vadd.f32 0.0, %v1282
    %v1284 = vpop.f32.mrf.mxu0
    %v1285 = vpop.f32.mrf.mxu0
    %1286 = vdwg.mxu0
    %1287 = vmatprep.subr.bf16.mxu0 %v1213
    %1288 = vmatpush1.bf16.msra.mxu0 %v1212
    %1289 = vmatprep.subr.bf16.mxu0 %v1209
    %1290 = vmatpush1.bf16.msra.mxu0 %v1208
    %1291 = vmatprep.subr.bf16.mxu0 %v1205
    %1292 = vmatpush1.bf16.msra.mxu0 %v1204
    %1293 = vmatprep.subr.bf16.mxu0 %v1201
    %1294 = vmatpush1.bf16.msra.mxu0 %v1200
    %1295 = vmatprep.subr.bf16.mxu0 %v1197
    %1296 = vmatpush1.bf16.msra.mxu0 %v1196
    %1297 = vmatprep.subr.bf16.mxu0 %v1193
    %1298 = vmatpush1.bf16.msra.mxu0 %v1192
    %1299 = vmatprep.subr.bf16.mxu0 %v1189
    %1300 = vmatpush1.bf16.msra.mxu0 %v1188
    %1301 = vmatprep.subr.bf16.mxu0 %v1185
    %1302 = vmatpush1.bf16.msra.mxu0 %v1184
    %1303 = vmatprep.subr.bf16.mxu0 0
    %1304 = vmatpush2.bf16.msra.mxu0 0
    %1305 = vmatprep.subr.bf16.mxu0 0
    %1306 = vmatpush2.bf16.msra.mxu0 0
    %1307 = vmatprep.subr.bf16.mxu0 0
    %1308 = vmatpush2.bf16.msra.mxu0 0
    %1309 = vmatprep.subr.bf16.mxu0 0
    %1310 = vmatpush2.bf16.msra.mxu0 0
    %1311 = vmatprep.subr.bf16.mxu0 0
    %1312 = vmatpush2.bf16.msra.mxu0 0
    %1313 = vmatprep.subr.bf16.mxu0 0
    %1314 = vmatpush2.bf16.msra.mxu0 0
    %1315 = vmatprep.subr.bf16.mxu0 0
    %1316 = vmatpush2.bf16.msra.mxu0 0
    %1317 = vmatprep.subr.bf16.mxu0 0
    %1318 = vmatpush2.bf16.msra.mxu0 0
    %1319 = vmatprep.mubr.bf16.mxu0 0
    %1320 = vmatmul.mubr.bf16.gmra.mxu0 0
    %v1321 = vpop.f32.mrf.mxu0
    %v1322 = vadd.f32 0.0, %v1321
    %v1323 = vpop.f32.mrf.mxu0
    %v1324 = vadd.f32 0.0, %v1323
    %v1325 = vpop.f32.mrf.mxu0
    %v1326 = vpop.f32.mrf.mxu0
    %1327 = vdwg.mxu0
    %v1328 = vadd.f32 %v1050, %v1281
    %v1329 = vadd.f32 %v1051, %v1283
    %v1330 = vadd.f32 %v1052, %v1322
    %v1331 = vadd.f32 %v1053, %v1324
    %v1332 = vmul.f32 %v1328, 0.5
    %v1333 = vmul.f32 %v1329, 0.5
    %v1334 = vmul.f32 %v1330, 0.5
    %v1335 = vtanh.pop %v1332
    %v1336 = vtanh.pop %v1333
    %v1337 = vtanh.pop %v1334
    %v1338 = vadd.f32 %v1335, 1.0
    %v1339 = vadd.f32 %v1336, 1.0
    %v1340 = vadd.f32 %v1337, 1.0
    %v1341 = vmul.f32 %v1338, 0.5
    %v1342 = vmul.f32 %v1339, 0.5
    %v1343 = vmul.f32 %v1340, 0.5
    %v1344 = vtanh.pop %v1331
    %v1345 = vmul.f32 %v1342, 0.0
    %v1346 = vmul.f32 %v1341, %v1344
    %v1347 = vadd.f32 %v1345, %v1346
    %v1348 = vtanh.pop %v1347
    %v1349 = vmul.f32 %v1343, %v1348
    %v1350 = vsel %vm485, %v1349, 0.0
    %v1351 = vld [vmem:[#allocation2 + $0x20] sm:$0xff]
    %v1352 = vld [vmem:[#allocation2 + $0x28] sm:$0xff]
    %v1353 = vld [vmem:[#allocation2 + $0x30] sm:$0xff]
    %v1354 = vld [vmem:[#allocation2 + $0x38] sm:$0xff]
    %v1355 = vpack.c.bf16 %v1349, %v1349
    %1356 = vmatprep.subr.bf16.mxu0 %v1211
    %1357 = vmatpush1.bf16.msra.mxu0 %v1210
    %1358 = vmatprep.subr.bf16.mxu0 %v1207
    %1359 = vmatpush1.bf16.msra.mxu0 %v1206
    %1360 = vmatprep.subr.bf16.mxu0 %v1203
    %1361 = vmatpush1.bf16.msra.mxu0 %v1202
    %1362 = vmatprep.subr.bf16.mxu0 %v1199
    %1363 = vmatpush1.bf16.msra.mxu0 %v1198
    %1364 = vmatprep.subr.bf16.mxu0 %v1195
    %1365 = vmatpush1.bf16.msra.mxu0 %v1194
    %1366 = vmatprep.subr.bf16.mxu0 %v1191
    %1367 = vmatpush1.bf16.msra.mxu0 %v1190
    %1368 = vmatprep.subr.bf16.mxu0 %v1187
    %1369 = vmatpush1.bf16.msra.mxu0 %v1186
    %1370 = vmatprep.subr.bf16.mxu0 %v1183
    %1371 = vmatpush1.bf16.msra.mxu0 %v1182
    %1372 = vmatprep.subr.bf16.mxu0 0
    %1373 = vmatpush2.bf16.msra.mxu0 0
    %1374 = vmatprep.subr.bf16.mxu0 0
    %1375 = vmatpush2.bf16.msra.mxu0 0
    %1376 = vmatprep.subr.bf16.mxu0 0
    %1377 = vmatpush2.bf16.msra.mxu0 0
    %1378 = vmatprep.subr.bf16.mxu0 0
    %1379 = vmatpush2.bf16.msra.mxu0 0
    %1380 = vmatprep.subr.bf16.mxu0 0
    %1381 = vmatpush2.bf16.msra.mxu0 0
    %1382 = vmatprep.subr.bf16.mxu0 0
    %1383 = vmatpush2.bf16.msra.mxu0 0
    %1384 = vmatprep.subr.bf16.mxu0 0
    %1385 = vmatpush2.bf16.msra.mxu0 0
    %1386 = vmatprep.subr.bf16.mxu0 0
    %1387 = vmatpush2.bf16.msra.mxu0 0
    %1388 = vmatprep.mubr.bf16.mxu0 0
    %1389 = vmatmul.mubr.bf16.gmra.mxu0 %v1355
    %v1390 = vpop.f32.mrf.mxu0
    %v1391 = vadd.f32 0.0, %v1390
    %v1392 = vpop.f32.mrf.mxu0
    %v1393 = vadd.f32 0.0, %v1392
    %v1394 = vpop.f32.mrf.mxu0
    %v1395 = vpop.f32.mrf.mxu0
    %1396 = vdwg.mxu0
    %1397 = vmatprep.subr.bf16.mxu0 %v1213
    %1398 = vmatpush1.bf16.msra.mxu0 %v1212
    %1399 = vmatprep.subr.bf16.mxu0 %v1209
    %1400 = vmatpush1.bf16.msra.mxu0 %v1208
    %1401 = vmatprep.subr.bf16.mxu0 %v1205
    %1402 = vmatpush1.bf16.msra.mxu0 %v1204
    %1403 = vmatprep.subr.bf16.mxu0 %v1201
    %1404 = vmatpush1.bf16.msra.mxu0 %v1200
    %1405 = vmatprep.subr.bf16.mxu0 %v1197
    %1406 = vmatpush1.bf16.msra.mxu0 %v1196
    %1407 = vmatprep.subr.bf16.mxu0 %v1193
    %1408 = vmatpush1.bf16.msra.mxu0 %v1192
    %1409 = vmatprep.subr.bf16.mxu0 %v1189
    %1410 = vmatpush1.bf16.msra.mxu0 %v1188
    %1411 = vmatprep.subr.bf16.mxu0 %v1185
    %1412 = vmatpush1.bf16.msra.mxu0 %v1184
    %1413 = vmatprep.subr.bf16.mxu0 0
    %1414 = vmatpush2.bf16.msra.mxu0 0
    %1415 = vmatprep.subr.bf16.mxu0 0
    %1416 = vmatpush2.bf16.msra.mxu0 0
    %1417 = vmatprep.subr.bf16.mxu0 0
    %1418 = vmatpush2.bf16.msra.mxu0 0
    %1419 = vmatprep.subr.bf16.mxu0 0
    %1420 = vmatpush2.bf16.msra.mxu0 0
    %1421 = vmatprep.subr.bf16.mxu0 0
    %1422 = vmatpush2.bf16.msra.mxu0 0
    %1423 = vmatprep.subr.bf16.mxu0 0
    %1424 = vmatpush2.bf16.msra.mxu0 0
    %1425 = vmatprep.subr.bf16.mxu0 0
    %1426 = vmatpush2.bf16.msra.mxu0 0
    %1427 = vmatprep.subr.bf16.mxu0 0
    %1428 = vmatpush2.bf16.msra.mxu0 0
    %1429 = vmatprep.mubr.bf16.mxu0 0
    %1430 = vmatmul.mubr.bf16.gmra.mxu0 %v1355
    %v1431 = vpop.f32.mrf.mxu0
    %v1432 = vadd.f32 0.0, %v1431
    %v1433 = vpop.f32.mrf.mxu0
    %v1434 = vadd.f32 0.0, %v1433
    %v1435 = vpop.f32.mrf.mxu0
    %v1436 = vpop.f32.mrf.mxu0
    %1437 = vdwg.mxu0
    %v1438 = vadd.f32 %v1351, %v1391
    %v1439 = vadd.f32 %v1352, %v1393
    %v1440 = vadd.f32 %v1353, %v1432
    %v1441 = vadd.f32 %v1354, %v1434
    %v1442 = vmul.f32 %v1438, 0.5
    %v1443 = vmul.f32 %v1439, 0.5
    %v1444 = vmul.f32 %v1440, 0.5
    %v1445 = vtanh.pop %v1442
    %v1446 = vtanh.pop %v1443
    %v1447 = vtanh.pop %v1444
    %v1448 = vadd.f32 %v1445, 1.0
    %v1449 = vadd.f32 %v1446, 1.0
    %v1450 = vadd.f32 %v1447, 1.0
    %v1451 = vmul.f32 %v1448, 0.5
    %v1452 = vmul.f32 %v1449, 0.5
    %v1453 = vmul.f32 %v1450, 0.5
    %v1454 = vtanh.pop %v1441
    %v1455 = vmul.f32 %v1452, %v1347
    %v1456 = vmul.f32 %v1451, %v1454
    %v1457 = vadd.f32 %v1455, %v1456
    %v1458 = vtanh.pop %v1457
    %v1459 = vmul.f32 %v1453, %v1458
    %v1460 = vsel %vm486, %v1459, %v1350
    %v1461 = vld [vmem:[#allocation2 + $0x40] sm:$0xff]
    %v1462 = vld [vmem:[#allocation2 + $0x48] sm:$0xff]
    %v1463 = vld [vmem:[#allocation2 + $0x50] sm:$0xff]
    %v1464 = vld [vmem:[#allocation2 + $0x58] sm:$0xff]
    %v1465 = vpack.c.bf16 %v1459, %v1459
    %1466 = vmatprep.subr.bf16.mxu0 %v1211
    %1467 = vmatpush1.bf16.msra.mxu0 %v1210
    %1468 = vmatprep.subr.bf16.mxu0 %v1207
    %1469 = vmatpush1.bf16.msra.mxu0 %v1206
    %1470 = vmatprep.subr.bf16.mxu0 %v1203
    %1471 = vmatpush1.bf16.msra.mxu0 %v1202
    %1472 = vmatprep.subr.bf16.mxu0 %v1199
    %1473 = vmatpush1.bf16.msra.mxu0 %v1198
    %1474 = vmatprep.subr.bf16.mxu0 %v1195
    %1475 = vmatpush1.bf16.msra.mxu0 %v1194
    %1476 = vmatprep.subr.bf16.mxu0 %v1191
    %1477 = vmatpush1.bf16.msra.mxu0 %v1190
    %1478 = vmatprep.subr.bf16.mxu0 %v1187
    %1479 = vmatpush1.bf16.msra.mxu0 %v1186
    %1480 = vmatprep.subr.bf16.mxu0 %v1183
    %1481 = vmatpush1.bf16.msra.mxu0 %v1182
    %1482 = vmatprep.subr.bf16.mxu0 0
    %1483 = vmatpush2.bf16.msra.mxu0 0
    %1484 = vmatprep.subr.bf16.mxu0 0
    %1485 = vmatpush2.bf16.msra.mxu0 0
    %1486 = vmatprep.subr.bf16.mxu0 0
    %1487 = vmatpush2.bf16.msra.mxu0 0
    %1488 = vmatprep.subr.bf16.mxu0 0
    %1489 = vmatpush2.bf16.msra.mxu0 0
    %1490 = vmatprep.subr.bf16.mxu0 0
    %1491 = vmatpush2.bf16.msra.mxu0 0
    %1492 = vmatprep.subr.bf16.mxu0 0
    %1493 = vmatpush2.bf16.msra.mxu0 0
    %1494 = vmatprep.subr.bf16.mxu0 0
    %1495 = vmatpush2.bf16.msra.mxu0 0
    %1496 = vmatprep.subr.bf16.mxu0 0
    %1497 = vmatpush2.bf16.msra.mxu0 0
    %1498 = vmatprep.mubr.bf16.mxu0 0
    %1499 = vmatmul.mubr.bf16.gmra.mxu0 %v1465
    %v1500 = vpop.f32.mrf.mxu0
    %v1501 = vadd.f32 0.0, %v1500
    %v1502 = vpop.f32.mrf.mxu0
    %v1503 = vadd.f32 0.0, %v1502
    %v1504 = vpop.f32.mrf.mxu0
    %v1505 = vpop.f32.mrf.mxu0
    %1506 = vdwg.mxu0
    %1507 = vmatprep.subr.bf16.mxu0 %v1213
    %1508 = vmatpush1.bf16.msra.mxu0 %v1212
    %1509 = vmatprep.subr.bf16.mxu0 %v1209
    %1510 = vmatpush1.bf16.msra.mxu0 %v1208
    %1511 = vmatprep.subr.bf16.mxu0 %v1205
    %1512 = vmatpush1.bf16.msra.mxu0 %v1204
    %1513 = vmatprep.subr.bf16.mxu0 %v1201
    %1514 = vmatpush1.bf16.msra.mxu0 %v1200
    %1515 = vmatprep.subr.bf16.mxu0 %v1197
    %1516 = vmatpush1.bf16.msra.mxu0 %v1196
    %1517 = vmatprep.subr.bf16.mxu0 %v1193
    %1518 = vmatpush1.bf16.msra.mxu0 %v1192
    %1519 = vmatprep.subr.bf16.mxu0 %v1189
    %1520 = vmatpush1.bf16.msra.mxu0 %v1188
    %1521 = vmatprep.subr.bf16.mxu0 %v1185
    %1522 = vmatpush1.bf16.msra.mxu0 %v1184
    %1523 = vmatprep.subr.bf16.mxu0 0
    %1524 = vmatpush2.bf16.msra.mxu0 0
    %1525 = vmatprep.subr.bf16.mxu0 0
    %1526 = vmatpush2.bf16.msra.mxu0 0
    %1527 = vmatprep.subr.bf16.mxu0 0
    %1528 = vmatpush2.bf16.msra.mxu0 0
    %1529 = vmatprep.subr.bf16.mxu0 0
    %1530 = vmatpush2.bf16.msra.mxu0 0
    %1531 = vmatprep.subr.bf16.mxu0 0
    %1532 = vmatpush2.bf16.msra.mxu0 0
    %1533 = vmatprep.subr.bf16.mxu0 0
    %1534 = vmatpush2.bf16.msra.mxu0 0
    %1535 = vmatprep.subr.bf16.mxu0 0
    %1536 = vmatpush2.bf16.msra.mxu0 0
    %1537 = vmatprep.subr.bf16.mxu0 0
    %1538 = vmatpush2.bf16.msra.mxu0 0
    %1539 = vmatprep.mubr.bf16.mxu0 0
    %1540 = vmatmul.mubr.bf16.gmra.mxu0 %v1465
    %v1541 = vpop.f32.mrf.mxu0
    %v1542 = vadd.f32 0.0, %v1541
    %v1543 = vpop.f32.mrf.mxu0
    %v1544 = vadd.f32 0.0, %v1543
    %v1545 = vpop.f32.mrf.mxu0
    %v1546 = vpop.f32.mrf.mxu0
    %1547 = vdwg.mxu0
    %v1548 = vadd.f32 %v1461, %v1501
    %v1549 = vadd.f32 %v1462, %v1503
    %v1550 = vadd.f32 %v1463, %v1542
    %v1551 = vadd.f32 %v1464, %v1544
    %v1552 = vmul.f32 %v1548, 0.5
    %v1553 = vmul.f32 %v1549, 0.5
    %v1554 = vmul.f32 %v1550, 0.5
    %v1555 = vtanh.pop %v1552
    %v1556 = vtanh.pop %v1553
    %v1557 = vtanh.pop %v1554
    %v1558 = vadd.f32 %v1555, 1.0
    %v1559 = vadd.f32 %v1556, 1.0
    %v1560 = vadd.f32 %v1557, 1.0
    %v1561 = vmul.f32 %v1558, 0.5
    %v1562 = vmul.f32 %v1559, 0.5
    %v1563 = vmul.f32 %v1560, 0.5
    %v1564 = vtanh.pop %v1551
    %v1565 = vmul.f32 %v1562, %v1457
    %v1566 = vmul.f32 %v1561, %v1564
    %v1567 = vadd.f32 %v1565, %v1566
    %v1568 = vtanh.pop %v1567
    %v1569 = vmul.f32 %v1563, %v1568
    %v1570 = vsel %vm487, %v1569, %v1460
    %v1571 = vld [vmem:[#allocation2 + $0x60] sm:$0xff]
    %v1572 = vld [vmem:[#allocation2 + $0x68] sm:$0xff]
    %v1573 = vld [vmem:[#allocation2 + $0x70] sm:$0xff]
    %v1574 = vld [vmem:[#allocation2 + $0x78] sm:$0xff]
    %v1575 = vpack.c.bf16 %v1569, %v1569
    %1576 = vmatprep.subr.bf16.mxu0 %v1211
    %1577 = vmatpush1.bf16.msra.mxu0 %v1210
    %1578 = vmatprep.subr.bf16.mxu0 %v1207
    %1579 = vmatpush1.bf16.msra.mxu0 %v1206
    %1580 = vmatprep.subr.bf16.mxu0 %v1203
    %1581 = vmatpush1.bf16.msra.mxu0 %v1202
    %1582 = vmatprep.subr.bf16.mxu0 %v1199
    %1583 = vmatpush1.bf16.msra.mxu0 %v1198
    %1584 = vmatprep.subr.bf16.mxu0 %v1195
    %1585 = vmatpush1.bf16.msra.mxu0 %v1194
    %1586 = vmatprep.subr.bf16.mxu0 %v1191
    %1587 = vmatpush1.bf16.msra.mxu0 %v1190
    %1588 = vmatprep.subr.bf16.mxu0 %v1187
    %1589 = vmatpush1.bf16.msra.mxu0 %v1186
    %1590 = vmatprep.subr.bf16.mxu0 %v1183
    %1591 = vmatpush1.bf16.msra.mxu0 %v1182
    %1592 = vmatprep.subr.bf16.mxu0 0
    %1593 = vmatpush2.bf16.msra.mxu0 0
    %1594 = vmatprep.subr.bf16.mxu0 0
    %1595 = vmatpush2.bf16.msra.mxu0 0
    %1596 = vmatprep.subr.bf16.mxu0 0
    %1597 = vmatpush2.bf16.msra.mxu0 0
    %1598 = vmatprep.subr.bf16.mxu0 0
    %1599 = vmatpush2.bf16.msra.mxu0 0
    %1600 = vmatprep.subr.bf16.mxu0 0
    %1601 = vmatpush2.bf16.msra.mxu0 0
    %1602 = vmatprep.subr.bf16.mxu0 0
    %1603 = vmatpush2.bf16.msra.mxu0 0
    %1604 = vmatprep.subr.bf16.mxu0 0
    %1605 = vmatpush2.bf16.msra.mxu0 0
    %1606 = vmatprep.subr.bf16.mxu0 0
    %1607 = vmatpush2.bf16.msra.mxu0 0
    %1608 = vmatprep.mubr.bf16.mxu0 0
    %1609 = vmatmul.mubr.bf16.gmra.mxu0 %v1575
    %v1610 = vpop.f32.mrf.mxu0
    %v1611 = vadd.f32 0.0, %v1610
    %v1612 = vpop.f32.mrf.mxu0
    %v1613 = vadd.f32 0.0, %v1612
    %v1614 = vpop.f32.mrf.mxu0
    %v1615 = vpop.f32.mrf.mxu0
    %1616 = vdwg.mxu0
    %1617 = vmatprep.subr.bf16.mxu0 %v1213
    %1618 = vmatpush1.bf16.msra.mxu0 %v1212
    %1619 = vmatprep.subr.bf16.mxu0 %v1209
    %1620 = vmatpush1.bf16.msra.mxu0 %v1208
    %1621 = vmatprep.subr.bf16.mxu0 %v1205
    %1622 = vmatpush1.bf16.msra.mxu0 %v1204
    %1623 = vmatprep.subr.bf16.mxu0 %v1201
    %1624 = vmatpush1.bf16.msra.mxu0 %v1200
    %1625 = vmatprep.subr.bf16.mxu0 %v1197
    %1626 = vmatpush1.bf16.msra.mxu0 %v1196
    %1627 = vmatprep.subr.bf16.mxu0 %v1193
    %1628 = vmatpush1.bf16.msra.mxu0 %v1192
    %1629 = vmatprep.subr.bf16.mxu0 %v1189
    %1630 = vmatpush1.bf16.msra.mxu0 %v1188
    %1631 = vmatprep.subr.bf16.mxu0 %v1185
    %1632 = vmatpush1.bf16.msra.mxu0 %v1184
    %1633 = vmatprep.subr.bf16.mxu0 0
    %1634 = vmatpush2.bf16.msra.mxu0 0
    %1635 = vmatprep.subr.bf16.mxu0 0
    %1636 = vmatpush2.bf16.msra.mxu0 0
    %1637 = vmatprep.subr.bf16.mxu0 0
    %1638 = vmatpush2.bf16.msra.mxu0 0
    %1639 = vmatprep.subr.bf16.mxu0 0
    %1640 = vmatpush2.bf16.msra.mxu0 0
    %1641 = vmatprep.subr.bf16.mxu0 0
    %1642 = vmatpush2.bf16.msra.mxu0 0
    %1643 = vmatprep.subr.bf16.mxu0 0
    %1644 = vmatpush2.bf16.msra.mxu0 0
    %1645 = vmatprep.subr.bf16.mxu0 0
    %1646 = vmatpush2.bf16.msra.mxu0 0
    %1647 = vmatprep.subr.bf16.mxu0 0
    %1648 = vmatpush2.bf16.msra.mxu0 0
    %1649 = vmatprep.mubr.bf16.mxu0 0
    %1650 = vmatmul.mubr.bf16.gmra.mxu0 %v1575
    %v1651 = vpop.f32.mrf.mxu0
    %v1652 = vadd.f32 0.0, %v1651
    %v1653 = vpop.f32.mrf.mxu0
    %v1654 = vadd.f32 0.0, %v1653
    %v1655 = vpop.f32.mrf.mxu0
    %v1656 = vpop.f32.mrf.mxu0
    %1657 = vdwg.mxu0
    %v1658 = vadd.f32 %v1571, %v1611
    %v1659 = vadd.f32 %v1572, %v1613
    %v1660 = vadd.f32 %v1573, %v1652
    %v1661 = vadd.f32 %v1574, %v1654
    %v1662 = vmul.f32 %v1658, 0.5
    %v1663 = vmul.f32 %v1659, 0.5
    %v1664 = vmul.f32 %v1660, 0.5
    %v1665 = vtanh.pop %v1662
    %v1666 = vtanh.pop %v1663
    %v1667 = vtanh.pop %v1664
    %v1668 = vadd.f32 %v1665, 1.0
    %v1669 = vadd.f32 %v1666, 1.0
    %v1670 = vadd.f32 %v1667, 1.0
    %v1671 = vmul.f32 %v1668, 0.5
    %v1672 = vmul.f32 %v1669, 0.5
    %v1673 = vmul.f32 %v1670, 0.5
    %v1674 = vtanh.pop %v1661
    %v1675 = vmul.f32 %v1672, %v1567
    %v1676 = vmul.f32 %v1671, %v1674
    %v1677 = vadd.f32 %v1675, %v1676
    %v1678 = vtanh.pop %v1677
    %v1679 = vmul.f32 %v1673, %v1678
    %v1680 = vsel %vm488, %v1679, %v1570
    %v1681 = vld [vmem:[#allocation2 + $0x80] sm:$0xff]
    %v1682 = vld [vmem:[#allocation2 + $0x88] sm:$0xff]
    %v1683 = vld [vmem:[#allocation2 + $0x90] sm:$0xff]
    %v1684 = vld [vmem:[#allocation2 + $0x98] sm:$0xff]
    %v1685 = vpack.c.bf16 %v1679, %v1679
    %1686 = vmatprep.subr.bf16.mxu0 %v1211
    %1687 = vmatpush1.bf16.msra.mxu0 %v1210
    %1688 = vmatprep.subr.bf16.mxu0 %v1207
    %1689 = vmatpush1.bf16.msra.mxu0 %v1206
    %1690 = vmatprep.subr.bf16.mxu0 %v1203
    %1691 = vmatpush1.bf16.msra.mxu0 %v1202
    %1692 = vmatprep.subr.bf16.mxu0 %v1199
    %1693 = vmatpush1.bf16.msra.mxu0 %v1198
    %1694 = vmatprep.subr.bf16.mxu0 %v1195
    %1695 = vmatpush1.bf16.msra.mxu0 %v1194
    %1696 = vmatprep.subr.bf16.mxu0 %v1191
    %1697 = vmatpush1.bf16.msra.mxu0 %v1190
    %1698 = vmatprep.subr.bf16.mxu0 %v1187
    %1699 = vmatpush1.bf16.msra.mxu0 %v1186
    %1700 = vmatprep.subr.bf16.mxu0 %v1183
    %1701 = vmatpush1.bf16.msra.mxu0 %v1182
    %1702 = vmatprep.subr.bf16.mxu0 0
    %1703 = vmatpush2.bf16.msra.mxu0 0
    %1704 = vmatprep.subr.bf16.mxu0 0
    %1705 = vmatpush2.bf16.msra.mxu0 0
    %1706 = vmatprep.subr.bf16.mxu0 0
    %1707 = vmatpush2.bf16.msra.mxu0 0
    %1708 = vmatprep.subr.bf16.mxu0 0
    %1709 = vmatpush2.bf16.msra.mxu0 0
    %1710 = vmatprep.subr.bf16.mxu0 0
    %1711 = vmatpush2.bf16.msra.mxu0 0
    %1712 = vmatprep.subr.bf16.mxu0 0
    %1713 = vmatpush2.bf16.msra.mxu0 0
    %1714 = vmatprep.subr.bf16.mxu0 0
    %1715 = vmatpush2.bf16.msra.mxu0 0
    %1716 = vmatprep.subr.bf16.mxu0 0
    %1717 = vmatpush2.bf16.msra.mxu0 0
    %1718 = vmatprep.mubr.bf16.mxu0 0
    %1719 = vmatmul.mubr.bf16.gmra.mxu0 %v1685
    %v1720 = vpop.f32.mrf.mxu0
    %v1721 = vadd.f32 0.0, %v1720
    %v1722 = vpop.f32.mrf.mxu0
    %v1723 = vadd.f32 0.0, %v1722
    %v1724 = vpop.f32.mrf.mxu0
    %v1725 = vpop.f32.mrf.mxu0
    %1726 = vdwg.mxu0
    %1727 = vmatprep.subr.bf16.mxu0 %v1213
    %1728 = vmatpush1.bf16.msra.mxu0 %v1212
    %1729 = vmatprep.subr.bf16.mxu0 %v1209
    %1730 = vmatpush1.bf16.msra.mxu0 %v1208
    %1731 = vmatprep.subr.bf16.mxu0 %v1205
    %1732 = vmatpush1.bf16.msra.mxu0 %v1204
    %1733 = vmatprep.subr.bf16.mxu0 %v1201
    %1734 = vmatpush1.bf16.msra.mxu0 %v1200
    %1735 = vmatprep.subr.bf16.mxu0 %v1197
    %1736 = vmatpush1.bf16.msra.mxu0 %v1196
    %1737 = vmatprep.subr.bf16.mxu0 %v1193
    %1738 = vmatpush1.bf16.msra.mxu0 %v1192
    %1739 = vmatprep.subr.bf16.mxu0 %v1189
    %1740 = vmatpush1.bf16.msra.mxu0 %v1188
    %1741 = vmatprep.subr.bf16.mxu0 %v1185
    %1742 = vmatpush1.bf16.msra.mxu0 %v1184
    %1743 = vmatprep.subr.bf16.mxu0 0
    %1744 = vmatpush2.bf16.msra.mxu0 0
    %1745 = vmatprep.subr.bf16.mxu0 0
    %1746 = vmatpush2.bf16.msra.mxu0 0
    %1747 = vmatprep.subr.bf16.mxu0 0
    %1748 = vmatpush2.bf16.msra.mxu0 0
    %1749 = vmatprep.subr.bf16.mxu0 0
    %1750 = vmatpush2.bf16.msra.mxu0 0
    %1751 = vmatprep.subr.bf16.mxu0 0
    %1752 = vmatpush2.bf16.msra.mxu0 0
    %1753 = vmatprep.subr.bf16.mxu0 0
    %1754 = vmatpush2.bf16.msra.mxu0 0
    %1755 = vmatprep.subr.bf16.mxu0 0
    %1756 = vmatpush2.bf16.msra.mxu0 0
    %1757 = vmatprep.subr.bf16.mxu0 0
    %1758 = vmatpush2.bf16.msra.mxu0 0
    %1759 = vmatprep.mubr.bf16.mxu0 0
    %1760 = vmatmul.mubr.bf16.gmra.mxu0 %v1685
    %v1761 = vpop.f32.mrf.mxu0
    %v1762 = vadd.f32 0.0, %v1761
    %v1763 = vpop.f32.mrf.mxu0
    %v1764 = vadd.f32 0.0, %v1763
    %v1765 = vpop.f32.mrf.mxu0
    %v1766 = vpop.f32.mrf.mxu0
    %1767 = vdwg.mxu0
    %v1768 = vadd.f32 %v1681, %v1721
    %v1769 = vadd.f32 %v1682, %v1723
    %v1770 = vadd.f32 %v1683, %v1762
    %v1771 = vadd.f32 %v1684, %v1764
    %v1772 = vmul.f32 %v1768, 0.5
    %v1773 = vmul.f32 %v1769, 0.5
    %v1774 = vmul.f32 %v1770, 0.5
    %v1775 = vtanh.pop %v1772
    %v1776 = vtanh.pop %v1773
    %v1777 = vtanh.pop %v1774
    %v1778 = vadd.f32 %v1775, 1.0
    %v1779 = vadd.f32 %v1776, 1.0
    %v1780 = vadd.f32 %v1777, 1.0
    %v1781 = vmul.f32 %v1778, 0.5
    %v1782 = vmul.f32 %v1779, 0.5
    %v1783 = vmul.f32 %v1780, 0.5
    %v1784 = vtanh.pop %v1771
    %v1785 = vmul.f32 %v1782, %v1677
    %v1786 = vmul.f32 %v1781, %v1784
    %v1787 = vadd.f32 %v1785, %v1786
    %v1788 = vtanh.pop %v1787
    %v1789 = vmul.f32 %v1783, %v1788
    %v1790 = vsel %vm489, %v1789, %v1680
    %v1791 = vld [vmem:[#allocation2 + $0xa0] sm:$0xff]
    %v1792 = vld [vmem:[#allocation2 + $0xa8] sm:$0xff]
    %v1793 = vld [vmem:[#allocation2 + $0xb0] sm:$0xff]
    %v1794 = vld [vmem:[#allocation2 + $0xb8] sm:$0xff]
    %v1795 = vpack.c.bf16 %v1789, %v1789
    %1796 = vmatprep.subr.bf16.mxu0 %v1211
    %1797 = vmatpush1.bf16.msra.mxu0 %v1210
    %1798 = vmatprep.subr.bf16.mxu0 %v1207
    %1799 = vmatpush1.bf16.msra.mxu0 %v1206
    %1800 = vmatprep.subr.bf16.mxu0 %v1203
    %1801 = vmatpush1.bf16.msra.mxu0 %v1202
    %1802 = vmatprep.subr.bf16.mxu0 %v1199
    %1803 = vmatpush1.bf16.msra.mxu0 %v1198
    %1804 = vmatprep.subr.bf16.mxu0 %v1195
    %1805 = vmatpush1.bf16.msra.mxu0 %v1194
    %1806 = vmatprep.subr.bf16.mxu0 %v1191
    %1807 = vmatpush1.bf16.msra.mxu0 %v1190
    %1808 = vmatprep.subr.bf16.mxu0 %v1187
    %1809 = vmatpush1.bf16.msra.mxu0 %v1186
    %1810 = vmatprep.subr.bf16.mxu0 %v1183
    %1811 = vmatpush1.bf16.msra.mxu0 %v1182
    %1812 = vmatprep.subr.bf16.mxu0 0
    %1813 = vmatpush2.bf16.msra.mxu0 0
    %1814 = vmatprep.subr.bf16.mxu0 0
    %1815 = vmatpush2.bf16.msra.mxu0 0
    %1816 = vmatprep.subr.bf16.mxu0 0
    %1817 = vmatpush2.bf16.msra.mxu0 0
    %1818 = vmatprep.subr.bf16.mxu0 0
    %1819 = vmatpush2.bf16.msra.mxu0 0
    %1820 = vmatprep.subr.bf16.mxu0 0
    %1821 = vmatpush2.bf16.msra.mxu0 0
    %1822 = vmatprep.subr.bf16.mxu0 0
    %1823 = vmatpush2.bf16.msra.mxu0 0
    %1824 = vmatprep.subr.bf16.mxu0 0
    %1825 = vmatpush2.bf16.msra.mxu0 0
    %1826 = vmatprep.subr.bf16.mxu0 0
    %1827 = vmatpush2.bf16.msra.mxu0 0
    %1828 = vmatprep.mubr.bf16.mxu0 0
    %1829 = vmatmul.mubr.bf16.gmra.mxu0 %v1795
    %v1830 = vpop.f32.mrf.mxu0
    %v1831 = vadd.f32 0.0, %v1830
    %v1832 = vpop.f32.mrf.mxu0
    %v1833 = vadd.f32 0.0, %v1832
    %v1834 = vpop.f32.mrf.mxu0
    %v1835 = vpop.f32.mrf.mxu0
    %1836 = vdwg.mxu0
    %1837 = vmatprep.subr.bf16.mxu0 %v1213
    %1838 = vmatpush1.bf16.msra.mxu0 %v1212
    %1839 = vmatprep.subr.bf16.mxu0 %v1209
    %1840 = vmatpush1.bf16.msra.mxu0 %v1208
    %1841 = vmatprep.subr.bf16.mxu0 %v1205
    %1842 = vmatpush1.bf16.msra.mxu0 %v1204
    %1843 = vmatprep.subr.bf16.mxu0 %v1201
    %1844 = vmatpush1.bf16.msra.mxu0 %v1200
    %1845 = vmatprep.subr.bf16.mxu0 %v1197
    %1846 = vmatpush1.bf16.msra.mxu0 %v1196
    %1847 = vmatprep.subr.bf16.mxu0 %v1193
    %1848 = vmatpush1.bf16.msra.mxu0 %v1192
    %1849 = vmatprep.subr.bf16.mxu0 %v1189
    %1850 = vmatpush1.bf16.msra.mxu0 %v1188
    %1851 = vmatprep.subr.bf16.mxu0 %v1185
    %1852 = vmatpush1.bf16.msra.mxu0 %v1184
    %1853 = vmatprep.subr.bf16.mxu0 0
    %1854 = vmatpush2.bf16.msra.mxu0 0
    %1855 = vmatprep.subr.bf16.mxu0 0
    %1856 = vmatpush2.bf16.msra.mxu0 0
    %1857 = vmatprep.subr.bf16.mxu0 0
    %1858 = vmatpush2.bf16.msra.mxu0 0
    %1859 = vmatprep.subr.bf16.mxu0 0
    %1860 = vmatpush2.bf16.msra.mxu0 0
    %1861 = vmatprep.subr.bf16.mxu0 0
    %1862 = vmatpush2.bf16.msra.mxu0 0
    %1863 = vmatprep.subr.bf16.mxu0 0
    %1864 = vmatpush2.bf16.msra.mxu0 0
    %1865 = vmatprep.subr.bf16.mxu0 0
    %1866 = vmatpush2.bf16.msra.mxu0 0
    %1867 = vmatprep.subr.bf16.mxu0 0
    %1868 = vmatpush2.bf16.msra.mxu0 0
    %1869 = vmatprep.mubr.bf16.mxu0 0
    %1870 = vmatmul.mubr.bf16.gmra.mxu0 %v1795
    %v1871 = vpop.f32.mrf.mxu0
    %v1872 = vadd.f32 0.0, %v1871
    %v1873 = vpop.f32.mrf.mxu0
    %v1874 = vadd.f32 0.0, %v1873
    %v1875 = vpop.f32.mrf.mxu0
    %v1876 = vpop.f32.mrf.mxu0
    %1877 = vdwg.mxu0
    %v1878 = vadd.f32 %v1791, %v1831
    %v1879 = vadd.f32 %v1792, %v1833
    %v1880 = vadd.f32 %v1793, %v1872
    %v1881 = vadd.f32 %v1794, %v1874
    %v1882 = vmul.f32 %v1878, 0.5
    %v1883 = vmul.f32 %v1879, 0.5
    %v1884 = vmul.f32 %v1880, 0.5
    %v1885 = vtanh.pop %v1882
    %v1886 = vtanh.pop %v1883
    %v1887 = vtanh.pop %v1884
    %v1888 = vadd.f32 %v1885, 1.0
    %v1889 = vadd.f32 %v1886, 1.0
    %v1890 = vadd.f32 %v1887, 1.0
    %v1891 = vmul.f32 %v1888, 0.5
    %v1892 = vmul.f32 %v1889, 0.5
    %v1893 = vmul.f32 %v1890, 0.5
    %v1894 = vtanh.pop %v1881
    %v1895 = vmul.f32 %v1892, %v1787
    %v1896 = vmul.f32 %v1891, %v1894
    %v1897 = vadd.f32 %v1895, %v1896
    %v1898 = vtanh.pop %v1897
    %v1899 = vmul.f32 %v1893, %v1898
    %v1900 = vsel %vm490, %v1899, %v1790
    %v1901 = vld [vmem:[#allocation2 + $0xc0] sm:$0xff]
    %v1902 = vld [vmem:[#allocation2 + $0xc8] sm:$0xff]
    %v1903 = vld [vmem:[#allocation2 + $0xd0] sm:$0xff]
    %v1904 = vld [vmem:[#allocation2 + $0xd8] sm:$0xff]
    %v1905 = vpack.c.bf16 %v1899, %v1899
    %1906 = vmatprep.subr.bf16.mxu0 %v1211
    %1907 = vmatpush1.bf16.msra.mxu0 %v1210
    %1908 = vmatprep.subr.bf16.mxu0 %v1207
    %1909 = vmatpush1.bf16.msra.mxu0 %v1206
    %1910 = vmatprep.subr.bf16.mxu0 %v1203
    %1911 = vmatpush1.bf16.msra.mxu0 %v1202
    %1912 = vmatprep.subr.bf16.mxu0 %v1199
    %1913 = vmatpush1.bf16.msra.mxu0 %v1198
    %1914 = vmatprep.subr.bf16.mxu0 %v1195
    %1915 = vmatpush1.bf16.msra.mxu0 %v1194
    %1916 = vmatprep.subr.bf16.mxu0 %v1191
    %1917 = vmatpush1.bf16.msra.mxu0 %v1190
    %1918 = vmatprep.subr.bf16.mxu0 %v1187
    %1919 = vmatpush1.bf16.msra.mxu0 %v1186
    %1920 = vmatprep.subr.bf16.mxu0 %v1183
    %1921 = vmatpush1.bf16.msra.mxu0 %v1182
    %1922 = vmatprep.subr.bf16.mxu0 0
    %1923 = vmatpush2.bf16.msra.mxu0 0
    %1924 = vmatprep.subr.bf16.mxu0 0
    %1925 = vmatpush2.bf16.msra.mxu0 0
    %1926 = vmatprep.subr.bf16.mxu0 0
    %1927 = vmatpush2.bf16.msra.mxu0 0
    %1928 = vmatprep.subr.bf16.mxu0 0
    %1929 = vmatpush2.bf16.msra.mxu0 0
    %1930 = vmatprep.subr.bf16.mxu0 0
    %1931 = vmatpush2.bf16.msra.mxu0 0
    %1932 = vmatprep.subr.bf16.mxu0 0
    %1933 = vmatpush2.bf16.msra.mxu0 0
    %1934 = vmatprep.subr.bf16.mxu0 0
    %1935 = vmatpush2.bf16.msra.mxu0 0
    %1936 = vmatprep.subr.bf16.mxu0 0
    %1937 = vmatpush2.bf16.msra.mxu0 0
    %1938 = vmatprep.mubr.bf16.mxu0 0
    %1939 = vmatmul.mubr.bf16.gmra.mxu0 %v1905
    %v1940 = vpop.f32.mrf.mxu0
    %v1941 = vadd.f32 0.0, %v1940
    %v1942 = vpop.f32.mrf.mxu0
    %v1943 = vadd.f32 0.0, %v1942
    %v1944 = vpop.f32.mrf.mxu0
    %v1945 = vpop.f32.mrf.mxu0
    %1946 = vdwg.mxu0
    %1947 = vmatprep.subr.bf16.mxu0 %v1213
    %1948 = vmatpush1.bf16.msra.mxu0 %v1212
    %1949 = vmatprep.subr.bf16.mxu0 %v1209
    %1950 = vmatpush1.bf16.msra.mxu0 %v1208
    %1951 = vmatprep.subr.bf16.mxu0 %v1205
    %1952 = vmatpush1.bf16.msra.mxu0 %v1204
    %1953 = vmatprep.subr.bf16.mxu0 %v1201
    %1954 = vmatpush1.bf16.msra.mxu0 %v1200
    %1955 = vmatprep.subr.bf16.mxu0 %v1197
    %1956 = vmatpush1.bf16.msra.mxu0 %v1196
    %1957 = vmatprep.subr.bf16.mxu0 %v1193
    %1958 = vmatpush1.bf16.msra.mxu0 %v1192
    %1959 = vmatprep.subr.bf16.mxu0 %v1189
    %1960 = vmatpush1.bf16.msra.mxu0 %v1188
    %1961 = vmatprep.subr.bf16.mxu0 %v1185
    %1962 = vmatpush1.bf16.msra.mxu0 %v1184
    %1963 = vmatprep.subr.bf16.mxu0 0
    %1964 = vmatpush2.bf16.msra.mxu0 0
    %1965 = vmatprep.subr.bf16.mxu0 0
    %1966 = vmatpush2.bf16.msra.mxu0 0
    %1967 = vmatprep.subr.bf16.mxu0 0
    %1968 = vmatpush2.bf16.msra.mxu0 0
    %1969 = vmatprep.subr.bf16.mxu0 0
    %1970 = vmatpush2.bf16.msra.mxu0 0
    %1971 = vmatprep.subr.bf16.mxu0 0
    %1972 = vmatpush2.bf16.msra.mxu0 0
    %1973 = vmatprep.subr.bf16.mxu0 0
    %1974 = vmatpush2.bf16.msra.mxu0 0
    %1975 = vmatprep.subr.bf16.mxu0 0
    %1976 = vmatpush2.bf16.msra.mxu0 0
    %1977 = vmatprep.subr.bf16.mxu0 0
    %1978 = vmatpush2.bf16.msra.mxu0 0
    %1979 = vmatprep.mubr.bf16.mxu0 0
    %1980 = vmatmul.mubr.bf16.gmra.mxu0 %v1905
    %v1981 = vpop.f32.mrf.mxu0
    %v1982 = vadd.f32 0.0, %v1981
    %v1983 = vpop.f32.mrf.mxu0
    %v1984 = vadd.f32 0.0, %v1983
    %v1985 = vpop.f32.mrf.mxu0
    %v1986 = vpop.f32.mrf.mxu0
    %1987 = vdwg.mxu0
    %v1988 = vadd.f32 %v1901, %v1941
    %v1989 = vadd.f32 %v1902, %v1943
    %v1990 = vadd.f32 %v1903, %v1982
    %v1991 = vadd.f32 %v1904, %v1984
    %v1992 = vmul.f32 %v1988, 0.5
    %v1993 = vmul.f32 %v1989, 0.5
    %v1994 = vmul.f32 %v1990, 0.5
    %v1995 = vtanh.pop %v1992
    %v1996 = vtanh.pop %v1993
    %v1997 = vtanh.pop %v1994
    %v1998 = vadd.f32 %v1995, 1.0
    %v1999 = vadd.f32 %v1996, 1.0
    %v2000 = vadd.f32 %v1997, 1.0
    %v2001 = vmul.f32 %v1998, 0.5
    %v2002 = vmul.f32 %v1999, 0.5
    %v2003 = vmul.f32 %v2000, 0.5
    %v2004 = vtanh.pop %v1991
    %v2005 = vmul.f32 %v2002, %v1897
    %v2006 = vmul.f32 %v2001, %v2004
    %v2007 = vadd.f32 %v2005, %v2006
    %v2008 = vtanh.pop %v2007
    %v2009 = vmul.f32 %v2003, %v2008
    %v2010 = vsel %vm491, %v2009, %v1900
    %v2011 = vld [vmem:[#allocation2 + $0xe0] sm:$0xff]
    %v2012 = vld [vmem:[#allocation2 + $0xe8] sm:$0xff]
    %v2013 = vld [vmem:[#allocation2 + $0xf0] sm:$0xff]
    %v2014 = vld [vmem:[#allocation2 + $0xf8] sm:$0xff]
    %v2015 = vpack.c.bf16 %v2009, %v2009
    %2016 = vmatprep.subr.bf16.mxu0 %v1211
    %2017 = vmatpush1.bf16.msra.mxu0 %v1210
    %2018 = vmatprep.subr.bf16.mxu0 %v1207
    %2019 = vmatpush1.bf16.msra.mxu0 %v1206
    %2020 = vmatprep.subr.bf16.mxu0 %v1203
    %2021 = vmatpush1.bf16.msra.mxu0 %v1202
    %2022 = vmatprep.subr.bf16.mxu0 %v1199
    %2023 = vmatpush1.bf16.msra.mxu0 %v1198
    %2024 = vmatprep.subr.bf16.mxu0 %v1195
    %2025 = vmatpush1.bf16.msra.mxu0 %v1194
    %2026 = vmatprep.subr.bf16.mxu0 %v1191
    %2027 = vmatpush1.bf16.msra.mxu0 %v1190
    %2028 = vmatprep.subr.bf16.mxu0 %v1187
    %2029 = vmatpush1.bf16.msra.mxu0 %v1186
    %2030 = vmatprep.subr.bf16.mxu0 %v1183
    %2031 = vmatpush1.bf16.msra.mxu0 %v1182
    %2032 = vmatprep.subr.bf16.mxu0 0
    %2033 = vmatpush2.bf16.msra.mxu0 0
    %2034 = vmatprep.subr.bf16.mxu0 0
    %2035 = vmatpush2.bf16.msra.mxu0 0
    %2036 = vmatprep.subr.bf16.mxu0 0
    %2037 = vmatpush2.bf16.msra.mxu0 0
    %2038 = vmatprep.subr.bf16.mxu0 0
    %2039 = vmatpush2.bf16.msra.mxu0 0
    %2040 = vmatprep.subr.bf16.mxu0 0
    %2041 = vmatpush2.bf16.msra.mxu0 0
    %2042 = vmatprep.subr.bf16.mxu0 0
    %2043 = vmatpush2.bf16.msra.mxu0 0
    %2044 = vmatprep.subr.bf16.mxu0 0
    %2045 = vmatpush2.bf16.msra.mxu0 0
    %2046 = vmatprep.subr.bf16.mxu0 0
    %2047 = vmatpush2.bf16.msra.mxu0 0
    %2048 = vmatprep.mubr.bf16.mxu0 0
    %2049 = vmatmul.mubr.bf16.gmra.mxu0 %v2015
    %v2050 = vpop.f32.mrf.mxu0
    %v2051 = vadd.f32 0.0, %v2050
    %v2052 = vpop.f32.mrf.mxu0
    %v2053 = vadd.f32 0.0, %v2052
    %v2054 = vpop.f32.mrf.mxu0
    %v2055 = vpop.f32.mrf.mxu0
    %2056 = vdwg.mxu0
    %2057 = vmatprep.subr.bf16.mxu0 %v1213
    %2058 = vmatpush1.bf16.msra.mxu0 %v1212
    %2059 = vmatprep.subr.bf16.mxu0 %v1209
    %2060 = vmatpush1.bf16.msra.mxu0 %v1208
    %2061 = vmatprep.subr.bf16.mxu0 %v1205
    %2062 = vmatpush1.bf16.msra.mxu0 %v1204
    %2063 = vmatprep.subr.bf16.mxu0 %v1201
    %2064 = vmatpush1.bf16.msra.mxu0 %v1200
    %2065 = vmatprep.subr.bf16.mxu0 %v1197
    %2066 = vmatpush1.bf16.msra.mxu0 %v1196
    %2067 = vmatprep.subr.bf16.mxu0 %v1193
    %2068 = vmatpush1.bf16.msra.mxu0 %v1192
    %2069 = vmatprep.subr.bf16.mxu0 %v1189
    %2070 = vmatpush1.bf16.msra.mxu0 %v1188
    %2071 = vmatprep.subr.bf16.mxu0 %v1185
    %2072 = vmatpush1.bf16.msra.mxu0 %v1184
    %2073 = vmatprep.subr.bf16.mxu0 0
    %2074 = vmatpush2.bf16.msra.mxu0 0
    %2075 = vmatprep.subr.bf16.mxu0 0
    %2076 = vmatpush2.bf16.msra.mxu0 0
    %2077 = vmatprep.subr.bf16.mxu0 0
    %2078 = vmatpush2.bf16.msra.mxu0 0
    %2079 = vmatprep.subr.bf16.mxu0 0
    %2080 = vmatpush2.bf16.msra.mxu0 0
    %2081 = vmatprep.subr.bf16.mxu0 0
    %2082 = vmatpush2.bf16.msra.mxu0 0
    %2083 = vmatprep.subr.bf16.mxu0 0
    %2084 = vmatpush2.bf16.msra.mxu0 0
    %2085 = vmatprep.subr.bf16.mxu0 0
    %2086 = vmatpush2.bf16.msra.mxu0 0
    %2087 = vmatprep.subr.bf16.mxu0 0
    %2088 = vmatpush2.bf16.msra.mxu0 0
    %2089 = vmatprep.mubr.bf16.mxu0 0
    %2090 = vmatmul.mubr.bf16.gmra.mxu0 %v2015
    %v2091 = vpop.f32.mrf.mxu0
    %v2092 = vadd.f32 0.0, %v2091
    %v2093 = vpop.f32.mrf.mxu0
    %v2094 = vadd.f32 0.0, %v2093
    %v2095 = vpop.f32.mrf.mxu0
    %v2096 = vpop.f32.mrf.mxu0
    %2097 = vdwg.mxu0
    %v2098 = vadd.f32 %v2011, %v2051
    %v2099 = vadd.f32 %v2012, %v2053
    %v2100 = vadd.f32 %v2013, %v2092
    %v2101 = vadd.f32 %v2014, %v2094
    %v2102 = vmul.f32 %v2098, 0.5
    %v2103 = vmul.f32 %v2099, 0.5
    %v2104 = vmul.f32 %v2100, 0.5
    %v2105 = vtanh.pop %v2102
    %v2106 = vtanh.pop %v2103
    %v2107 = vtanh.pop %v2104
    %v2108 = vadd.f32 %v2105, 1.0
    %v2109 = vadd.f32 %v2106, 1.0
    %v2110 = vadd.f32 %v2107, 1.0
    %v2111 = vmul.f32 %v2108, 0.5
    %v2112 = vmul.f32 %v2109, 0.5
    %v2113 = vmul.f32 %v2110, 0.5
    %v2114 = vtanh.pop %v2101
    %v2115 = vmul.f32 %v2112, %v2007
    %v2116 = vmul.f32 %v2111, %v2114
    %v2117 = vadd.f32 %v2115, %v2116
    %v2118 = vtanh.pop %v2117
    %v2119 = vmul.f32 %v2113, %v2118
    %v2120 = vsel %vm492, %v2119, %v2010
    %s2121 = smul.u32 128, 1
    %s2122 = sshll.u32 %s2121, 4
    %2123 = dma.done [#allocation11], %s2122
    %s2124 = smul.u32 1, 1
    %s2125 = sshll.u32 %s2124, 4
    %2126 = dma.done %s145, %s2125
    %s2127 = smul.u32 11, 1
    %s2128 = sshll.u32 %s2127, 4
    %2129 = dma.done %s192, %s2128
    %s2130 = sshll.u32 %s2124, 4
    %2131 = dma.done %s249, %s2130
    %s2132 = smul.u32 256, 1
    %s2133 = sshll.u32 %s2132, 4
    %2134 = dma.done %s296, %s2133
    %s2135 = sshll.u32 %s2124, 4
    %2136 = dma.done %s308, %s2135
    %s2137 = sshll.u32 %s2121, 4
    %2138 = dma.done %s355, %s2137
    %s2139 = sshll.u32 %s2124, 4
    %2140 = dma.done %s429, %s2139
    %v2141 = vld [vmem:[#allocation3] sm:$0xff]
    %v2142 = vld [vmem:[#allocation3 + $0x8] sm:$0xff]
    %v2143 = vld [vmem:[#allocation3 + $0x10] sm:$0xff]
    %v2144 = vld [vmem:[#allocation3 + $0x18] sm:$0xff]
    %v2145 = vld [vmem:[#allocation3 + $0x20] sm:$0xff]
    %v2146 = vld [vmem:[#allocation3 + $0x28] sm:$0xff]
    %v2147 = vld [vmem:[#allocation3 + $0x30] sm:$0xff]
    %v2148 = vld [vmem:[#allocation3 + $0x38] sm:$0xff]
    %v2149 = vld [vmem:[#allocation3 + $0x40] sm:$0xff]
    %v2150 = vld [vmem:[#allocation3 + $0x48] sm:$0xff]
    %v2151 = vld [vmem:[#allocation3 + $0x50] sm:$0xff]
    %v2152 = vld [vmem:[#allocation3 + $0x58] sm:$0xff]
    %v2153 = vld [vmem:[#allocation3 + $0x60] sm:$0xff]
    %v2154 = vld [vmem:[#allocation3 + $0x68] sm:$0xff]
    %v2155 = vld [vmem:[#allocation3 + $0x70] sm:$0xff]
    %v2156 = vld [vmem:[#allocation3 + $0x78] sm:$0xff]
    %v2157 = vld [vmem:[#allocation4] sm:$0x1]
    %v2159 = vlaneseq
    %v2160 = vshrl.u32 %v2159, 7
    %v2161 = vsub.s32 0, %v2160
    %v2162 = vrot.slane %v2157, %v2161
    %2164 = vmatprep.subr.mxu0 0.0
    %2165 = vmatpush1.msra.mxu0 %v2156
    %2166 = vmatprep.subr.mxu0 0.0
    %2167 = vmatpush1.msra.mxu0 %v2155
    %2168 = vmatprep.subr.mxu0 0.0
    %2169 = vmatpush1.msra.mxu0 %v2154
    %2170 = vmatprep.subr.mxu0 0.0
    %2171 = vmatpush1.msra.mxu0 %v2153
    %2172 = vmatprep.subr.mxu0 0.0
    %2173 = vmatpush1.msra.mxu0 %v2152
    %2174 = vmatprep.subr.mxu0 0.0
    %2175 = vmatpush1.msra.mxu0 %v2151
    %2176 = vmatprep.subr.mxu0 0.0
    %2177 = vmatpush1.msra.mxu0 %v2150
    %2178 = vmatprep.subr.mxu0 0.0
    %2179 = vmatpush1.msra.mxu0 %v2149
    %2180 = vmatprep.subr.mxu0 0.0
    %2181 = vmatpush1.msra.mxu0 %v2148
    %2182 = vmatprep.subr.mxu0 0.0
    %2183 = vmatpush1.msra.mxu0 %v2147
    %2184 = vmatprep.subr.mxu0 0.0
    %2185 = vmatpush1.msra.mxu0 %v2146
    %2186 = vmatprep.subr.mxu0 0.0
    %2187 = vmatpush1.msra.mxu0 %v2145
    %2188 = vmatprep.subr.mxu0 0.0
    %2189 = vmatpush1.msra.mxu0 %v2144
    %2190 = vmatprep.subr.mxu0 0.0
    %2191 = vmatpush1.msra.mxu0 %v2143
    %2192 = vmatprep.subr.mxu0 0.0
    %2193 = vmatpush1.msra.mxu0 %v2142
    %2194 = vmatprep.subr.mxu0 0.0
    %2195 = vmatpush1.msra.mxu0 %v2141
    %2196 = vmatprep.subr.mxu0 0.0
    %2197 = vmatpush2.msra.mxu0 0.0
    %2198 = vmatprep.subr.mxu0 0.0
    %2199 = vmatpush2.msra.mxu0 0.0
    %2200 = vmatprep.subr.mxu0 0.0
    %2201 = vmatpush2.msra.mxu0 0.0
    %2202 = vmatprep.subr.mxu0 0.0
    %2203 = vmatpush2.msra.mxu0 0.0
    %2204 = vmatprep.subr.mxu0 0.0
    %2205 = vmatpush2.msra.mxu0 0.0
    %2206 = vmatprep.subr.mxu0 0.0
    %2207 = vmatpush2.msra.mxu0 0.0
    %2208 = vmatprep.subr.mxu0 0.0
    %2209 = vmatpush2.msra.mxu0 0.0
    %2210 = vmatprep.subr.mxu0 0.0
    %2211 = vmatpush2.msra.mxu0 0.0
    %2212 = vmatprep.subr.mxu0 0.0
    %2213 = vmatpush2.msra.mxu0 0.0
    %2214 = vmatprep.subr.mxu0 0.0
    %2215 = vmatpush2.msra.mxu0 0.0
    %2216 = vmatprep.subr.mxu0 0.0
    %2217 = vmatpush2.msra.mxu0 0.0
    %2218 = vmatprep.subr.mxu0 0.0
    %2219 = vmatpush2.msra.mxu0 0.0
    %2220 = vmatprep.subr.mxu0 0.0
    %2221 = vmatpush2.msra.mxu0 0.0
    %2222 = vmatprep.subr.mxu0 0.0
    %2223 = vmatpush2.msra.mxu0 0.0
    %2224 = vmatprep.subr.mxu0 0.0
    %2225 = vmatpush2.msra.mxu0 0.0
    %2226 = vmatprep.subr.mxu0 0.0
    %2227 = vmatpush2.msra.mxu0 0.0
    %2228 = vmatprep.mubr.f32.mxu0 0.0
    %2229 = vmatmul.mubr.f32.gmra.mxu0 %v2120
    %v2230 = vpop.f32.mrf.mxu0
    %v2231 = vadd.f32 %v2162, %v2230
    %v2232 = vpop.f32.mrf.mxu0
    %2233 = vdwg.mxu0
    %v2234 = vmax.f32 %v2231, 0.0
    %v2235 = vld [vmem:[%s0] sm:$0xff]
    %v2236 = vld [vmem:[#allocation5] sm:$0xff]
    %v2237 = vld [vmem:[#allocation5 + $0x8] sm:$0x7]
    %v2238 = vld [vmem:[#allocation6] sm:$0x1]
    %v2240 = vlaneseq
    %v2241 = vshrl.u32 %v2240, 7
    %v2242 = vsub.s32 0, %v2241
    %v2243 = vrot.slane %v2238, %v2242
    %v2246 = vsel %vm510, %v2235, 0
    %v2249 = vsel %vm535, %v2237, 0
    %2251 = vmatprep.subr.mxu0 0.0
    %2252 = vmatpush1.msra.mxu0 0.0
    %2253 = vmatprep.subr.mxu0 0.0
    %2254 = vmatpush1.msra.mxu0 0.0
    %2255 = vmatprep.subr.mxu0 0.0
    %2256 = vmatpush1.msra.mxu0 0.0
    %2257 = vmatprep.subr.mxu0 0.0
    %2258 = vmatpush1.msra.mxu0 0.0
    %2259 = vmatprep.subr.mxu0 0.0
    %2260 = vmatpush1.msra.mxu0 0.0
    %2261 = vmatprep.subr.mxu0 0.0
    %2262 = vmatpush1.msra.mxu0 0.0
    %2263 = vmatprep.subr.mxu0 0.0
    %2264 = vmatpush1.msra.mxu0 0.0
    %2265 = vmatprep.subr.mxu0 0.0
    %2266 = vmatpush1.msra.mxu0 0.0
    %2267 = vmatprep.subr.mxu0 0.0
    %2268 = vmatpush1.msra.mxu0 0.0
    %2269 = vmatprep.subr.mxu0 0.0
    %2270 = vmatpush1.msra.mxu0 0.0
    %2271 = vmatprep.subr.mxu0 0.0
    %2272 = vmatpush1.msra.mxu0 0.0
    %2273 = vmatprep.subr.mxu0 0.0
    %2274 = vmatpush1.msra.mxu0 0.0
    %2275 = vmatprep.subr.mxu0 0.0
    %2276 = vmatpush1.msra.mxu0 0.0
    %2277 = vmatprep.subr.mxu0 0.0
    %2278 = vmatpush1.msra.mxu0 0.0
    %2279 = vmatprep.subr.mxu0 0.0
    %2280 = vmatpush1.msra.mxu0 %v2249
    %2281 = vmatprep.subr.mxu0 0.0
    %2282 = vmatpush1.msra.mxu0 %v2236
    %2283 = vmatprep.subr.mxu0 0.0
    %2284 = vmatpush2.msra.mxu0 0.0
    %2285 = vmatprep.subr.mxu0 0.0
    %2286 = vmatpush2.msra.mxu0 0.0
    %2287 = vmatprep.subr.mxu0 0.0
    %2288 = vmatpush2.msra.mxu0 0.0
    %2289 = vmatprep.subr.mxu0 0.0
    %2290 = vmatpush2.msra.mxu0 0.0
    %2291 = vmatprep.subr.mxu0 0.0
    %2292 = vmatpush2.msra.mxu0 0.0
    %2293 = vmatprep.subr.mxu0 0.0
    %2294 = vmatpush2.msra.mxu0 0.0
    %2295 = vmatprep.subr.mxu0 0.0
    %2296 = vmatpush2.msra.mxu0 0.0
    %2297 = vmatprep.subr.mxu0 0.0
    %2298 = vmatpush2.msra.mxu0 0.0
    %2299 = vmatprep.subr.mxu0 0.0
    %2300 = vmatpush2.msra.mxu0 0.0
    %2301 = vmatprep.subr.mxu0 0.0
    %2302 = vmatpush2.msra.mxu0 0.0
    %2303 = vmatprep.subr.mxu0 0.0
    %2304 = vmatpush2.msra.mxu0 0.0
    %2305 = vmatprep.subr.mxu0 0.0
    %2306 = vmatpush2.msra.mxu0 0.0
    %2307 = vmatprep.subr.mxu0 0.0
    %2308 = vmatpush2.msra.mxu0 0.0
    %2309 = vmatprep.subr.mxu0 0.0
    %2310 = vmatpush2.msra.mxu0 0.0
    %2311 = vmatprep.subr.mxu0 0.0
    %2312 = vmatpush2.msra.mxu0 0.0
    %2313 = vmatprep.subr.mxu0 0.0
    %2314 = vmatpush2.msra.mxu0 0.0
    %2315 = vmatprep.mubr.f32.mxu0 0.0
    %2316 = vmatmul.mubr.f32.gmra.mxu0 %v2246
    %v2317 = vpop.f32.mrf.mxu0
    %v2318 = vadd.f32 %v2243, %v2317
    %v2319 = vpop.f32.mrf.mxu0
    %2320 = vdwg.mxu0
    %v2321 = vmax.f32 %v2318, 0.0
    %v2322 = vld [vmem:[#allocation7] sm:$0xff]
    %v2323 = vld [vmem:[#allocation7 + $0x8] sm:$0xff]
    %v2324 = vld [vmem:[#allocation7 + $0x10] sm:$0xff]
    %v2325 = vld [vmem:[#allocation7 + $0x18] sm:$0xff]
    %v2326 = vld [vmem:[#allocation7 + $0x20] sm:$0xff]
    %v2327 = vld [vmem:[#allocation7 + $0x28] sm:$0xff]
    %v2328 = vld [vmem:[#allocation7 + $0x30] sm:$0xff]
    %v2329 = vld [vmem:[#allocation7 + $0x38] sm:$0xff]
    %v2330 = vld [vmem:[#allocation7 + $0x40] sm:$0xff]
    %v2331 = vld [vmem:[#allocation7 + $0x48] sm:$0xff]
    %v2332 = vld [vmem:[#allocation7 + $0x50] sm:$0xff]
    %v2333 = vld [vmem:[#allocation7 + $0x58] sm:$0xff]
    %v2334 = vld [vmem:[#allocation7 + $0x60] sm:$0xff]
    %v2335 = vld [vmem:[#allocation7 + $0x68] sm:$0xff]
    %v2336 = vld [vmem:[#allocation7 + $0x70] sm:$0xff]
    %v2337 = vld [vmem:[#allocation7 + $0x78] sm:$0xff]
    %v2338 = vld [vmem:[#allocation7 + $0x80] sm:$0xff]
    %v2339 = vld [vmem:[#allocation7 + $0x88] sm:$0xff]
    %v2340 = vld [vmem:[#allocation7 + $0x90] sm:$0xff]
    %v2341 = vld [vmem:[#allocation7 + $0x98] sm:$0xff]
    %v2342 = vld [vmem:[#allocation7 + $0xa0] sm:$0xff]
    %v2343 = vld [vmem:[#allocation7 + $0xa8] sm:$0xff]
    %v2344 = vld [vmem:[#allocation7 + $0xb0] sm:$0xff]
    %v2345 = vld [vmem:[#allocation7 + $0xb8] sm:$0xff]
    %v2346 = vld [vmem:[#allocation7 + $0xc0] sm:$0xff]
    %v2347 = vld [vmem:[#allocation7 + $0xc8] sm:$0xff]
    %v2348 = vld [vmem:[#allocation7 + $0xd0] sm:$0xff]
    %v2349 = vld [vmem:[#allocation7 + $0xd8] sm:$0xff]
    %v2350 = vld [vmem:[#allocation7 + $0xe0] sm:$0xff]
    %v2351 = vld [vmem:[#allocation7 + $0xe8] sm:$0xff]
    %v2352 = vld [vmem:[#allocation7 + $0xf0] sm:$0xff]
    %v2353 = vld [vmem:[#allocation7 + $0xf8] sm:$0xff]
    %v2354 = vld [vmem:[#allocation8] sm:$0x1]
    %v2356 = vlaneseq
    %v2357 = vshrl.u32 %v2356, 7
    %v2358 = vsub.s32 0, %v2357
    %v2359 = vrot.slane %v2354, %v2358
    %2361 = vmatprep.subr.mxu0 0.0
    %2362 = vmatpush1.msra.mxu0 %v2337
    %2363 = vmatprep.subr.mxu0 0.0
    %2364 = vmatpush1.msra.mxu0 %v2336
    %2365 = vmatprep.subr.mxu0 0.0
    %2366 = vmatpush1.msra.mxu0 %v2335
    %2367 = vmatprep.subr.mxu0 0.0
    %2368 = vmatpush1.msra.mxu0 %v2334
    %2369 = vmatprep.subr.mxu0 0.0
    %2370 = vmatpush1.msra.mxu0 %v2333
    %2371 = vmatprep.subr.mxu0 0.0
    %2372 = vmatpush1.msra.mxu0 %v2332
    %2373 = vmatprep.subr.mxu0 0.0
    %2374 = vmatpush1.msra.mxu0 %v2331
    %2375 = vmatprep.subr.mxu0 0.0
    %2376 = vmatpush1.msra.mxu0 %v2330
    %2377 = vmatprep.subr.mxu0 0.0
    %2378 = vmatpush1.msra.mxu0 %v2329
    %2379 = vmatprep.subr.mxu0 0.0
    %2380 = vmatpush1.msra.mxu0 %v2328
    %2381 = vmatprep.subr.mxu0 0.0
    %2382 = vmatpush1.msra.mxu0 %v2327
    %2383 = vmatprep.subr.mxu0 0.0
    %2384 = vmatpush1.msra.mxu0 %v2326
    %2385 = vmatprep.subr.mxu0 0.0
    %2386 = vmatpush1.msra.mxu0 %v2325
    %2387 = vmatprep.subr.mxu0 0.0
    %2388 = vmatpush1.msra.mxu0 %v2324
    %2389 = vmatprep.subr.mxu0 0.0
    %2390 = vmatpush1.msra.mxu0 %v2323
    %2391 = vmatprep.subr.mxu0 0.0
    %2392 = vmatpush1.msra.mxu0 %v2322
    %2393 = vmatprep.subr.mxu0 0.0
    %2394 = vmatpush2.msra.mxu0 %v2353
    %2395 = vmatprep.subr.mxu0 0.0
    %2396 = vmatpush2.msra.mxu0 %v2352
    %2397 = vmatprep.subr.mxu0 0.0
    %2398 = vmatpush2.msra.mxu0 %v2351
    %2399 = vmatprep.subr.mxu0 0.0
    %2400 = vmatpush2.msra.mxu0 %v2350
    %2401 = vmatprep.subr.mxu0 0.0
    %2402 = vmatpush2.msra.mxu0 %v2349
    %2403 = vmatprep.subr.mxu0 0.0
    %2404 = vmatpush2.msra.mxu0 %v2348
    %2405 = vmatprep.subr.mxu0 0.0
    %2406 = vmatpush2.msra.mxu0 %v2347
    %2407 = vmatprep.subr.mxu0 0.0
    %2408 = vmatpush2.msra.mxu0 %v2346
    %2409 = vmatprep.subr.mxu0 0.0
    %2410 = vmatpush2.msra.mxu0 %v2345
    %2411 = vmatprep.subr.mxu0 0.0
    %2412 = vmatpush2.msra.mxu0 %v2344
    %2413 = vmatprep.subr.mxu0 0.0
    %2414 = vmatpush2.msra.mxu0 %v2343
    %2415 = vmatprep.subr.mxu0 0.0
    %2416 = vmatpush2.msra.mxu0 %v2342
    %2417 = vmatprep.subr.mxu0 0.0
    %2418 = vmatpush2.msra.mxu0 %v2341
    %2419 = vmatprep.subr.mxu0 0.0
    %2420 = vmatpush2.msra.mxu0 %v2340
    %2421 = vmatprep.subr.mxu0 0.0
    %2422 = vmatpush2.msra.mxu0 %v2339
    %2423 = vmatprep.subr.mxu0 0.0
    %2424 = vmatpush2.msra.mxu0 %v2338
    %2425 = vmatprep.mubr.f32.mxu0 %v2321
    %2426 = vmatmul.mubr.f32.gmra.mxu0 %v2234
    %v2427 = vpop.f32.mrf.mxu0
    %v2428 = vadd.f32 %v2359, %v2427
    %v2429 = vpop.f32.mrf.mxu0
    %2430 = vdwg.mxu0
    %v2431 = vmax.f32 %v2428, 0.0
    %v2432 = vld [vmem:[#allocation9] sm:$0xff]
    %v2433 = vld [vmem:[#allocation9 + $0x8] sm:$0xff]
    %v2434 = vld [vmem:[#allocation9 + $0x10] sm:$0xff]
    %v2435 = vld [vmem:[#allocation9 + $0x18] sm:$0xff]
    %v2436 = vld [vmem:[#allocation9 + $0x20] sm:$0xff]
    %v2437 = vld [vmem:[#allocation9 + $0x28] sm:$0xff]
    %v2438 = vld [vmem:[#allocation9 + $0x30] sm:$0xff]
    %v2439 = vld [vmem:[#allocation9 + $0x38] sm:$0xff]
    %v2440 = vld [vmem:[#allocation9 + $0x40] sm:$0xff]
    %v2441 = vld [vmem:[#allocation9 + $0x48] sm:$0xff]
    %v2442 = vld [vmem:[#allocation9 + $0x50] sm:$0xff]
    %v2443 = vld [vmem:[#allocation9 + $0x58] sm:$0xff]
    %v2444 = vld [vmem:[#allocation9 + $0x60] sm:$0xff]
    %v2445 = vld [vmem:[#allocation9 + $0x68] sm:$0xff]
    %v2446 = vld [vmem:[#allocation9 + $0x70] sm:$0xff]
    %v2447 = vld [vmem:[#allocation9 + $0x78] sm:$0xff]
    %v2448 = vld [vmem:[#allocation10] sm:$0x1]
    %v2450 = vlaneseq
    %v2451 = vshrl.u32 %v2450, 7
    %v2452 = vsub.s32 0, %v2451
    %v2453 = vrot.slane %v2448, %v2452
    %2455 = vmatprep.subr.mxu0 0.0
    %2456 = vmatpush1.msra.mxu0 %v2447
    %2457 = vmatprep.subr.mxu0 0.0
    %2458 = vmatpush1.msra.mxu0 %v2446
    %2459 = vmatprep.subr.mxu0 0.0
    %2460 = vmatpush1.msra.mxu0 %v2445
    %2461 = vmatprep.subr.mxu0 0.0
    %2462 = vmatpush1.msra.mxu0 %v2444
    %2463 = vmatprep.subr.mxu0 0.0
    %2464 = vmatpush1.msra.mxu0 %v2443
    %2465 = vmatprep.subr.mxu0 0.0
    %2466 = vmatpush1.msra.mxu0 %v2442
    %2467 = vmatprep.subr.mxu0 0.0
    %2468 = vmatpush1.msra.mxu0 %v2441
    %2469 = vmatprep.subr.mxu0 0.0
    %2470 = vmatpush1.msra.mxu0 %v2440
    %2471 = vmatprep.subr.mxu0 0.0
    %2472 = vmatpush1.msra.mxu0 %v2439
    %2473 = vmatprep.subr.mxu0 0.0
    %2474 = vmatpush1.msra.mxu0 %v2438
    %2475 = vmatprep.subr.mxu0 0.0
    %2476 = vmatpush1.msra.mxu0 %v2437
    %2477 = vmatprep.subr.mxu0 0.0
    %2478 = vmatpush1.msra.mxu0 %v2436
    %2479 = vmatprep.subr.mxu0 0.0
    %2480 = vmatpush1.msra.mxu0 %v2435
    %2481 = vmatprep.subr.mxu0 0.0
    %2482 = vmatpush1.msra.mxu0 %v2434
    %2483 = vmatprep.subr.mxu0 0.0
    %2484 = vmatpush1.msra.mxu0 %v2433
    %2485 = vmatprep.subr.mxu0 0.0
    %2486 = vmatpush1.msra.mxu0 %v2432
    %2487 = vmatprep.subr.mxu0 0.0
    %2488 = vmatpush2.msra.mxu0 0.0
    %2489 = vmatprep.subr.mxu0 0.0
    %2490 = vmatpush2.msra.mxu0 0.0
    %2491 = vmatprep.subr.mxu0 0.0
    %2492 = vmatpush2.msra.mxu0 0.0
    %2493 = vmatprep.subr.mxu0 0.0
    %2494 = vmatpush2.msra.mxu0 0.0
    %2495 = vmatprep.subr.mxu0 0.0
    %2496 = vmatpush2.msra.mxu0 0.0
    %2497 = vmatprep.subr.mxu0 0.0
    %2498 = vmatpush2.msra.mxu0 0.0
    %2499 = vmatprep.subr.mxu0 0.0
    %2500 = vmatpush2.msra.mxu0 0.0
    %2501 = vmatprep.subr.mxu0 0.0
    %2502 = vmatpush2.msra.mxu0 0.0
    %2503 = vmatprep.subr.mxu0 0.0
    %2504 = vmatpush2.msra.mxu0 0.0
    %2505 = vmatprep.subr.mxu0 0.0
    %2506 = vmatpush2.msra.mxu0 0.0
    %2507 = vmatprep.subr.mxu0 0.0
    %2508 = vmatpush2.msra.mxu0 0.0
    %2509 = vmatprep.subr.mxu0 0.0
    %2510 = vmatpush2.msra.mxu0 0.0
    %2511 = vmatprep.subr.mxu0 0.0
    %2512 = vmatpush2.msra.mxu0 0.0
    %2513 = vmatprep.subr.mxu0 0.0
    %2514 = vmatpush2.msra.mxu0 0.0
    %2515 = vmatprep.subr.mxu0 0.0
    %2516 = vmatpush2.msra.mxu0 0.0
    %2517 = vmatprep.subr.mxu0 0.0
    %2518 = vmatpush2.msra.mxu0 0.0
    %2519 = vmatprep.mubr.f32.mxu0 0.0
    %2520 = vmatmul.mubr.f32.gmra.mxu0 %v2431
    %v2521 = vpop.f32.mrf.mxu0
    %v2522 = vadd.f32 %v2453, %v2521
    %v2523 = vpop.f32.mrf.mxu0
    %2524 = vdwg.mxu0
    %v2525 = vtanh.pop %v2522
    %vm2526 = vcmask 23552
    %2527 = vst.msk [vmem:[%s17] sm:$0xff] %vm2526, %v2525
    %2528 = vst [vmem:[#allocation17] sm:$0xff] %v2234
    // Predicated region
    $region275: #{tpu_custom_call.1} parent=1 // pred_check
      _
    $region276: #{tpu_custom_call.1} parent=1 // pred_check_branch
      %2530 = sbr.rel (0) target = $region278
    $region277: #{tpu_custom_call.1} parent=1 // pred_region
      _
    $region278: #{tpu_custom_call.1} parent=1 // pred_fallthru
      _
    // Predicated region
    $region279: #{tpu_custom_call.1} parent=1 // pred_check
      _
    $region280: #{tpu_custom_call.1} parent=1 // pred_check_branch
      %2532 = sbr.rel (0) target = $region282
    $region281: #{tpu_custom_call.1} parent=1 // pred_region
      %s2534 = ssub.s32 128, 128
      %2535 = vsyncadd [#allocation14], %s2534
      %s2537 = sshll.u32 [#allocation17], 4
      %s2538 = int_to_ptr.vmem [resolvable:$true] %s2537
      %2540 = dma.vmem_to_hbm [thread:$0]  %s2538, 128, %s18, [#allocation14]
    $region282: #{tpu_custom_call.1} parent=1 // pred_fallthru
      _
    // Predicated region
    $region283: #{tpu_custom_call.1} parent=1 // pred_check
      _
    $region284: #{tpu_custom_call.1} parent=1 // pred_check_branch
      %2542 = sbr.rel (0) target = $region286
    $region285: #{tpu_custom_call.1} parent=1 // pred_region
      _
    $region286: #{tpu_custom_call.1} parent=1 // pred_fallthru
      _
    // Predicated region
    $region287: #{tpu_custom_call.1} parent=1 // pred_check
      _
    $region288: #{tpu_custom_call.1} parent=1 // pred_check_branch
      %2544 = sbr.rel (0) target = $region290
    $region289: #{tpu_custom_call.1} parent=1 // pred_region
      %2545 = dma.done [#allocation14], 128
    $region290: #{tpu_custom_call.1} parent=1 // pred_fallthru
      _
    %2546 = vsyncpa [#allocation13], 1
    %2547 = vsyncpa [#allocation16], 1
    %2548 = vsyncpa [#allocation14], 1
  %2549 = vsyncmov [#allocation11]
  %s2550 = vpop.sfrf %2549
  %p2551 = scmp.eq.s32.totalorder %s2550, 0
  %p2552 = pneg %p2551
  %2554 = shalt.err (%p2552)
  %s2555 = scalar_lea.sflag [#allocation11], 1
  %2556 = vsyncmov %s2555
  %s2557 = vpop.sfrf %2556
  %p2558 = scmp.eq.s32.totalorder %s2557, 0
  %p2559 = pneg %p2558
  %2561 = shalt.err (%p2559)
  %s2562 = scalar_lea.sflag [#allocation11], 2
  %2563 = vsyncmov %s2562
  %s2564 = vpop.sfrf %2563
  %p2565 = scmp.eq.s32.totalorder %s2564, 0
  %p2566 = pneg %p2565
  %2568 = shalt.err (%p2566)
  %s2569 = scalar_lea.sflag [#allocation11], 3
  %2570 = vsyncmov %s2569
  %s2571 = vpop.sfrf %2570
  %p2572 = scmp.eq.s32.totalorder %s2571, 0
  %p2573 = pneg %p2572
  %2575 = shalt.err (%p2573)
  %s2576 = scalar_lea.sflag [#allocation11], 4
  %2577 = vsyncmov %s2576
  %s2578 = vpop.sfrf %2577
  %p2579 = scmp.eq.s32.totalorder %s2578, 0
  %p2580 = pneg %p2579
  %2582 = shalt.err (%p2580)
  %s2583 = scalar_lea.sflag [#allocation11], 5
  %2584 = vsyncmov %s2583
  %s2585 = vpop.sfrf %2584
  %p2586 = scmp.eq.s32.totalorder %s2585, 0
  %p2587 = pneg %p2586
  %2589 = shalt.err (%p2587)
  %s2590 = scalar_lea.sflag [#allocation11], 6
  %2591 = vsyncmov %s2590
  %s2592 = vpop.sfrf %2591
  %p2593 = scmp.eq.s32.totalorder %s2592, 0
  %p2594 = pneg %p2593
  %2596 = shalt.err (%p2594)
  %s2597 = scalar_lea.sflag [#allocation11], 7
  %2598 = vsyncmov %s2597
  %s2599 = vpop.sfrf %2598
  %p2600 = scmp.eq.s32.totalorder %s2599, 0
  %p2601 = pneg %p2600
  %2603 = shalt.err (%p2601)

</llo_original>
